<compile_context>
chip_gen: v7x
topology: tpu7x:2x2x1
jax: 0.10.0
libtpu: 0.0.40
codegen_flags: <defaults>
</compile_context>

<pallas_src>
import math

import jax
import jax.numpy as jnp
from jax import lax
from jax.experimental import pallas as pl
from jax.experimental.pallas import tpu as pltpu


def bilstm_attn_kernel(
    x_ref,        # (Bb, T, I)    bf16  input block (batch-major)
    wih_f_ref,    # (I, 4H)       bf16  forward input-proj weight (gates i|f|o|g)
    wih_b_ref,    # (I, 4H)       bf16  backward input-proj weight
    whh_f_ref,    # (H, 4H)       bf16  forward recurrent weight
    whh_b_ref,    # (H, 4H)       bf16  backward recurrent weight
    bg_f_ref,     # (1, 4H)       f32   forward fused bias (b_ih + b_hh)
    bg_b_ref,     # (1, 4H)       f32   backward fused bias
    watt_ref,     # (1, 2H)       f32   attention weight
    batt_ref,     # (1,)          f32   attention bias (SMEM scalar)
    wfc_ref,      # (2H, 128)     bf16  fc weight transposed
    bfc_ref,      # (1, 128)      f32   fc bias
    out_ref,      # (Bb, 128)     f32   logits
    attn_ref,     # (1, 1, Bb*T)  f32   attention weights (lane-flat slab)
    ginf_ref,     # scratch (Bb, T, 4H) f32 : hoisted forward input projections
    ginb_ref,     # scratch (Bb, T, 4H) f32 : hoisted backward input projections
    hcat_ref,     # scratch (Bb, T, 2H) f32 : [h_fwd | h_bwd] hidden history
):
    Bb, T, I = x_ref.shape
    H = whh_f_ref.shape[0]
    f32 = jnp.float32
    bf16 = jnp.bfloat16

    # ---- hoisted input projections: two well-shaped MXU matmuls ----
    x2d = x_ref[...].reshape(Bb * T, I)                     # bf16 already
    ginf_ref[...] = (jnp.dot(x2d, wih_f_ref[...], preferred_element_type=f32)
                     + bg_f_ref[...]).reshape(Bb, T, 4 * H)
    ginb_ref[...] = (jnp.dot(x2d, wih_b_ref[...], preferred_element_type=f32)
                     + bg_b_ref[...]).reshape(Bb, T, 4 * H)

    whh_f = whh_f_ref[...]                                  # bf16, resident across steps
    whh_b = whh_b_ref[...]

    h_f = jnp.zeros((Bb, H), f32); c_f = jnp.zeros((Bb, H), f32)
    h_b = jnp.zeros((Bb, H), f32); c_b = jnp.zeros((Bb, H), f32)

    # TODO(synk): if T grows beyond ~32, switch this static unroll to
    # lax.fori_loop(..., unroll=k) with h/c carried in scratch to bound
    # vreg live ranges; full unroll is right for small T.
    for t in range(T):                                      # static -> full unroll
        if t == 0:
            gates_f = ginf_ref[:, 0, :]                     # h == 0, skip recurrent matmul
            gates_b = ginb_ref[:, T - 1, :]
        else:
            gates_f = ginf_ref[:, t, :] + jnp.dot(
                h_f.astype(bf16), whh_f, preferred_element_type=f32)
            gates_b = ginb_ref[:, T - 1 - t, :] + jnp.dot(
                h_b.astype(bf16), whh_b, preferred_element_type=f32)

        # gate order [i | f | o | g]: one sigmoid over 3H, one tanh over H per dir.
        sf = jax.nn.sigmoid(gates_f[:, :3 * H])
        g_f = jnp.tanh(gates_f[:, 3 * H:])
        c_f = sf[:, H:2 * H] * c_f + sf[:, :H] * g_f
        h_f = sf[:, 2 * H:3 * H] * jnp.tanh(c_f)
        hcat_ref[:, t, :H] = h_f                            # forward hidden at time t

        sb = jax.nn.sigmoid(gates_b[:, :3 * H])
        g_b = jnp.tanh(gates_b[:, 3 * H:])
        c_b = sb[:, H:2 * H] * c_b + sb[:, :H] * g_b
        h_b = sb[:, 2 * H:3 * H] * jnp.tanh(c_b)
        hcat_ref[:, T - 1 - t, H:] = h_b                    # backward hidden at time T-1-t

    # ---- attention + context + fc: single batch-major pass ----
    lstm_out = hcat_ref[...]                                # (Bb, T, 2H)
    wa = watt_ref[...].reshape(1, 1, 2 * H)
    scores = jnp.sum(lstm_out * wa, axis=-1) + batt_ref[0]  # (Bb, T)

    m = jnp.max(scores, axis=-1, keepdims=True)
    e = jnp.exp(scores - m)
    weights = e / jnp.sum(e, axis=-1, keepdims=True)        # exact softmax (parity)
    attn_ref[...] = weights.reshape(1, 1, Bb * T)           # lane-flat store

    ctx = jnp.sum(lstm_out * weights[:, :, None], axis=1)   # (Bb, 2H)
    out_ref[...] = (jnp.dot(ctx.astype(bf16), wfc_ref[...],
                            preferred_element_type=f32) + bfc_ref[...])


def _reorder_ifog(w):
    """PyTorch LSTM gate blocks are stacked [i, f, g, o]; reorder to [i, f, o, g]."""
    H = w.shape[0] // 4
    return jnp.concatenate([w[:2 * H], w[3 * H:], w[2 * H:3 * H]], axis=0)


def bilstm_attention_forward(x, params, *, block_b=None):
    """x: (B, T, I) float32. Returns (out (B, 128), attention_weights (B, T, 1))."""
    B, T, I = x.shape
    H = params["w_hh_f"].shape[1]
    if block_b is None:
        # Fill MXU rows (recurrent matmul M = block_b): ~128 rows fills v5e's
        # 128-row MXU and keeps v6e/v7x well occupied; clamp to B for small
        # batches. On v7x prefer block_b such that cdiv(B, block_b) >= 2 so
        # the "parallel" grid axis shards across both TensorCores.
        block_b = min(B, 128)
    nb = pl.cdiv(B, block_b)

    f32 = jnp.float32
    bf16 = jnp.bfloat16

    # Fused / reordered weight layouts (columns in [i|f|o|g] gate order).
    wih_f = _reorder_ifog(params["w_ih_f"]).T.astype(bf16)            # (I, 4H)
    wih_b = _reorder_ifog(params["w_ih_b"]).T.astype(bf16)            # (I, 4H)
    whh_f = _reorder_ifog(params["w_hh_f"]).T.astype(bf16)            # (H, 4H)
    whh_b = _reorder_ifog(params["w_hh_b"]).T.astype(bf16)            # (H, 4H)
    bg_f = _reorder_ifog(params["b_ih_f"] + params["b_hh_f"]
                         ).reshape(1, 4 * H).astype(f32)
    bg_b = _reorder_ifog(params["b_ih_b"] + params["b_hh_b"]
                         ).reshape(1, 4 * H).astype(f32)
    watt = params["w_att"].astype(f32)                                # (1, 2H)
    batt = params["b_att"].reshape(1).astype(f32)                     # (1,) SMEM
    wfc_t = params["w_fc"].T.astype(bf16)                             # (2H, 128)
    bfc = params["b_fc"].reshape(1, 128).astype(f32)

    vmem_full = lambda: pl.BlockSpec(memory_space=pltpu.MemorySpace.VMEM)

    grid_spec = pltpu.PrefetchScalarGridSpec(
        num_scalar_prefetch=0,
        grid=(nb,),
        in_specs=[
            pl.BlockSpec((block_b, T, I), lambda b: (b, 0, 0)),       # x (bf16), batch-tiled
            vmem_full(), vmem_full(),                                 # wih_f, wih_b
            vmem_full(), vmem_full(),                                 # whh_f, whh_b
            vmem_full(), vmem_full(),                                 # bg_f, bg_b
            vmem_full(),                                              # watt
            pl.BlockSpec(memory_space=pltpu.MemorySpace.SMEM),        # batt scalar
            vmem_full(), vmem_full(),                                 # wfc_t, bfc
        ],
        out_specs=(
            pl.BlockSpec((block_b, 128), lambda b: (b, 0)),           # logits
            pl.BlockSpec((1, 1, block_b * T), lambda b: (b, 0, 0)),   # attention slab
        ),
        scratch_shapes=[
            pltpu.VMEM((block_b, T, 4 * H), f32),   # forward input projections
            pltpu.VMEM((block_b, T, 4 * H), f32),   # backward input projections
            pltpu.VMEM((block_b, T, 2 * H), f32),   # [h_fwd | h_bwd] history
        ],
    )

    out, attn_flat = pl.pallas_call(
        bilstm_attn_kernel,
        out_shape=(
            jax.ShapeDtypeStruct((B, 128), f32),
            jax.ShapeDtypeStruct((nb, 1, block_b * T), f32),
        ),
        grid_spec=grid_spec,
        compiler_params=pltpu.CompilerParams(
            dimension_semantics=("parallel",),        # batch axis -> megacore on v7x
            vmem_limit_bytes=32 * 1024 * 1024,        # safe on v7x's 64 MiB; raise on v6e if H grows
        ),
    )(x.astype(bf16), wih_f, wih_b, whh_f, whh_b, bg_f, bg_b,
      watt, batt, wfc_t, bfc)

    # Restore the PyTorch (B, T, 1) attention shape (pure layout glue;
    # also drops padded rows when B % block_b != 0).
    attn = attn_flat.reshape(nb * block_b, T)[:B, :, None]
    return out, attn


def reference_forward(x, params):
    """Pure-JAX f32 reference matching the PyTorch module semantics."""
    B, T, I = x.shape
    H = params["w_hh_f"].shape[1]
    x = x.astype(jnp.float32)

    def run_dir(w_ih, w_hh, b_ih, b_hh, reverse):
        xs = jnp.transpose(x, (1, 0, 2))          # (T, B, I)
        if reverse:
            xs = xs[::-1]

        def step(carry, xt):
            h, c = carry
            g = xt @ w_ih.T + h @ w_hh.T + b_ih + b_hh
            i = jax.nn.sigmoid(g[:, :H])
            f = jax.nn.sigmoid(g[:, H:2 * H])
            gg = jnp.tanh(g[:, 2 * H:3 * H])
            o = jax.nn.sigmoid(g[:, 3 * H:])
            c = f * c + i * gg
            h = o * jnp.tanh(c)
            return (h, c), h

        init = (jnp.zeros((B, H), jnp.float32), jnp.zeros((B, H), jnp.float32))
        _, hs = lax.scan(step, init, xs)
        if reverse:
            hs = hs[::-1]
        return jnp.transpose(hs, (1, 0, 2))        # (B, T, H)

    hf = run_dir(params["w_ih_f"], params["w_hh_f"], params["b_ih_f"], params["b_hh_f"], False)
    hb = run_dir(params["w_ih_b"], params["w_hh_b"], params["b_ih_b"], params["b_hh_b"], True)
    lstm_out = jnp.concatenate([hf, hb], axis=-1)  # (B, T, 2H)

    scores = lstm_out @ params["w_att"].T + params["b_att"]   # (B, T, 1)
    w = jax.nn.softmax(scores, axis=1)
    ctx = jnp.sum(lstm_out * w, axis=1)                       # (B, 2H)
    out = ctx @ params["w_fc"].T + params["b_fc"]             # (B, 128)
    return out, w


def init_params(key, input_size, hidden_size):
    H = hidden_size
    k = 1.0 / math.sqrt(H)
    keys = jax.random.split(key, 12)
    u = lambda kk, shape: jax.random.uniform(kk, shape, jnp.float32, minval=-k, maxval=k)
    return {
        "w_ih_f": u(keys[0], (4 * H, input_size)),
        "w_hh_f": u(keys[1], (4 * H, H)),
        "b_ih_f": u(keys[2], (4 * H,)),
        "b_hh_f": u(keys[3], (4 * H,)),
        "w_ih_b": u(keys[4], (4 * H, input_size)),
        "w_hh_b": u(keys[5], (4 * H, H)),
        "b_ih_b": u(keys[6], (4 * H,)),
        "b_hh_b": u(keys[7], (4 * H,)),
        "w_att": u(keys[8], (1, 2 * H)),
        "b_att": u(keys[9], (1,)),
        "w_fc": u(keys[10], (128, 2 * H)),
        "b_fc": u(keys[11], (128,)),
    }


if __name__ == "__main__":
    B, T, INPUT_SIZE, HIDDEN = 2, 8, 16, 32

    root = jax.random.PRNGKey(0)
    kx, kp = jax.random.split(root)
    x = jax.random.normal(kx, (B, T, INPUT_SIZE), jnp.float32)
    params = init_params(kp, INPUT_SIZE, HIDDEN)

    out, attn = bilstm_attention_forward(x, params)
    out = jax.block_until_ready(out)
    attn = jax.block_until_ready(attn)

    ref_out, ref_attn = reference_forward(x, params)
    ref_out = jax.block_until_ready(ref_out)
    ref_attn = jax.block_until_ready(ref_attn)

    assert out.shape == (B, 128) and attn.shape == (B, T, 1)
    # Tolerances account for bf16 MXU operands (f32 accumulation) in the
    # kernel vs. the pure-f32 reference.
    assert jnp.allclose(out, ref_out, rtol=2e-2, atol=1e-2), "fc output mismatch"
    assert jnp.allclose(attn, ref_attn, rtol=2e-2, atol=5e-3), "attention weights mismatch"

    print("KERNEL_OK")
</pallas_src>

<mosaic_0001>
module attributes {stable_mosaic.version = 11 : i64} {
  func.func @bilstm_attn_kernel(%arg0: i32, %arg1: memref<2x8x16xbf16, #tpu.memory_space<vmem>>, %arg2: memref<16x128xbf16, #tpu.memory_space<vmem>>, %arg3: memref<16x128xbf16, #tpu.memory_space<vmem>>, %arg4: memref<32x128xbf16, #tpu.memory_space<vmem>>, %arg5: memref<32x128xbf16, #tpu.memory_space<vmem>>, %arg6: memref<1x128xf32, #tpu.memory_space<vmem>>, %arg7: memref<1x128xf32, #tpu.memory_space<vmem>>, %arg8: memref<1x64xf32, #tpu.memory_space<vmem>>, %arg9: memref<1xf32, #tpu.memory_space<smem>>, %arg10: memref<64x128xbf16, #tpu.memory_space<vmem>>, %arg11: memref<1x128xf32, #tpu.memory_space<vmem>>, %arg12: memref<2x128xf32, #tpu.memory_space<vmem>>, %arg13: memref<1x1x16xf32, #tpu.memory_space<vmem>>, %arg14: memref<2x8x128xf32, #tpu.memory_space<vmem>>, %arg15: memref<2x8x128xf32, #tpu.memory_space<vmem>>, %arg16: memref<2x8x64xf32, #tpu.memory_space<vmem>>) attributes {dimension_semantics = [#tpu.dimension_semantics<parallel>], iteration_bounds = array<i64: 1>, scalar_prefetch = 0 : i64, scratch_operands = 3 : i64, tpu.core_type = #tpu.core_type<tc>, window_params = [{transform_indices = @transform_0, window_bounds = array<i64: 2, 8, 16>}, {pipeline_mode = #tpu.pipeline_mode<synchronous>, transform_indices = @transform_1, window_bounds = array<i64: 16, 128>}, {pipeline_mode = #tpu.pipeline_mode<synchronous>, transform_indices = @transform_2, window_bounds = array<i64: 16, 128>}, {pipeline_mode = #tpu.pipeline_mode<synchronous>, transform_indices = @transform_3, window_bounds = array<i64: 32, 128>}, {pipeline_mode = #tpu.pipeline_mode<synchronous>, transform_indices = @transform_4, window_bounds = array<i64: 32, 128>}, {pipeline_mode = #tpu.pipeline_mode<synchronous>, transform_indices = @transform_5, window_bounds = array<i64: 1, 128>}, {pipeline_mode = #tpu.pipeline_mode<synchronous>, transform_indices = @transform_6, window_bounds = array<i64: 1, 128>}, {pipeline_mode = #tpu.pipeline_mode<synchronous>, transform_indices = @transform_7, window_bounds = array<i64: 1, 64>}, {transform_indices = @transform_8, window_bounds = array<i64: 1>}, {pipeline_mode = #tpu.pipeline_mode<synchronous>, transform_indices = @transform_9, window_bounds = array<i64: 64, 128>}, {pipeline_mode = #tpu.pipeline_mode<synchronous>, transform_indices = @transform_10, window_bounds = array<i64: 1, 128>}, {transform_indices = @transform_11, window_bounds = array<i64: 2, 128>}, {transform_indices = @transform_12, window_bounds = array<i64: 1, 1, 16>}]} {
    %c0 = arith.constant 0 : index
    %c0_0 = arith.constant 0 : index
    %c0_1 = arith.constant 0 : index
    %0 = vector.load %arg1[%c0, %c0_0, %c0_1] : memref<2x8x16xbf16, #tpu.memory_space<vmem>>, vector<2x8x16xbf16>
    %1 = vector.shape_cast %0 : vector<2x8x16xbf16> to vector<16x16xbf16>
    %c0_2 = arith.constant 0 : index
    %c0_3 = arith.constant 0 : index
    %2 = vector.load %arg2[%c0_2, %c0_3] : memref<16x128xbf16, #tpu.memory_space<vmem>>, vector<16x128xbf16>
    %cst = arith.constant dense<0.000000e+00> : vector<16x128xf32>
    %3 = tpu.matmul %1, %2, %cst {dimension_numbers = #tpu.dot_dimension_numbers<[1], [0], [0], [1], [0, 0, 1, 1], [], []>} : vector<16x16xbf16>, vector<16x128xbf16>, vector<16x128xf32> -> vector<16x128xf32>
    %c0_4 = arith.constant 0 : index
    %c0_5 = arith.constant 0 : index
    %4 = vector.load %arg6[%c0_4, %c0_5] : memref<1x128xf32, #tpu.memory_space<vmem>>, vector<1x128xf32>
    %5 = vector.broadcast %4 : vector<1x128xf32> to vector<16x128xf32>
    %6 = arith.addf %3, %5 : vector<16x128xf32>
    %7 = vector.shape_cast %6 : vector<16x128xf32> to vector<2x8x128xf32>
    %c0_6 = arith.constant 0 : index
    %c0_7 = arith.constant 0 : index
    %c0_8 = arith.constant 0 : index
    %8 = vector.load %arg14[%c0_6, %c0_7, %c0_8] : memref<2x8x128xf32, #tpu.memory_space<vmem>>, vector<2x8x128xf32>
    tpu.vector_store %arg14[%c0_6, %c0_7, %c0_8], %7 {strides = array<i32>} : memref<2x8x128xf32, #tpu.memory_space<vmem>>, vector<2x8x128xf32>,
    %c0_9 = arith.constant 0 : index
    %c0_10 = arith.constant 0 : index
    %9 = vector.load %arg3[%c0_9, %c0_10] : memref<16x128xbf16, #tpu.memory_space<vmem>>, vector<16x128xbf16>
    %cst_11 = arith.constant dense<0.000000e+00> : vector<16x128xf32>
    %10 = tpu.matmul %1, %9, %cst_11 {dimension_numbers = #tpu.dot_dimension_numbers<[1], [0], [0], [1], [0, 0, 1, 1], [], []>} : vector<16x16xbf16>, vector<16x128xbf16>, vector<16x128xf32> -> vector<16x128xf32>
    %c0_12 = arith.constant 0 : index
    %c0_13 = arith.constant 0 : index
    %11 = vector.load %arg7[%c0_12, %c0_13] : memref<1x128xf32, #tpu.memory_space<vmem>>, vector<1x128xf32>
    %12 = vector.broadcast %11 : vector<1x128xf32> to vector<16x128xf32>
    %13 = arith.addf %10, %12 : vector<16x128xf32>
    %14 = vector.shape_cast %13 : vector<16x128xf32> to vector<2x8x128xf32>
    %c0_14 = arith.constant 0 : index
    %c0_15 = arith.constant 0 : index
    %c0_16 = arith.constant 0 : index
    %15 = vector.load %arg15[%c0_14, %c0_15, %c0_16] : memref<2x8x128xf32, #tpu.memory_space<vmem>>, vector<2x8x128xf32>
    tpu.vector_store %arg15[%c0_14, %c0_15, %c0_16], %14 {strides = array<i32>} : memref<2x8x128xf32, #tpu.memory_space<vmem>>, vector<2x8x128xf32>,
    %c0_17 = arith.constant 0 : index
    %c0_18 = arith.constant 0 : index
    %16 = vector.load %arg4[%c0_17, %c0_18] : memref<32x128xbf16, #tpu.memory_space<vmem>>, vector<32x128xbf16>
    %c0_19 = arith.constant 0 : index
    %c0_20 = arith.constant 0 : index
    %17 = vector.load %arg5[%c0_19, %c0_20] : memref<32x128xbf16, #tpu.memory_space<vmem>>, vector<32x128xbf16>
    %cst_21 = arith.constant 0.000000e+00 : f32
    %18 = vector.broadcast %cst_21 : f32 to vector<2x32xf32>
    %cst_22 = arith.constant 0.000000e+00 : f32
    %19 = vector.broadcast %cst_22 : f32 to vector<2x32xf32>
    %c0_23 = arith.constant 0 : index
    %c0_24 = arith.constant 0 : index
    %c0_25 = arith.constant 0 : index
    %20 = vector.load %arg14[%c0_23, %c0_24, %c0_25] : memref<2x8x128xf32, #tpu.memory_space<vmem>>, vector<2x1x128xf32>
    %21 = vector.shape_cast %20 : vector<2x1x128xf32> to vector<2x128xf32>
    %c0_26 = arith.constant 0 : index
    %c7 = arith.constant 7 : index
    %c0_27 = arith.constant 0 : index
    %22 = vector.load %arg15[%c0_26, %c7, %c0_27] : memref<2x8x128xf32, #tpu.memory_space<vmem>>, vector<2x1x128xf32>
    %23 = vector.shape_cast %22 : vector<2x1x128xf32> to vector<2x128xf32>
    %24 = vector.extract_strided_slice %21 {offsets = [0, 0], sizes = [2, 96], strides = [1, 1]} : vector<2x128xf32> to vector<2x96xf32>
    %25 = arith.negf %24 : vector<2x96xf32>
    %26 = math.exp %25 : vector<2x96xf32>
    %cst_28 = arith.constant 1.000000e+00 : f32
    %27 = vector.broadcast %cst_28 : f32 to vector<2x96xf32>
    %28 = arith.addf %27, %26 : vector<2x96xf32>
    %29 = arith.divf %27, %28 : vector<2x96xf32>
    %30 = vector.extract_strided_slice %21 {offsets = [0, 96], sizes = [2, 32], strides = [1, 1]} : vector<2x128xf32> to vector<2x32xf32>
    %31 = math.tanh %30 : vector<2x32xf32>
    %32 = vector.extract_strided_slice %29 {offsets = [0, 32], sizes = [2, 32], strides = [1, 1]} : vector<2x96xf32> to vector<2x32xf32>
    %33 = arith.mulf %32, %18 : vector<2x32xf32>
    %34 = vector.extract_strided_slice %29 {offsets = [0, 0], sizes = [2, 32], strides = [1, 1]} : vector<2x96xf32> to vector<2x32xf32>
    %35 = arith.mulf %34, %31 : vector<2x32xf32>
    %36 = arith.addf %33, %35 : vector<2x32xf32>
    %37 = vector.extract_strided_slice %29 {offsets = [0, 64], sizes = [2, 32], strides = [1, 1]} : vector<2x96xf32> to vector<2x32xf32>
    %38 = math.tanh %36 : vector<2x32xf32>
    %39 = arith.mulf %37, %38 : vector<2x32xf32>
    %c0_29 = arith.constant 0 : index
    %c0_30 = arith.constant 0 : index
    %c0_31 = arith.constant 0 : index
    %40 = vector.load %arg16[%c0_29, %c0_30, %c0_31] : memref<2x8x64xf32, #tpu.memory_space<vmem>>, vector<2x1x32xf32>
    %41 = vector.shape_cast %40 : vector<2x1x32xf32> to vector<2x32xf32>
    %42 = vector.shape_cast %39 : vector<2x32xf32> to vector<2x1x32xf32>
    tpu.vector_store %arg16[%c0_29, %c0_30, %c0_31], %42 {strides = array<i32>} : memref<2x8x64xf32, #tpu.memory_space<vmem>>, vector<2x1x32xf32>,
    %43 = vector.extract_strided_slice %23 {offsets = [0, 0], sizes = [2, 96], strides = [1, 1]} : vector<2x128xf32> to vector<2x96xf32>
    %44 = arith.negf %43 : vector<2x96xf32>
    %45 = math.exp %44 : vector<2x96xf32>
    %cst_32 = arith.constant 1.000000e+00 : f32
    %46 = vector.broadcast %cst_32 : f32 to vector<2x96xf32>
    %47 = arith.addf %46, %45 : vector<2x96xf32>
    %48 = arith.divf %46, %47 : vector<2x96xf32>
    %49 = vector.extract_strided_slice %23 {offsets = [0, 96], sizes = [2, 32], strides = [1, 1]} : vector<2x128xf32> to vector<2x32xf32>
    %50 = math.tanh %49 : vector<2x32xf32>
    %51 = vector.extract_strided_slice %48 {offsets = [0, 32], sizes = [2, 32], strides = [1, 1]} : vector<2x96xf32> to vector<2x32xf32>
    %52 = arith.mulf %51, %19 : vector<2x32xf32>
    %53 = vector.extract_strided_slice %48 {offsets = [0, 0], sizes = [2, 32], strides = [1, 1]} : vector<2x96xf32> to vector<2x32xf32>
    %54 = arith.mulf %53, %50 : vector<2x32xf32>
    %55 = arith.addf %52, %54 : vector<2x32xf32>
    %56 = vector.extract_strided_slice %48 {offsets = [0, 64], sizes = [2, 32], strides = [1, 1]} : vector<2x96xf32> to vector<2x32xf32>
    %57 = math.tanh %55 : vector<2x32xf32>
    %58 = arith.mulf %56, %57 : vector<2x32xf32>
    %c0_33 = arith.constant 0 : index
    %c7_34 = arith.constant 7 : index
    %c32 = arith.constant 32 : index
    %59 = vector.load %arg16[%c0_33, %c7_34, %c32] : memref<2x8x64xf32, #tpu.memory_space<vmem>>, vector<2x1x32xf32>
    %60 = vector.shape_cast %59 : vector<2x1x32xf32> to vector<2x32xf32>
    %61 = vector.shape_cast %58 : vector<2x32xf32> to vector<2x1x32xf32>
    tpu.vector_store %arg16[%c0_33, %c7_34, %c32], %61 {strides = array<i32>} : memref<2x8x64xf32, #tpu.memory_space<vmem>>, vector<2x1x32xf32>,
    %c0_35 = arith.constant 0 : index
    %c1 = arith.constant 1 : index
    %c0_36 = arith.constant 0 : index
    %62 = vector.load %arg14[%c0_35, %c1, %c0_36] : memref<2x8x128xf32, #tpu.memory_space<vmem>>, vector<2x1x128xf32>
    %63 = vector.shape_cast %62 : vector<2x1x128xf32> to vector<2x128xf32>
    %64 = arith.truncf %39 : vector<2x32xf32> to vector<2x32xbf16>
    %cst_37 = arith.constant dense<0.000000e+00> : vector<2x128xf32>
    %65 = tpu.matmul %64, %16, %cst_37 {dimension_numbers = #tpu.dot_dimension_numbers<[1], [0], [0], [1], [0, 0, 1, 1], [], []>} : vector<2x32xbf16>, vector<32x128xbf16>, vector<2x128xf32> -> vector<2x128xf32>
    %66 = arith.addf %63, %65 : vector<2x128xf32>
    %c0_38 = arith.constant 0 : index
    %c6 = arith.constant 6 : index
    %c0_39 = arith.constant 0 : index
    %67 = vector.load %arg15[%c0_38, %c6, %c0_39] : memref<2x8x128xf32, #tpu.memory_space<vmem>>, vector<2x1x128xf32>
    %68 = vector.shape_cast %67 : vector<2x1x128xf32> to vector<2x128xf32>
    %69 = arith.truncf %58 : vector<2x32xf32> to vector<2x32xbf16>
    %cst_40 = arith.constant dense<0.000000e+00> : vector<2x128xf32>
    %70 = tpu.matmul %69, %17, %cst_40 {dimension_numbers = #tpu.dot_dimension_numbers<[1], [0], [0], [1], [0, 0, 1, 1], [], []>} : vector<2x32xbf16>, vector<32x128xbf16>, vector<2x128xf32> -> vector<2x128xf32>
    %71 = arith.addf %68, %70 : vector<2x128xf32>
    %72 = vector.extract_strided_slice %66 {offsets = [0, 0], sizes = [2, 96], strides = [1, 1]} : vector<2x128xf32> to vector<2x96xf32>
    %73 = arith.negf %72 : vector<2x96xf32>
    %74 = math.exp %73 : vector<2x96xf32>
    %cst_41 = arith.constant 1.000000e+00 : f32
    %75 = vector.broadcast %cst_41 : f32 to vector<2x96xf32>
    %76 = arith.addf %75, %74 : vector<2x96xf32>
    %77 = arith.divf %75, %76 : vector<2x96xf32>
    %78 = vector.extract_strided_slice %66 {offsets = [0, 96], sizes = [2, 32], strides = [1, 1]} : vector<2x128xf32> to vector<2x32xf32>
    %79 = math.tanh %78 : vector<2x32xf32>
    %80 = vector.extract_strided_slice %77 {offsets = [0, 32], sizes = [2, 32], strides = [1, 1]} : vector<2x96xf32> to vector<2x32xf32>
    %81 = arith.mulf %80, %36 : vector<2x32xf32>
    %82 = vector.extract_strided_slice %77 {offsets = [0, 0], sizes = [2, 32], strides = [1, 1]} : vector<2x96xf32> to vector<2x32xf32>
    %83 = arith.mulf %82, %79 : vector<2x32xf32>
    %84 = arith.addf %81, %83 : vector<2x32xf32>
    %85 = vector.extract_strided_slice %77 {offsets = [0, 64], sizes = [2, 32], strides = [1, 1]} : vector<2x96xf32> to vector<2x32xf32>
    %86 = math.tanh %84 : vector<2x32xf32>
    %87 = arith.mulf %85, %86 : vector<2x32xf32>
    %c0_42 = arith.constant 0 : index
    %c1_43 = arith.constant 1 : index
    %c0_44 = arith.constant 0 : index
    %88 = vector.load %arg16[%c0_42, %c1_43, %c0_44] : memref<2x8x64xf32, #tpu.memory_space<vmem>>, vector<2x1x32xf32>
    %89 = vector.shape_cast %88 : vector<2x1x32xf32> to vector<2x32xf32>
    %90 = vector.shape_cast %87 : vector<2x32xf32> to vector<2x1x32xf32>
    tpu.vector_store %arg16[%c0_42, %c1_43, %c0_44], %90 {strides = array<i32>} : memref<2x8x64xf32, #tpu.memory_space<vmem>>, vector<2x1x32xf32>,
    %91 = vector.extract_strided_slice %71 {offsets = [0, 0], sizes = [2, 96], strides = [1, 1]} : vector<2x128xf32> to vector<2x96xf32>
    %92 = arith.negf %91 : vector<2x96xf32>
    %93 = math.exp %92 : vector<2x96xf32>
    %cst_45 = arith.constant 1.000000e+00 : f32
    %94 = vector.broadcast %cst_45 : f32 to vector<2x96xf32>
    %95 = arith.addf %94, %93 : vector<2x96xf32>
    %96 = arith.divf %94, %95 : vector<2x96xf32>
    %97 = vector.extract_strided_slice %71 {offsets = [0, 96], sizes = [2, 32], strides = [1, 1]} : vector<2x128xf32> to vector<2x32xf32>
    %98 = math.tanh %97 : vector<2x32xf32>
    %99 = vector.extract_strided_slice %96 {offsets = [0, 32], sizes = [2, 32], strides = [1, 1]} : vector<2x96xf32> to vector<2x32xf32>
    %100 = arith.mulf %99, %55 : vector<2x32xf32>
    %101 = vector.extract_strided_slice %96 {offsets = [0, 0], sizes = [2, 32], strides = [1, 1]} : vector<2x96xf32> to vector<2x32xf32>
    %102 = arith.mulf %101, %98 : vector<2x32xf32>
    %103 = arith.addf %100, %102 : vector<2x32xf32>
    %104 = vector.extract_strided_slice %96 {offsets = [0, 64], sizes = [2, 32], strides = [1, 1]} : vector<2x96xf32> to vector<2x32xf32>
    %105 = math.tanh %103 : vector<2x32xf32>
    %106 = arith.mulf %104, %105 : vector<2x32xf32>
    %c0_46 = arith.constant 0 : index
    %c6_47 = arith.constant 6 : index
    %c32_48 = arith.constant 32 : index
    %107 = vector.load %arg16[%c0_46, %c6_47, %c32_48] : memref<2x8x64xf32, #tpu.memory_space<vmem>>, vector<2x1x32xf32>
    %108 = vector.shape_cast %107 : vector<2x1x32xf32> to vector<2x32xf32>
    %109 = vector.shape_cast %106 : vector<2x32xf32> to vector<2x1x32xf32>
    tpu.vector_store %arg16[%c0_46, %c6_47, %c32_48], %109 {strides = array<i32>} : memref<2x8x64xf32, #tpu.memory_space<vmem>>, vector<2x1x32xf32>,
    %c0_49 = arith.constant 0 : index
    %c2 = arith.constant 2 : index
    %c0_50 = arith.constant 0 : index
    %110 = vector.load %arg14[%c0_49, %c2, %c0_50] : memref<2x8x128xf32, #tpu.memory_space<vmem>>, vector<2x1x128xf32>
    %111 = vector.shape_cast %110 : vector<2x1x128xf32> to vector<2x128xf32>
    %112 = arith.truncf %87 : vector<2x32xf32> to vector<2x32xbf16>
    %cst_51 = arith.constant dense<0.000000e+00> : vector<2x128xf32>
    %113 = tpu.matmul %112, %16, %cst_51 {dimension_numbers = #tpu.dot_dimension_numbers<[1], [0], [0], [1], [0, 0, 1, 1], [], []>} : vector<2x32xbf16>, vector<32x128xbf16>, vector<2x128xf32> -> vector<2x128xf32>
    %114 = arith.addf %111, %113 : vector<2x128xf32>
    %c0_52 = arith.constant 0 : index
    %c5 = arith.constant 5 : index
    %c0_53 = arith.constant 0 : index
    %115 = vector.load %arg15[%c0_52, %c5, %c0_53] : memref<2x8x128xf32, #tpu.memory_space<vmem>>, vector<2x1x128xf32>
    %116 = vector.shape_cast %115 : vector<2x1x128xf32> to vector<2x128xf32>
    %117 = arith.truncf %106 : vector<2x32xf32> to vector<2x32xbf16>
    %cst_54 = arith.constant dense<0.000000e+00> : vector<2x128xf32>
    %118 = tpu.matmul %117, %17, %cst_54 {dimension_numbers = #tpu.dot_dimension_numbers<[1], [0], [0], [1], [0, 0, 1, 1], [], []>} : vector<2x32xbf16>, vector<32x128xbf16>, vector<2x128xf32> -> vector<2x128xf32>
    %119 = arith.addf %116, %118 : vector<2x128xf32>
    %120 = vector.extract_strided_slice %114 {offsets = [0, 0], sizes = [2, 96], strides = [1, 1]} : vector<2x128xf32> to vector<2x96xf32>
    %121 = arith.negf %120 : vector<2x96xf32>
    %122 = math.exp %121 : vector<2x96xf32>
    %cst_55 = arith.constant 1.000000e+00 : f32
    %123 = vector.broadcast %cst_55 : f32 to vector<2x96xf32>
    %124 = arith.addf %123, %122 : vector<2x96xf32>
    %125 = arith.divf %123, %124 : vector<2x96xf32>
    %126 = vector.extract_strided_slice %114 {offsets = [0, 96], sizes = [2, 32], strides = [1, 1]} : vector<2x128xf32> to vector<2x32xf32>
    %127 = math.tanh %126 : vector<2x32xf32>
    %128 = vector.extract_strided_slice %125 {offsets = [0, 32], sizes = [2, 32], strides = [1, 1]} : vector<2x96xf32> to vector<2x32xf32>
    %129 = arith.mulf %128, %84 : vector<2x32xf32>
    %130 = vector.extract_strided_slice %125 {offsets = [0, 0], sizes = [2, 32], strides = [1, 1]} : vector<2x96xf32> to vector<2x32xf32>
    %131 = arith.mulf %130, %127 : vector<2x32xf32>
    %132 = arith.addf %129, %131 : vector<2x32xf32>
    %133 = vector.extract_strided_slice %125 {offsets = [0, 64], sizes = [2, 32], strides = [1, 1]} : vector<2x96xf32> to vector<2x32xf32>
    %134 = math.tanh %132 : vector<2x32xf32>
    %135 = arith.mulf %133, %134 : vector<2x32xf32>
    %c0_56 = arith.constant 0 : index
    %c2_57 = arith.constant 2 : index
    %c0_58 = arith.constant 0 : index
    %136 = vector.load %arg16[%c0_56, %c2_57, %c0_58] : memref<2x8x64xf32, #tpu.memory_space<vmem>>, vector<2x1x32xf32>
    %137 = vector.shape_cast %136 : vector<2x1x32xf32> to vector<2x32xf32>
    %138 = vector.shape_cast %135 : vector<2x32xf32> to vector<2x1x32xf32>
    tpu.vector_store %arg16[%c0_56, %c2_57, %c0_58], %138 {strides = array<i32>} : memref<2x8x64xf32, #tpu.memory_space<vmem>>, vector<2x1x32xf32>,
    %139 = vector.extract_strided_slice %119 {offsets = [0, 0], sizes = [2, 96], strides = [1, 1]} : vector<2x128xf32> to vector<2x96xf32>
    %140 = arith.negf %139 : vector<2x96xf32>
    %141 = math.exp %140 : vector<2x96xf32>
    %cst_59 = arith.constant 1.000000e+00 : f32
    %142 = vector.broadcast %cst_59 : f32 to vector<2x96xf32>
    %143 = arith.addf %142, %141 : vector<2x96xf32>
    %144 = arith.divf %142, %143 : vector<2x96xf32>
    %145 = vector.extract_strided_slice %119 {offsets = [0, 96], sizes = [2, 32], strides = [1, 1]} : vector<2x128xf32> to vector<2x32xf32>
    %146 = math.tanh %145 : vector<2x32xf32>
    %147 = vector.extract_strided_slice %144 {offsets = [0, 32], sizes = [2, 32], strides = [1, 1]} : vector<2x96xf32> to vector<2x32xf32>
    %148 = arith.mulf %147, %103 : vector<2x32xf32>
    %149 = vector.extract_strided_slice %144 {offsets = [0, 0], sizes = [2, 32], strides = [1, 1]} : vector<2x96xf32> to vector<2x32xf32>
    %150 = arith.mulf %149, %146 : vector<2x32xf32>
    %151 = arith.addf %148, %150 : vector<2x32xf32>
    %152 = vector.extract_strided_slice %144 {offsets = [0, 64], sizes = [2, 32], strides = [1, 1]} : vector<2x96xf32> to vector<2x32xf32>
    %153 = math.tanh %151 : vector<2x32xf32>
    %154 = arith.mulf %152, %153 : vector<2x32xf32>
    %c0_60 = arith.constant 0 : index
    %c5_61 = arith.constant 5 : index
    %c32_62 = arith.constant 32 : index
    %155 = vector.load %arg16[%c0_60, %c5_61, %c32_62] : memref<2x8x64xf32, #tpu.memory_space<vmem>>, vector<2x1x32xf32>
    %156 = vector.shape_cast %155 : vector<2x1x32xf32> to vector<2x32xf32>
    %157 = vector.shape_cast %154 : vector<2x32xf32> to vector<2x1x32xf32>
    tpu.vector_store %arg16[%c0_60, %c5_61, %c32_62], %157 {strides = array<i32>} : memref<2x8x64xf32, #tpu.memory_space<vmem>>, vector<2x1x32xf32>,
    %c0_63 = arith.constant 0 : index
    %c3 = arith.constant 3 : index
    %c0_64 = arith.constant 0 : index
    %158 = vector.load %arg14[%c0_63, %c3, %c0_64] : memref<2x8x128xf32, #tpu.memory_space<vmem>>, vector<2x1x128xf32>
    %159 = vector.shape_cast %158 : vector<2x1x128xf32> to vector<2x128xf32>
    %160 = arith.truncf %135 : vector<2x32xf32> to vector<2x32xbf16>
    %cst_65 = arith.constant dense<0.000000e+00> : vector<2x128xf32>
    %161 = tpu.matmul %160, %16, %cst_65 {dimension_numbers = #tpu.dot_dimension_numbers<[1], [0], [0], [1], [0, 0, 1, 1], [], []>} : vector<2x32xbf16>, vector<32x128xbf16>, vector<2x128xf32> -> vector<2x128xf32>
    %162 = arith.addf %159, %161 : vector<2x128xf32>
    %c0_66 = arith.constant 0 : index
    %c4 = arith.constant 4 : index
    %c0_67 = arith.constant 0 : index
    %163 = vector.load %arg15[%c0_66, %c4, %c0_67] : memref<2x8x128xf32, #tpu.memory_space<vmem>>, vector<2x1x128xf32>
    %164 = vector.shape_cast %163 : vector<2x1x128xf32> to vector<2x128xf32>
    %165 = arith.truncf %154 : vector<2x32xf32> to vector<2x32xbf16>
    %cst_68 = arith.constant dense<0.000000e+00> : vector<2x128xf32>
    %166 = tpu.matmul %165, %17, %cst_68 {dimension_numbers = #tpu.dot_dimension_numbers<[1], [0], [0], [1], [0, 0, 1, 1], [], []>} : vector<2x32xbf16>, vector<32x128xbf16>, vector<2x128xf32> -> vector<2x128xf32>
    %167 = arith.addf %164, %166 : vector<2x128xf32>
    %168 = vector.extract_strided_slice %162 {offsets = [0, 0], sizes = [2, 96], strides = [1, 1]} : vector<2x128xf32> to vector<2x96xf32>
    %169 = arith.negf %168 : vector<2x96xf32>
    %170 = math.exp %169 : vector<2x96xf32>
    %cst_69 = arith.constant 1.000000e+00 : f32
    %171 = vector.broadcast %cst_69 : f32 to vector<2x96xf32>
    %172 = arith.addf %171, %170 : vector<2x96xf32>
    %173 = arith.divf %171, %172 : vector<2x96xf32>
    %174 = vector.extract_strided_slice %162 {offsets = [0, 96], sizes = [2, 32], strides = [1, 1]} : vector<2x128xf32> to vector<2x32xf32>
    %175 = math.tanh %174 : vector<2x32xf32>
    %176 = vector.extract_strided_slice %173 {offsets = [0, 32], sizes = [2, 32], strides = [1, 1]} : vector<2x96xf32> to vector<2x32xf32>
    %177 = arith.mulf %176, %132 : vector<2x32xf32>
    %178 = vector.extract_strided_slice %173 {offsets = [0, 0], sizes = [2, 32], strides = [1, 1]} : vector<2x96xf32> to vector<2x32xf32>
    %179 = arith.mulf %178, %175 : vector<2x32xf32>
    %180 = arith.addf %177, %179 : vector<2x32xf32>
    %181 = vector.extract_strided_slice %173 {offsets = [0, 64], sizes = [2, 32], strides = [1, 1]} : vector<2x96xf32> to vector<2x32xf32>
    %182 = math.tanh %180 : vector<2x32xf32>
    %183 = arith.mulf %181, %182 : vector<2x32xf32>
    %c0_70 = arith.constant 0 : index
    %c3_71 = arith.constant 3 : index
    %c0_72 = arith.constant 0 : index
    %184 = vector.load %arg16[%c0_70, %c3_71, %c0_72] : memref<2x8x64xf32, #tpu.memory_space<vmem>>, vector<2x1x32xf32>
    %185 = vector.shape_cast %184 : vector<2x1x32xf32> to vector<2x32xf32>
    %186 = vector.shape_cast %183 : vector<2x32xf32> to vector<2x1x32xf32>
    tpu.vector_store %arg16[%c0_70, %c3_71, %c0_72], %186 {strides = array<i32>} : memref<2x8x64xf32, #tpu.memory_space<vmem>>, vector<2x1x32xf32>,
    %187 = vector.extract_strided_slice %167 {offsets = [0, 0], sizes = [2, 96], strides = [1, 1]} : vector<2x128xf32> to vector<2x96xf32>
    %188 = arith.negf %187 : vector<2x96xf32>
    %189 = math.exp %188 : vector<2x96xf32>
    %cst_73 = arith.constant 1.000000e+00 : f32
    %190 = vector.broadcast %cst_73 : f32 to vector<2x96xf32>
    %191 = arith.addf %190, %189 : vector<2x96xf32>
    %192 = arith.divf %190, %191 : vector<2x96xf32>
    %193 = vector.extract_strided_slice %167 {offsets = [0, 96], sizes = [2, 32], strides = [1, 1]} : vector<2x128xf32> to vector<2x32xf32>
    %194 = math.tanh %193 : vector<2x32xf32>
    %195 = vector.extract_strided_slice %192 {offsets = [0, 32], sizes = [2, 32], strides = [1, 1]} : vector<2x96xf32> to vector<2x32xf32>
    %196 = arith.mulf %195, %151 : vector<2x32xf32>
    %197 = vector.extract_strided_slice %192 {offsets = [0, 0], sizes = [2, 32], strides = [1, 1]} : vector<2x96xf32> to vector<2x32xf32>
    %198 = arith.mulf %197, %194 : vector<2x32xf32>
    %199 = arith.addf %196, %198 : vector<2x32xf32>
    %200 = vector.extract_strided_slice %192 {offsets = [0, 64], sizes = [2, 32], strides = [1, 1]} : vector<2x96xf32> to vector<2x32xf32>
    %201 = math.tanh %199 : vector<2x32xf32>
    %202 = arith.mulf %200, %201 : vector<2x32xf32>
    %c0_74 = arith.constant 0 : index
    %c4_75 = arith.constant 4 : index
    %c32_76 = arith.constant 32 : index
    %203 = vector.load %arg16[%c0_74, %c4_75, %c32_76] : memref<2x8x64xf32, #tpu.memory_space<vmem>>, vector<2x1x32xf32>
    %204 = vector.shape_cast %203 : vector<2x1x32xf32> to vector<2x32xf32>
    %205 = vector.shape_cast %202 : vector<2x32xf32> to vector<2x1x32xf32>
    tpu.vector_store %arg16[%c0_74, %c4_75, %c32_76], %205 {strides = array<i32>} : memref<2x8x64xf32, #tpu.memory_space<vmem>>, vector<2x1x32xf32>,
    %c0_77 = arith.constant 0 : index
    %c4_78 = arith.constant 4 : index
    %c0_79 = arith.constant 0 : index
    %206 = vector.load %arg14[%c0_77, %c4_78, %c0_79] : memref<2x8x128xf32, #tpu.memory_space<vmem>>, vector<2x1x128xf32>
    %207 = vector.shape_cast %206 : vector<2x1x128xf32> to vector<2x128xf32>
    %208 = arith.truncf %183 : vector<2x32xf32> to vector<2x32xbf16>
    %cst_80 = arith.constant dense<0.000000e+00> : vector<2x128xf32>
    %209 = tpu.matmul %208, %16, %cst_80 {dimension_numbers = #tpu.dot_dimension_numbers<[1], [0], [0], [1], [0, 0, 1, 1], [], []>} : vector<2x32xbf16>, vector<32x128xbf16>, vector<2x128xf32> -> vector<2x128xf32>
    %210 = arith.addf %207, %209 : vector<2x128xf32>
    %c0_81 = arith.constant 0 : index
    %c3_82 = arith.constant 3 : index
    %c0_83 = arith.constant 0 : index
    %211 = vector.load %arg15[%c0_81, %c3_82, %c0_83] : memref<2x8x128xf32, #tpu.memory_space<vmem>>, vector<2x1x128xf32>
    %212 = vector.shape_cast %211 : vector<2x1x128xf32> to vector<2x128xf32>
    %213 = arith.truncf %202 : vector<2x32xf32> to vector<2x32xbf16>
    %cst_84 = arith.constant dense<0.000000e+00> : vector<2x128xf32>
    %214 = tpu.matmul %213, %17, %cst_84 {dimension_numbers = #tpu.dot_dimension_numbers<[1], [0], [0], [1], [0, 0, 1, 1], [], []>} : vector<2x32xbf16>, vector<32x128xbf16>, vector<2x128xf32> -> vector<2x128xf32>
    %215 = arith.addf %212, %214 : vector<2x128xf32>
    %216 = vector.extract_strided_slice %210 {offsets = [0, 0], sizes = [2, 96], strides = [1, 1]} : vector<2x128xf32> to vector<2x96xf32>
    %217 = arith.negf %216 : vector<2x96xf32>
    %218 = math.exp %217 : vector<2x96xf32>
    %cst_85 = arith.constant 1.000000e+00 : f32
    %219 = vector.broadcast %cst_85 : f32 to vector<2x96xf32>
    %220 = arith.addf %219, %218 : vector<2x96xf32>
    %221 = arith.divf %219, %220 : vector<2x96xf32>
    %222 = vector.extract_strided_slice %210 {offsets = [0, 96], sizes = [2, 32], strides = [1, 1]} : vector<2x128xf32> to vector<2x32xf32>
    %223 = math.tanh %222 : vector<2x32xf32>
    %224 = vector.extract_strided_slice %221 {offsets = [0, 32], sizes = [2, 32], strides = [1, 1]} : vector<2x96xf32> to vector<2x32xf32>
    %225 = arith.mulf %224, %180 : vector<2x32xf32>
    %226 = vector.extract_strided_slice %221 {offsets = [0, 0], sizes = [2, 32], strides = [1, 1]} : vector<2x96xf32> to vector<2x32xf32>
    %227 = arith.mulf %226, %223 : vector<2x32xf32>
    %228 = arith.addf %225, %227 : vector<2x32xf32>
    %229 = vector.extract_strided_slice %221 {offsets = [0, 64], sizes = [2, 32], strides = [1, 1]} : vector<2x96xf32> to vector<2x32xf32>
    %230 = math.tanh %228 : vector<2x32xf32>
    %231 = arith.mulf %229, %230 : vector<2x32xf32>
    %c0_86 = arith.constant 0 : index
    %c4_87 = arith.constant 4 : index
    %c0_88 = arith.constant 0 : index
    %232 = vector.load %arg16[%c0_86, %c4_87, %c0_88] : memref<2x8x64xf32, #tpu.memory_space<vmem>>, vector<2x1x32xf32>
    %233 = vector.shape_cast %232 : vector<2x1x32xf32> to vector<2x32xf32>
    %234 = vector.shape_cast %231 : vector<2x32xf32> to vector<2x1x32xf32>
    tpu.vector_store %arg16[%c0_86, %c4_87, %c0_88], %234 {strides = array<i32>} : memref<2x8x64xf32, #tpu.memory_space<vmem>>, vector<2x1x32xf32>,
    %235 = vector.extract_strided_slice %215 {offsets = [0, 0], sizes = [2, 96], strides = [1, 1]} : vector<2x128xf32> to vector<2x96xf32>
    %236 = arith.negf %235 : vector<2x96xf32>
    %237 = math.exp %236 : vector<2x96xf32>
    %cst_89 = arith.constant 1.000000e+00 : f32
    %238 = vector.broadcast %cst_89 : f32 to vector<2x96xf32>
    %239 = arith.addf %238, %237 : vector<2x96xf32>
    %240 = arith.divf %238, %239 : vector<2x96xf32>
    %241 = vector.extract_strided_slice %215 {offsets = [0, 96], sizes = [2, 32], strides = [1, 1]} : vector<2x128xf32> to vector<2x32xf32>
    %242 = math.tanh %241 : vector<2x32xf32>
    %243 = vector.extract_strided_slice %240 {offsets = [0, 32], sizes = [2, 32], strides = [1, 1]} : vector<2x96xf32> to vector<2x32xf32>
    %244 = arith.mulf %243, %199 : vector<2x32xf32>
    %245 = vector.extract_strided_slice %240 {offsets = [0, 0], sizes = [2, 32], strides = [1, 1]} : vector<2x96xf32> to vector<2x32xf32>
    %246 = arith.mulf %245, %242 : vector<2x32xf32>
    %247 = arith.addf %244, %246 : vector<2x32xf32>
    %248 = vector.extract_strided_slice %240 {offsets = [0, 64], sizes = [2, 32], strides = [1, 1]} : vector<2x96xf32> to vector<2x32xf32>
    %249 = math.tanh %247 : vector<2x32xf32>
    %250 = arith.mulf %248, %249 : vector<2x32xf32>
    %c0_90 = arith.constant 0 : index
    %c3_91 = arith.constant 3 : index
    %c32_92 = arith.constant 32 : index
    %251 = vector.load %arg16[%c0_90, %c3_91, %c32_92] : memref<2x8x64xf32, #tpu.memory_space<vmem>>, vector<2x1x32xf32>
    %252 = vector.shape_cast %251 : vector<2x1x32xf32> to vector<2x32xf32>
    %253 = vector.shape_cast %250 : vector<2x32xf32> to vector<2x1x32xf32>
    tpu.vector_store %arg16[%c0_90, %c3_91, %c32_92], %253 {strides = array<i32>} : memref<2x8x64xf32, #tpu.memory_space<vmem>>, vector<2x1x32xf32>,
    %c0_93 = arith.constant 0 : index
    %c5_94 = arith.constant 5 : index
    %c0_95 = arith.constant 0 : index
    %254 = vector.load %arg14[%c0_93, %c5_94, %c0_95] : memref<2x8x128xf32, #tpu.memory_space<vmem>>, vector<2x1x128xf32>
    %255 = vector.shape_cast %254 : vector<2x1x128xf32> to vector<2x128xf32>
    %256 = arith.truncf %231 : vector<2x32xf32> to vector<2x32xbf16>
    %cst_96 = arith.constant dense<0.000000e+00> : vector<2x128xf32>
    %257 = tpu.matmul %256, %16, %cst_96 {dimension_numbers = #tpu.dot_dimension_numbers<[1], [0], [0], [1], [0, 0, 1, 1], [], []>} : vector<2x32xbf16>, vector<32x128xbf16>, vector<2x128xf32> -> vector<2x128xf32>
    %258 = arith.addf %255, %257 : vector<2x128xf32>
    %c0_97 = arith.constant 0 : index
    %c2_98 = arith.constant 2 : index
    %c0_99 = arith.constant 0 : index
    %259 = vector.load %arg15[%c0_97, %c2_98, %c0_99] : memref<2x8x128xf32, #tpu.memory_space<vmem>>, vector<2x1x128xf32>
    %260 = vector.shape_cast %259 : vector<2x1x128xf32> to vector<2x128xf32>
    %261 = arith.truncf %250 : vector<2x32xf32> to vector<2x32xbf16>
    %cst_100 = arith.constant dense<0.000000e+00> : vector<2x128xf32>
    %262 = tpu.matmul %261, %17, %cst_100 {dimension_numbers = #tpu.dot_dimension_numbers<[1], [0], [0], [1], [0, 0, 1, 1], [], []>} : vector<2x32xbf16>, vector<32x128xbf16>, vector<2x128xf32> -> vector<2x128xf32>
    %263 = arith.addf %260, %262 : vector<2x128xf32>
    %264 = vector.extract_strided_slice %258 {offsets = [0, 0], sizes = [2, 96], strides = [1, 1]} : vector<2x128xf32> to vector<2x96xf32>
    %265 = arith.negf %264 : vector<2x96xf32>
    %266 = math.exp %265 : vector<2x96xf32>
    %cst_101 = arith.constant 1.000000e+00 : f32
    %267 = vector.broadcast %cst_101 : f32 to vector<2x96xf32>
    %268 = arith.addf %267, %266 : vector<2x96xf32>
    %269 = arith.divf %267, %268 : vector<2x96xf32>
    %270 = vector.extract_strided_slice %258 {offsets = [0, 96], sizes = [2, 32], strides = [1, 1]} : vector<2x128xf32> to vector<2x32xf32>
    %271 = math.tanh %270 : vector<2x32xf32>
    %272 = vector.extract_strided_slice %269 {offsets = [0, 32], sizes = [2, 32], strides = [1, 1]} : vector<2x96xf32> to vector<2x32xf32>
    %273 = arith.mulf %272, %228 : vector<2x32xf32>
    %274 = vector.extract_strided_slice %269 {offsets = [0, 0], sizes = [2, 32], strides = [1, 1]} : vector<2x96xf32> to vector<2x32xf32>
    %275 = arith.mulf %274, %271 : vector<2x32xf32>
    %276 = arith.addf %273, %275 : vector<2x32xf32>
    %277 = vector.extract_strided_slice %269 {offsets = [0, 64], sizes = [2, 32], strides = [1, 1]} : vector<2x96xf32> to vector<2x32xf32>
    %278 = math.tanh %276 : vector<2x32xf32>
    %279 = arith.mulf %277, %278 : vector<2x32xf32>
    %c0_102 = arith.constant 0 : index
    %c5_103 = arith.constant 5 : index
    %c0_104 = arith.constant 0 : index
    %280 = vector.load %arg16[%c0_102, %c5_103, %c0_104] : memref<2x8x64xf32, #tpu.memory_space<vmem>>, vector<2x1x32xf32>
    %281 = vector.shape_cast %280 : vector<2x1x32xf32> to vector<2x32xf32>
    %282 = vector.shape_cast %279 : vector<2x32xf32> to vector<2x1x32xf32>
    tpu.vector_store %arg16[%c0_102, %c5_103, %c0_104], %282 {strides = array<i32>} : memref<2x8x64xf32, #tpu.memory_space<vmem>>, vector<2x1x32xf32>,
    %283 = vector.extract_strided_slice %263 {offsets = [0, 0], sizes = [2, 96], strides = [1, 1]} : vector<2x128xf32> to vector<2x96xf32>
    %284 = arith.negf %283 : vector<2x96xf32>
    %285 = math.exp %284 : vector<2x96xf32>
    %cst_105 = arith.constant 1.000000e+00 : f32
    %286 = vector.broadcast %cst_105 : f32 to vector<2x96xf32>
    %287 = arith.addf %286, %285 : vector<2x96xf32>
    %288 = arith.divf %286, %287 : vector<2x96xf32>
    %289 = vector.extract_strided_slice %263 {offsets = [0, 96], sizes = [2, 32], strides = [1, 1]} : vector<2x128xf32> to vector<2x32xf32>
    %290 = math.tanh %289 : vector<2x32xf32>
    %291 = vector.extract_strided_slice %288 {offsets = [0, 32], sizes = [2, 32], strides = [1, 1]} : vector<2x96xf32> to vector<2x32xf32>
    %292 = arith.mulf %291, %247 : vector<2x32xf32>
    %293 = vector.extract_strided_slice %288 {offsets = [0, 0], sizes = [2, 32], strides = [1, 1]} : vector<2x96xf32> to vector<2x32xf32>
    %294 = arith.mulf %293, %290 : vector<2x32xf32>
    %295 = arith.addf %292, %294 : vector<2x32xf32>
    %296 = vector.extract_strided_slice %288 {offsets = [0, 64], sizes = [2, 32], strides = [1, 1]} : vector<2x96xf32> to vector<2x32xf32>
    %297 = math.tanh %295 : vector<2x32xf32>
    %298 = arith.mulf %296, %297 : vector<2x32xf32>
    %c0_106 = arith.constant 0 : index
    %c2_107 = arith.constant 2 : index
    %c32_108 = arith.constant 32 : index
    %299 = vector.load %arg16[%c0_106, %c2_107, %c32_108] : memref<2x8x64xf32, #tpu.memory_space<vmem>>, vector<2x1x32xf32>
    %300 = vector.shape_cast %299 : vector<2x1x32xf32> to vector<2x32xf32>
    %301 = vector.shape_cast %298 : vector<2x32xf32> to vector<2x1x32xf32>
    tpu.vector_store %arg16[%c0_106, %c2_107, %c32_108], %301 {strides = array<i32>} : memref<2x8x64xf32, #tpu.memory_space<vmem>>, vector<2x1x32xf32>,
    %c0_109 = arith.constant 0 : index
    %c6_110 = arith.constant 6 : index
    %c0_111 = arith.constant 0 : index
    %302 = vector.load %arg14[%c0_109, %c6_110, %c0_111] : memref<2x8x128xf32, #tpu.memory_space<vmem>>, vector<2x1x128xf32>
    %303 = vector.shape_cast %302 : vector<2x1x128xf32> to vector<2x128xf32>
    %304 = arith.truncf %279 : vector<2x32xf32> to vector<2x32xbf16>
    %cst_112 = arith.constant dense<0.000000e+00> : vector<2x128xf32>
    %305 = tpu.matmul %304, %16, %cst_112 {dimension_numbers = #tpu.dot_dimension_numbers<[1], [0], [0], [1], [0, 0, 1, 1], [], []>} : vector<2x32xbf16>, vector<32x128xbf16>, vector<2x128xf32> -> vector<2x128xf32>
    %306 = arith.addf %303, %305 : vector<2x128xf32>
    %c0_113 = arith.constant 0 : index
    %c1_114 = arith.constant 1 : index
    %c0_115 = arith.constant 0 : index
    %307 = vector.load %arg15[%c0_113, %c1_114, %c0_115] : memref<2x8x128xf32, #tpu.memory_space<vmem>>, vector<2x1x128xf32>
    %308 = vector.shape_cast %307 : vector<2x1x128xf32> to vector<2x128xf32>
    %309 = arith.truncf %298 : vector<2x32xf32> to vector<2x32xbf16>
    %cst_116 = arith.constant dense<0.000000e+00> : vector<2x128xf32>
    %310 = tpu.matmul %309, %17, %cst_116 {dimension_numbers = #tpu.dot_dimension_numbers<[1], [0], [0], [1], [0, 0, 1, 1], [], []>} : vector<2x32xbf16>, vector<32x128xbf16>, vector<2x128xf32> -> vector<2x128xf32>
    %311 = arith.addf %308, %310 : vector<2x128xf32>
    %312 = vector.extract_strided_slice %306 {offsets = [0, 0], sizes = [2, 96], strides = [1, 1]} : vector<2x128xf32> to vector<2x96xf32>
    %313 = arith.negf %312 : vector<2x96xf32>
    %314 = math.exp %313 : vector<2x96xf32>
    %cst_117 = arith.constant 1.000000e+00 : f32
    %315 = vector.broadcast %cst_117 : f32 to vector<2x96xf32>
    %316 = arith.addf %315, %314 : vector<2x96xf32>
    %317 = arith.divf %315, %316 : vector<2x96xf32>
    %318 = vector.extract_strided_slice %306 {offsets = [0, 96], sizes = [2, 32], strides = [1, 1]} : vector<2x128xf32> to vector<2x32xf32>
    %319 = math.tanh %318 : vector<2x32xf32>
    %320 = vector.extract_strided_slice %317 {offsets = [0, 32], sizes = [2, 32], strides = [1, 1]} : vector<2x96xf32> to vector<2x32xf32>
    %321 = arith.mulf %320, %276 : vector<2x32xf32>
    %322 = vector.extract_strided_slice %317 {offsets = [0, 0], sizes = [2, 32], strides = [1, 1]} : vector<2x96xf32> to vector<2x32xf32>
    %323 = arith.mulf %322, %319 : vector<2x32xf32>
    %324 = arith.addf %321, %323 : vector<2x32xf32>
    %325 = vector.extract_strided_slice %317 {offsets = [0, 64], sizes = [2, 32], strides = [1, 1]} : vector<2x96xf32> to vector<2x32xf32>
    %326 = math.tanh %324 : vector<2x32xf32>
    %327 = arith.mulf %325, %326 : vector<2x32xf32>
    %c0_118 = arith.constant 0 : index
    %c6_119 = arith.constant 6 : index
    %c0_120 = arith.constant 0 : index
    %328 = vector.load %arg16[%c0_118, %c6_119, %c0_120] : memref<2x8x64xf32, #tpu.memory_space<vmem>>, vector<2x1x32xf32>
    %329 = vector.shape_cast %328 : vector<2x1x32xf32> to vector<2x32xf32>
    %330 = vector.shape_cast %327 : vector<2x32xf32> to vector<2x1x32xf32>
    tpu.vector_store %arg16[%c0_118, %c6_119, %c0_120], %330 {strides = array<i32>} : memref<2x8x64xf32, #tpu.memory_space<vmem>>, vector<2x1x32xf32>,
    %331 = vector.extract_strided_slice %311 {offsets = [0, 0], sizes = [2, 96], strides = [1, 1]} : vector<2x128xf32> to vector<2x96xf32>
    %332 = arith.negf %331 : vector<2x96xf32>
    %333 = math.exp %332 : vector<2x96xf32>
    %cst_121 = arith.constant 1.000000e+00 : f32
    %334 = vector.broadcast %cst_121 : f32 to vector<2x96xf32>
    %335 = arith.addf %334, %333 : vector<2x96xf32>
    %336 = arith.divf %334, %335 : vector<2x96xf32>
    %337 = vector.extract_strided_slice %311 {offsets = [0, 96], sizes = [2, 32], strides = [1, 1]} : vector<2x128xf32> to vector<2x32xf32>
    %338 = math.tanh %337 : vector<2x32xf32>
    %339 = vector.extract_strided_slice %336 {offsets = [0, 32], sizes = [2, 32], strides = [1, 1]} : vector<2x96xf32> to vector<2x32xf32>
    %340 = arith.mulf %339, %295 : vector<2x32xf32>
    %341 = vector.extract_strided_slice %336 {offsets = [0, 0], sizes = [2, 32], strides = [1, 1]} : vector<2x96xf32> to vector<2x32xf32>
    %342 = arith.mulf %341, %338 : vector<2x32xf32>
    %343 = arith.addf %340, %342 : vector<2x32xf32>
    %344 = vector.extract_strided_slice %336 {offsets = [0, 64], sizes = [2, 32], strides = [1, 1]} : vector<2x96xf32> to vector<2x32xf32>
    %345 = math.tanh %343 : vector<2x32xf32>
    %346 = arith.mulf %344, %345 : vector<2x32xf32>
    %c0_122 = arith.constant 0 : index
    %c1_123 = arith.constant 1 : index
    %c32_124 = arith.constant 32 : index
    %347 = vector.load %arg16[%c0_122, %c1_123, %c32_124] : memref<2x8x64xf32, #tpu.memory_space<vmem>>, vector<2x1x32xf32>
    %348 = vector.shape_cast %347 : vector<2x1x32xf32> to vector<2x32xf32>
    %349 = vector.shape_cast %346 : vector<2x32xf32> to vector<2x1x32xf32>
    tpu.vector_store %arg16[%c0_122, %c1_123, %c32_124], %349 {strides = array<i32>} : memref<2x8x64xf32, #tpu.memory_space<vmem>>, vector<2x1x32xf32>,
    %c0_125 = arith.constant 0 : index
    %c7_126 = arith.constant 7 : index
    %c0_127 = arith.constant 0 : index
    %350 = vector.load %arg14[%c0_125, %c7_126, %c0_127] : memref<2x8x128xf32, #tpu.memory_space<vmem>>, vector<2x1x128xf32>
    %351 = vector.shape_cast %350 : vector<2x1x128xf32> to vector<2x128xf32>
    %352 = arith.truncf %327 : vector<2x32xf32> to vector<2x32xbf16>
    %cst_128 = arith.constant dense<0.000000e+00> : vector<2x128xf32>
    %353 = tpu.matmul %352, %16, %cst_128 {dimension_numbers = #tpu.dot_dimension_numbers<[1], [0], [0], [1], [0, 0, 1, 1], [], []>} : vector<2x32xbf16>, vector<32x128xbf16>, vector<2x128xf32> -> vector<2x128xf32>
    %354 = arith.addf %351, %353 : vector<2x128xf32>
    %c0_129 = arith.constant 0 : index
    %c0_130 = arith.constant 0 : index
    %c0_131 = arith.constant 0 : index
    %355 = vector.load %arg15[%c0_129, %c0_130, %c0_131] : memref<2x8x128xf32, #tpu.memory_space<vmem>>, vector<2x1x128xf32>
    %356 = vector.shape_cast %355 : vector<2x1x128xf32> to vector<2x128xf32>
    %357 = arith.truncf %346 : vector<2x32xf32> to vector<2x32xbf16>
    %cst_132 = arith.constant dense<0.000000e+00> : vector<2x128xf32>
    %358 = tpu.matmul %357, %17, %cst_132 {dimension_numbers = #tpu.dot_dimension_numbers<[1], [0], [0], [1], [0, 0, 1, 1], [], []>} : vector<2x32xbf16>, vector<32x128xbf16>, vector<2x128xf32> -> vector<2x128xf32>
    %359 = arith.addf %356, %358 : vector<2x128xf32>
    %360 = vector.extract_strided_slice %354 {offsets = [0, 0], sizes = [2, 96], strides = [1, 1]} : vector<2x128xf32> to vector<2x96xf32>
    %361 = arith.negf %360 : vector<2x96xf32>
    %362 = math.exp %361 : vector<2x96xf32>
    %cst_133 = arith.constant 1.000000e+00 : f32
    %363 = vector.broadcast %cst_133 : f32 to vector<2x96xf32>
    %364 = arith.addf %363, %362 : vector<2x96xf32>
    %365 = arith.divf %363, %364 : vector<2x96xf32>
    %366 = vector.extract_strided_slice %354 {offsets = [0, 96], sizes = [2, 32], strides = [1, 1]} : vector<2x128xf32> to vector<2x32xf32>
    %367 = math.tanh %366 : vector<2x32xf32>
    %368 = vector.extract_strided_slice %365 {offsets = [0, 32], sizes = [2, 32], strides = [1, 1]} : vector<2x96xf32> to vector<2x32xf32>
    %369 = arith.mulf %368, %324 : vector<2x32xf32>
    %370 = vector.extract_strided_slice %365 {offsets = [0, 0], sizes = [2, 32], strides = [1, 1]} : vector<2x96xf32> to vector<2x32xf32>
    %371 = arith.mulf %370, %367 : vector<2x32xf32>
    %372 = arith.addf %369, %371 : vector<2x32xf32>
    %373 = vector.extract_strided_slice %365 {offsets = [0, 64], sizes = [2, 32], strides = [1, 1]} : vector<2x96xf32> to vector<2x32xf32>
    %374 = math.tanh %372 : vector<2x32xf32>
    %375 = arith.mulf %373, %374 : vector<2x32xf32>
    %c0_134 = arith.constant 0 : index
    %c7_135 = arith.constant 7 : index
    %c0_136 = arith.constant 0 : index
    %376 = vector.load %arg16[%c0_134, %c7_135, %c0_136] : memref<2x8x64xf32, #tpu.memory_space<vmem>>, vector<2x1x32xf32>
    %377 = vector.shape_cast %376 : vector<2x1x32xf32> to vector<2x32xf32>
    %378 = vector.shape_cast %375 : vector<2x32xf32> to vector<2x1x32xf32>
    tpu.vector_store %arg16[%c0_134, %c7_135, %c0_136], %378 {strides = array<i32>} : memref<2x8x64xf32, #tpu.memory_space<vmem>>, vector<2x1x32xf32>,
    %379 = vector.extract_strided_slice %359 {offsets = [0, 0], sizes = [2, 96], strides = [1, 1]} : vector<2x128xf32> to vector<2x96xf32>
    %380 = arith.negf %379 : vector<2x96xf32>
    %381 = math.exp %380 : vector<2x96xf32>
    %cst_137 = arith.constant 1.000000e+00 : f32
    %382 = vector.broadcast %cst_137 : f32 to vector<2x96xf32>
    %383 = arith.addf %382, %381 : vector<2x96xf32>
    %384 = arith.divf %382, %383 : vector<2x96xf32>
    %385 = vector.extract_strided_slice %359 {offsets = [0, 96], sizes = [2, 32], strides = [1, 1]} : vector<2x128xf32> to vector<2x32xf32>
    %386 = math.tanh %385 : vector<2x32xf32>
    %387 = vector.extract_strided_slice %384 {offsets = [0, 32], sizes = [2, 32], strides = [1, 1]} : vector<2x96xf32> to vector<2x32xf32>
    %388 = arith.mulf %387, %343 : vector<2x32xf32>
    %389 = vector.extract_strided_slice %384 {offsets = [0, 0], sizes = [2, 32], strides = [1, 1]} : vector<2x96xf32> to vector<2x32xf32>
    %390 = arith.mulf %389, %386 : vector<2x32xf32>
    %391 = arith.addf %388, %390 : vector<2x32xf32>
    %392 = vector.extract_strided_slice %384 {offsets = [0, 64], sizes = [2, 32], strides = [1, 1]} : vector<2x96xf32> to vector<2x32xf32>
    %393 = math.tanh %391 : vector<2x32xf32>
    %394 = arith.mulf %392, %393 : vector<2x32xf32>
    %c0_138 = arith.constant 0 : index
    %c0_139 = arith.constant 0 : index
    %c32_140 = arith.constant 32 : index
    %395 = vector.load %arg16[%c0_138, %c0_139, %c32_140] : memref<2x8x64xf32, #tpu.memory_space<vmem>>, vector<2x1x32xf32>
    %396 = vector.shape_cast %395 : vector<2x1x32xf32> to vector<2x32xf32>
    %397 = vector.shape_cast %394 : vector<2x32xf32> to vector<2x1x32xf32>
    tpu.vector_store %arg16[%c0_138, %c0_139, %c32_140], %397 {strides = array<i32>} : memref<2x8x64xf32, #tpu.memory_space<vmem>>, vector<2x1x32xf32>,
    %c0_141 = arith.constant 0 : index
    %c0_142 = arith.constant 0 : index
    %c0_143 = arith.constant 0 : index
    %398 = vector.load %arg16[%c0_141, %c0_142, %c0_143] : memref<2x8x64xf32, #tpu.memory_space<vmem>>, vector<2x8x64xf32>
    %c0_144 = arith.constant 0 : index
    %c0_145 = arith.constant 0 : index
    %399 = vector.load %arg8[%c0_144, %c0_145] : memref<1x64xf32, #tpu.memory_space<vmem>>, vector<1x64xf32>
    %400 = vector.shape_cast %399 : vector<1x64xf32> to vector<1x1x64xf32>
    %401 = vector.broadcast %400 : vector<1x1x64xf32> to vector<2x8x64xf32>
    %402 = arith.mulf %398, %401 : vector<2x8x64xf32>
    %cst_146 = arith.constant dense<0.000000e+00> : vector<2x8xf32>
    %403 = vector.multi_reduction <add>, %402, %cst_146 [2] : vector<2x8x64xf32> to vector<2x8xf32>
    %c0_147 = arith.constant 0 : index
    %404 = memref.load %arg9[%c0_147] : memref<1xf32, #tpu.memory_space<smem>>
    %405 = vector.broadcast %404 : f32 to vector<2x8xf32>
    %406 = arith.addf %403, %405 : vector<2x8xf32>
    %cst_148 = arith.constant dense<0xFF800000> : vector<2xf32>
    %407 = vector.multi_reduction <maximumf>, %406, %cst_148 [1] : vector<2x8xf32> to vector<2xf32>
    %408 = vector.shape_cast %407 : vector<2xf32> to vector<2x1xf32>
    %409 = vector.broadcast %408 : vector<2x1xf32> to vector<2x8xf32>
    %410 = arith.subf %406, %409 : vector<2x8xf32>
    %411 = math.exp %410 : vector<2x8xf32>
    %cst_149 = arith.constant dense<0.000000e+00> : vector<2xf32>
    %412 = vector.multi_reduction <add>, %411, %cst_149 [1] : vector<2x8xf32> to vector<2xf32>
    %413 = vector.shape_cast %412 : vector<2xf32> to vector<2x1xf32>
    %414 = vector.broadcast %413 : vector<2x1xf32> to vector<2x8xf32>
    %415 = arith.divf %411, %414 : vector<2x8xf32>
    %416 = vector.shape_cast %415 : vector<2x8xf32> to vector<1x1x16xf32>
    %c0_150 = arith.constant 0 : index
    %c0_151 = arith.constant 0 : index
    %c0_152 = arith.constant 0 : index
    %417 = vector.load %arg13[%c0_150, %c0_151, %c0_152] : memref<1x1x16xf32, #tpu.memory_space<vmem>>, vector<1x1x16xf32>
    tpu.vector_store %arg13[%c0_150, %c0_151, %c0_152], %416 {strides = array<i32>} : memref<1x1x16xf32, #tpu.memory_space<vmem>>, vector<1x1x16xf32>,
    %418 = vector.shape_cast %415 : vector<2x8xf32> to vector<2x8x1xf32>
    %419 = vector.broadcast %418 : vector<2x8x1xf32> to vector<2x8x64xf32>
    %420 = arith.mulf %398, %419 : vector<2x8x64xf32>
    %cst_153 = arith.constant dense<0.000000e+00> : vector<2x64xf32>
    %421 = vector.multi_reduction <add>, %420, %cst_153 [1] : vector<2x8x64xf32> to vector<2x64xf32>
    %422 = arith.truncf %421 : vector<2x64xf32> to vector<2x64xbf16>
    %c0_154 = arith.constant 0 : index
    %c0_155 = arith.constant 0 : index
    %423 = vector.load %arg10[%c0_154, %c0_155] : memref<64x128xbf16, #tpu.memory_space<vmem>>, vector<64x128xbf16>
    %cst_156 = arith.constant dense<0.000000e+00> : vector<2x128xf32>
    %424 = tpu.matmul %422, %423, %cst_156 {dimension_numbers = #tpu.dot_dimension_numbers<[1], [0], [0], [1], [0, 0, 1, 1], [], []>} : vector<2x64xbf16>, vector<64x128xbf16>, vector<2x128xf32> -> vector<2x128xf32>
    %c0_157 = arith.constant 0 : index
    %c0_158 = arith.constant 0 : index
    %425 = vector.load %arg11[%c0_157, %c0_158] : memref<1x128xf32, #tpu.memory_space<vmem>>, vector<1x128xf32>
    %426 = vector.broadcast %425 : vector<1x128xf32> to vector<2x128xf32>
    %427 = arith.addf %424, %426 : vector<2x128xf32>
    %c0_159 = arith.constant 0 : index
    %c0_160 = arith.constant 0 : index
    %428 = vector.load %arg12[%c0_159, %c0_160] : memref<2x128xf32, #tpu.memory_space<vmem>>, vector<2x128xf32>
    tpu.vector_store %arg12[%c0_159, %c0_160], %427 {strides = array<i32>} : memref<2x128xf32, #tpu.memory_space<vmem>>, vector<2x128xf32>,
    return
  }
  func.func @transform_0(%arg0: i32) -> (i32, i32, i32) {
    %c0_i32 = arith.constant 0 : i32
    %c0_i32_0 = arith.constant 0 : i32
    %c0_i32_1 = arith.constant 0 : i32
    return %arg0, %c0_i32, %c0_i32_0 : i32, i32, i32
  }
  func.func @transform_1(%arg0: i32) -> (i32, i32) {
    %c0_i32 = arith.constant 0 : i32
    %c0_i32_0 = arith.constant 0 : i32
    %c0_i32_1 = arith.constant 0 : i32
    return %c0_i32, %c0_i32_0 : i32, i32
  }
  func.func @transform_2(%arg0: i32) -> (i32, i32) {
    %c0_i32 = arith.constant 0 : i32
    %c0_i32_0 = arith.constant 0 : i32
    %c0_i32_1 = arith.constant 0 : i32
    return %c0_i32, %c0_i32_0 : i32, i32
  }
  func.func @transform_3(%arg0: i32) -> (i32, i32) {
    %c0_i32 = arith.constant 0 : i32
    %c0_i32_0 = arith.constant 0 : i32
    %c0_i32_1 = arith.constant 0 : i32
    return %c0_i32, %c0_i32_0 : i32, i32
  }
  func.func @transform_4(%arg0: i32) -> (i32, i32) {
    %c0_i32 = arith.constant 0 : i32
    %c0_i32_0 = arith.constant 0 : i32
    %c0_i32_1 = arith.constant 0 : i32
    return %c0_i32, %c0_i32_0 : i32, i32
  }
  func.func @transform_5(%arg0: i32) -> (i32, i32) {
    %c0_i32 = arith.constant 0 : i32
    %c0_i32_0 = arith.constant 0 : i32
    %c0_i32_1 = arith.constant 0 : i32
    return %c0_i32, %c0_i32_0 : i32, i32
  }
  func.func @transform_6(%arg0: i32) -> (i32, i32) {
    %c0_i32 = arith.constant 0 : i32
    %c0_i32_0 = arith.constant 0 : i32
    %c0_i32_1 = arith.constant 0 : i32
    return %c0_i32, %c0_i32_0 : i32, i32
  }
  func.func @transform_7(%arg0: i32) -> (i32, i32) {
    %c0_i32 = arith.constant 0 : i32
    %c0_i32_0 = arith.constant 0 : i32
    %c0_i32_1 = arith.constant 0 : i32
    return %c0_i32, %c0_i32_0 : i32, i32
  }
  func.func @transform_8(%arg0: i32) -> i32 {
    %c0_i32 = arith.constant 0 : i32
    %c0_i32_0 = arith.constant 0 : i32
    return %c0_i32 : i32
  }
  func.func @transform_9(%arg0: i32) -> (i32, i32) {
    %c0_i32 = arith.constant 0 : i32
    %c0_i32_0 = arith.constant 0 : i32
    %c0_i32_1 = arith.constant 0 : i32
    return %c0_i32, %c0_i32_0 : i32, i32
  }
  func.func @transform_10(%arg0: i32) -> (i32, i32) {
    %c0_i32 = arith.constant 0 : i32
    %c0_i32_0 = arith.constant 0 : i32
    %c0_i32_1 = arith.constant 0 : i32
    return %c0_i32, %c0_i32_0 : i32, i32
  }
  func.func @transform_11(%arg0: i32) -> (i32, i32) {
    %c0_i32 = arith.constant 0 : i32
    %c0_i32_0 = arith.constant 0 : i32
    return %arg0, %c0_i32 : i32, i32
  }
  func.func @transform_12(%arg0: i32) -> (i32, i32, i32) {
    %c0_i32 = arith.constant 0 : i32
    %c0_i32_0 = arith.constant 0 : i32
    %c0_i32_1 = arith.constant 0 : i32
    return %arg0, %c0_i32, %c0_i32_0 : i32, i32, i32
  }
}

</mosaic_0001>

<llo_original>
// kernel: tpu_custom_call.1
$region0: #{tpu_custom_call.1}
  #allocation0 [shape = 'u32[]', space=smem, size = 0x4, offset = 0x4, fixed_abs, tag = 'smem constant byte address 0x4 - core index']
  #allocation1 [shape = 'u32[144,128]{1,0:T(1,128)}', space=vmem, size = 0x12000, scoped, tag = 'internal scratch']
  #allocation2 [shape = 'f32[2,8,128]{2,1,0:T(8,128)}', space=vmem, size = 0x2000, scoped, tag = 'scratch operand']
  #allocation3 [shape = 'f32[2,8,128]{2,1,0:T(8,128)}', space=vmem, size = 0x2000, scoped, tag = 'scratch operand']
  #allocation4 [shape = 'f32[2,8,64]{2,1,0:T(8,128)}', space=vmem, size = 0x2000, scoped, tag = 'scratch operand']
  #allocation5 [shape = 'f32[1]{0:T(128)S(6)}', space=smem, size = 0x200, scoped, tag = 'scoped memory for tpu_custom_call.1']
  %s0 = inlined_call_operand.hbm [shape: bf16[2,8,16], index: 0, kind: input, shape index: {}]
  %s1 = inlined_call_operand.hbm [shape: bf16[16,128], index: 1, kind: input, shape index: {}]
  %s2 = inlined_call_operand.hbm [shape: bf16[16,128], index: 2, kind: input, shape index: {}]
  %s3 = inlined_call_operand.hbm [shape: bf16[32,128], index: 3, kind: input, shape index: {}]
  %s4 = inlined_call_operand.hbm [shape: bf16[32,128], index: 4, kind: input, shape index: {}]
  %s5 = inlined_call_operand.vmem [shape: f32[1,128], index: 5, kind: input, shape index: {}]
  %s6 = inlined_call_operand.vmem [shape: f32[1,128], index: 6, kind: input, shape index: {}]
  %s7 = inlined_call_operand.hbm [shape: f32[1,64], index: 7, kind: input, shape index: {}]
  %s8 = inlined_call_operand.<no memory space> [shape: f32[1], index: 8, kind: input, shape index: {}]
  %s9 = inlined_call_operand.vmem [shape: bf16[64,128], index: 9, kind: input, shape index: {}]
  %s10 = inlined_call_operand.vmem [shape: f32[1,128], index: 10, kind: input, shape index: {}]
  %s11 = inlined_call_operand.hbm [shape: f32[2,128], index: 11, kind: output, shape index: {0}]
  %s12 = inlined_call_operand.hbm [shape: f32[1,1,16], index: 12, kind: output, shape index: {1}]
  %13 = xla_tuple %s11, %s12
  %s14 = sld [smem:[#allocation0]]
  $region86: #{tpu_custom_call.1} parent=0
    _
  %s16 = ssub.s32 1, %s14
  %s17 = scalar_select 0, %s16, %s14
  %18 = sst [smem:[#allocation5]] %s8
  $region1: #{tpu_custom_call.1} parent=0
    #allocation6 [shape = 'u8[4096]{0}', space=vmem, size = 0x1000, scoped, tag = 'input window, operand 0, single buffered']
    #allocation7 [shape = 's32[1]{0}', space=sflag, size = 0x4, scoped, tag = 'scoped memory for tpu_custom_call.1']
    #allocation8 [shape = 's32[1]{0}', space=sflag, size = 0x4, scoped, tag = 'scoped memory for tpu_custom_call.1']
    #allocation9 [shape = 'u8[4096]{0}', space=vmem, size = 0x1000, scoped, tag = 'input window, operand 1, single buffered']
    #allocation10 [shape = 's32[1]{0}', space=sflag, size = 0x4, scoped, tag = 'scoped memory for tpu_custom_call.1']
    #allocation11 [shape = 'u8[4096]{0}', space=vmem, size = 0x1000, scoped, tag = 'input window, operand 2, single buffered']
    #allocation12 [shape = 'u8[8192]{0}', space=vmem, size = 0x2000, scoped, tag = 'input window, operand 3, single buffered']
    #allocation13 [shape = 's32[1]{0}', space=sflag, size = 0x4, scoped, tag = 'scoped memory for tpu_custom_call.1']
    #allocation14 [shape = 'u8[8192]{0}', space=vmem, size = 0x2000, scoped, tag = 'input window, operand 4, single buffered']
    #allocation15 [shape = 'u8[512]{0}', space=vmem, size = 0x400, scoped, tag = 'input window, operand 7, single buffered']
    #allocation16 [shape = 's32[1]{0}', space=sflag, size = 0x4, scoped, tag = 'scoped memory for tpu_custom_call.1']
    #allocation17 [shape = 'u8[1024]{0}', space=vmem, size = 0x400, scoped, tag = 'output window, operand 0, single buffered']
    #allocation18 [shape = 'u8[512]{0}', space=vmem, size = 0x400, scoped, tag = 'output window, operand 1, single buffered']
    #allocation19 [shape = 's32[1]{0}', space=sflag, size = 0x4, scoped, tag = 'scoped memory for tpu_custom_call.1']
    %19 = vsyncpa [#allocation7], 0
    %20 = vsyncpa [#allocation10], 0
    %21 = vsyncpa [#allocation13], 0
    %22 = vsyncpa [#allocation16], 0
    %23 = vsyncpa [#allocation8], 0
    %24 = vsyncpa [#allocation19], 0
    // Predicated region
    $region2: #{tpu_custom_call.1} parent=1 // pred_check
      _
    $region3: #{tpu_custom_call.1} parent=1 // pred_check_branch
      %26 = sbr.rel (0) target = $region5
    $region4: #{tpu_custom_call.1} parent=1 // pred_region
      %s28 = ssub.s32 128, 128
      %29 = vsyncadd [#allocation7], %s28
      %s30 = sshll.u32 [#allocation6], 4
      %s31 = int_to_ptr.vmem [resolvable:$true] %s30
      %36 = dma.hbm_to_vmem [thread:$0]  %s0, 128, %s31, [#allocation7], 64, 64, 4
    $region5: #{tpu_custom_call.1} parent=1 // pred_fallthru
      _
    // Predicated region
    $region6: #{tpu_custom_call.1} parent=1 // pred_check
      _
    $region7: #{tpu_custom_call.1} parent=1 // pred_check_branch
      %38 = sbr.rel (0) target = $region9
    $region8: #{tpu_custom_call.1} parent=1 // pred_region
      %s40 = ssub.s32 128, 128
      %41 = vsyncadd [#allocation10], %s40
      %s42 = sshll.u32 [#allocation9], 4
      %s43 = int_to_ptr.vmem [resolvable:$true] %s42
      %48 = dma.hbm_to_vmem [thread:$0]  %s1, 128, %s43, [#allocation10], 64, 64, 4
    $region9: #{tpu_custom_call.1} parent=1 // pred_fallthru
      _
    // Predicated region
    $region10: #{tpu_custom_call.1} parent=1 // pred_check
      _
    $region11: #{tpu_custom_call.1} parent=1 // pred_check_branch
      %50 = sbr.rel (0) target = $region13
    $region12: #{tpu_custom_call.1} parent=1 // pred_region
      %s52 = ssub.s32 128, 128
      %53 = vsyncadd [#allocation10], %s52
      %s54 = sshll.u32 [#allocation11], 4
      %s55 = int_to_ptr.vmem [resolvable:$true] %s54
      %60 = dma.hbm_to_vmem [thread:$0]  %s2, 128, %s55, [#allocation10], 64, 64, 4
    $region13: #{tpu_custom_call.1} parent=1 // pred_fallthru
      _
    // Predicated region
    $region14: #{tpu_custom_call.1} parent=1 // pred_check
      _
    $region15: #{tpu_custom_call.1} parent=1 // pred_check_branch
      %62 = sbr.rel (0) target = $region17
    $region16: #{tpu_custom_call.1} parent=1 // pred_region
      %s64 = ssub.s32 256, 256
      %65 = vsyncadd [#allocation13], %s64
      %s66 = sshll.u32 [#allocation12], 4
      %s67 = int_to_ptr.vmem [resolvable:$true] %s66
      %72 = dma.hbm_to_vmem [thread:$0]  %s3, 256, %s67, [#allocation13], 64, 64, 4
    $region17: #{tpu_custom_call.1} parent=1 // pred_fallthru
      _
    // Predicated region
    $region18: #{tpu_custom_call.1} parent=1 // pred_check
      _
    $region19: #{tpu_custom_call.1} parent=1 // pred_check_branch
      %74 = sbr.rel (0) target = $region21
    $region20: #{tpu_custom_call.1} parent=1 // pred_region
      %s76 = ssub.s32 256, 256
      %77 = vsyncadd [#allocation13], %s76
      %s78 = sshll.u32 [#allocation14], 4
      %s79 = int_to_ptr.vmem [resolvable:$true] %s78
      %84 = dma.hbm_to_vmem [thread:$0]  %s4, 256, %s79, [#allocation13], 64, 64, 4
    $region21: #{tpu_custom_call.1} parent=1 // pred_fallthru
      _
    // Predicated region
    $region22: #{tpu_custom_call.1} parent=1 // pred_check
      _
    $region23: #{tpu_custom_call.1} parent=1 // pred_check_branch
      %86 = sbr.rel (0) target = $region25
    $region24: #{tpu_custom_call.1} parent=1 // pred_region
      _
    $region25: #{tpu_custom_call.1} parent=1 // pred_fallthru
      _
    // Predicated region
    $region26: #{tpu_custom_call.1} parent=1 // pred_check
      _
    $region27: #{tpu_custom_call.1} parent=1 // pred_check_branch
      %88 = sbr.rel (0) target = $region29
    $region28: #{tpu_custom_call.1} parent=1 // pred_region
      _
    $region29: #{tpu_custom_call.1} parent=1 // pred_fallthru
      _
    // Predicated region
    $region30: #{tpu_custom_call.1} parent=1 // pred_check
      _
    $region31: #{tpu_custom_call.1} parent=1 // pred_check_branch
      %90 = sbr.rel (0) target = $region33
    $region32: #{tpu_custom_call.1} parent=1 // pred_region
      %s92 = ssub.s32 16, 16
      %93 = vsyncadd [#allocation16], %s92
      %s95 = sshll.u32 [#allocation15], 4
      %s96 = int_to_ptr.vmem [resolvable:$true] %s95
      %98 = dma.hbm_to_vmem [thread:$0]  %s7, 16, %s96, [#allocation16]
    $region33: #{tpu_custom_call.1} parent=1 // pred_fallthru
      _
    // Predicated region
    $region34: #{tpu_custom_call.1} parent=1 // pred_check
      _
    $region35: #{tpu_custom_call.1} parent=1 // pred_check_branch
      %100 = sbr.rel (0) target = $region37
    $region36: #{tpu_custom_call.1} parent=1 // pred_region
      _
    $region37: #{tpu_custom_call.1} parent=1 // pred_fallthru
      _
    // Predicated region
    $region38: #{tpu_custom_call.1} parent=1 // pred_check
      _
    $region39: #{tpu_custom_call.1} parent=1 // pred_check_branch
      %102 = sbr.rel (0) target = $region41
    $region40: #{tpu_custom_call.1} parent=1 // pred_region
      _
    $region41: #{tpu_custom_call.1} parent=1 // pred_fallthru
      _
    // Predicated region
    $region42: #{tpu_custom_call.1} parent=1 // pred_check
      _
    $region43: #{tpu_custom_call.1} parent=1 // pred_check_branch
      %104 = sbr.rel (0) target = $region45
    $region44: #{tpu_custom_call.1} parent=1 // pred_region
      _
    $region45: #{tpu_custom_call.1} parent=1 // pred_fallthru
      _
    // Predicated region
    $region46: #{tpu_custom_call.1} parent=1 // pred_check
      _
    $region47: #{tpu_custom_call.1} parent=1 // pred_check_branch
      %106 = sbr.rel (0) target = $region49
    $region48: #{tpu_custom_call.1} parent=1 // pred_region
      %107 = dma.done [#allocation7], 128
    $region49: #{tpu_custom_call.1} parent=1 // pred_fallthru
      _
    // Predicated region
    $region50: #{tpu_custom_call.1} parent=1 // pred_check
      _
    $region51: #{tpu_custom_call.1} parent=1 // pred_check_branch
      %109 = sbr.rel (0) target = $region53
    $region52: #{tpu_custom_call.1} parent=1 // pred_region
      %110 = dma.done [#allocation10], 128
    $region53: #{tpu_custom_call.1} parent=1 // pred_fallthru
      _
    // Predicated region
    $region54: #{tpu_custom_call.1} parent=1 // pred_check
      _
    $region55: #{tpu_custom_call.1} parent=1 // pred_check_branch
      %112 = sbr.rel (0) target = $region57
    $region56: #{tpu_custom_call.1} parent=1 // pred_region
      %113 = dma.done [#allocation10], 128
    $region57: #{tpu_custom_call.1} parent=1 // pred_fallthru
      _
    // Predicated region
    $region58: #{tpu_custom_call.1} parent=1 // pred_check
      _
    $region59: #{tpu_custom_call.1} parent=1 // pred_check_branch
      %115 = sbr.rel (0) target = $region61
    $region60: #{tpu_custom_call.1} parent=1 // pred_region
      %116 = dma.done [#allocation13], 256
    $region61: #{tpu_custom_call.1} parent=1 // pred_fallthru
      _
    // Predicated region
    $region62: #{tpu_custom_call.1} parent=1 // pred_check
      _
    $region63: #{tpu_custom_call.1} parent=1 // pred_check_branch
      %118 = sbr.rel (0) target = $region65
    $region64: #{tpu_custom_call.1} parent=1 // pred_region
      %119 = dma.done [#allocation13], 256
    $region65: #{tpu_custom_call.1} parent=1 // pred_fallthru
      _
    // Predicated region
    $region66: #{tpu_custom_call.1} parent=1 // pred_check
      _
    $region67: #{tpu_custom_call.1} parent=1 // pred_check_branch
      %121 = sbr.rel (0) target = $region69
    $region68: #{tpu_custom_call.1} parent=1 // pred_region
      %122 = dma.done [#allocation16], 16
    $region69: #{tpu_custom_call.1} parent=1 // pred_fallthru
      _
    %v124 = vld [vmem:[#allocation6] sm:$0xf]
    %v125 = vld [vmem:[#allocation6 + $0x4] sm:$0xf]
    %v126 = vld [vmem:[#allocation9] sm:$0xf]
    %v127 = vld [vmem:[#allocation9 + $0x4] sm:$0xf]
    %v128 = vld [vmem:[%s5] sm:$0x1]
    %v130 = vlaneseq
    %v131 = vshrl.u32 %v130, 7
    %v132 = vsub.s32 0, %v131
    %v133 = vrot.slane %v128, %v132
    %v137 = vunpack.c.l.b16 %v124
    %v138 = vunpack.c.l.b16 %v125
    %v139 = vpack.c.b16 %v138, %v137
    %v142 = vunpack.c.l.b16 %v126
    %v143 = vunpack.c.l.b16 %v127
    %v144 = vpack.c.b16 %v143, %v142
    %vm146 = vcmask 130048
    %v148 = vsel %vm146, %v139, 0
    %150 = vmatprep.subr.bf16.mxu0 0
    %151 = vmatpush1.bf16.msra.mxu0 %v144
    %152 = vmatprep.subr.bf16.mxu0 0
    %153 = vmatpush1.bf16.msra.mxu0 0
    %154 = vmatprep.subr.bf16.mxu0 0
    %155 = vmatpush1.bf16.msra.mxu0 0
    %156 = vmatprep.subr.bf16.mxu0 0
    %157 = vmatpush1.bf16.msra.mxu0 0
    %158 = vmatprep.subr.bf16.mxu0 0
    %159 = vmatpush1.bf16.msra.mxu0 0
    %160 = vmatprep.subr.bf16.mxu0 0
    %161 = vmatpush1.bf16.msra.mxu0 0
    %162 = vmatprep.subr.bf16.mxu0 0
    %163 = vmatpush1.bf16.msra.mxu0 0
    %164 = vmatprep.subr.bf16.mxu0 0
    %165 = vmatpush1.bf16.msra.mxu0 0
    %166 = vmatprep.subr.bf16.mxu0 0
    %167 = vmatpush1.bf16.msra.mxu0 0
    %168 = vmatprep.subr.bf16.mxu0 0
    %169 = vmatpush1.bf16.msra.mxu0 0
    %170 = vmatprep.subr.bf16.mxu0 0
    %171 = vmatpush1.bf16.msra.mxu0 0
    %172 = vmatprep.subr.bf16.mxu0 0
    %173 = vmatpush1.bf16.msra.mxu0 0
    %174 = vmatprep.subr.bf16.mxu0 0
    %175 = vmatpush1.bf16.msra.mxu0 0
    %176 = vmatprep.subr.bf16.mxu0 0
    %177 = vmatpush1.bf16.msra.mxu0 0
    %178 = vmatprep.subr.bf16.mxu0 0
    %179 = vmatpush1.bf16.msra.mxu0 0
    %180 = vmatprep.subr.bf16.mxu0 0
    %181 = vmatpush1.bf16.msra.mxu0 0
    %182 = vmatprep.mubr.bf16.mxu0 0
    %183 = vmatmul.mubr.bf16.gmra.mrb[0].mxu0 %v148
    %v184 = vpop.f32.mrb[0].mxu0
    %v185 = vadd.f32 %v133, %v184
    %v186 = vpop.f32.mrb[0].mxu0
    %v187 = vpop.f32.mrb[0].mxu0
    %v188 = vadd.f32 %v133, %v187
    %v189 = vpop.f32.mrb[0].mxu0
    %190 = vdwg.mxu0
    %191 = vst [vmem:[#allocation2] sm:$0xff] %v185
    %192 = vst [vmem:[#allocation2 + $0x8] sm:$0xff] %v188
    %v193 = vld [vmem:[#allocation11] sm:$0xf]
    %v194 = vld [vmem:[#allocation11 + $0x4] sm:$0xf]
    %v195 = vld [vmem:[%s6] sm:$0x1]
    %v197 = vlaneseq
    %v198 = vshrl.u32 %v197, 7
    %v199 = vsub.s32 0, %v198
    %v200 = vrot.slane %v195, %v199
    %v204 = vunpack.c.l.b16 %v193
    %v205 = vunpack.c.l.b16 %v194
    %v206 = vpack.c.b16 %v205, %v204
    %208 = vmatprep.subr.bf16.mxu0 0
    %209 = vmatpush1.bf16.msra.mxu0 %v206
    %210 = vmatprep.subr.bf16.mxu0 0
    %211 = vmatpush1.bf16.msra.mxu0 0
    %212 = vmatprep.subr.bf16.mxu0 0
    %213 = vmatpush1.bf16.msra.mxu0 0
    %214 = vmatprep.subr.bf16.mxu0 0
    %215 = vmatpush1.bf16.msra.mxu0 0
    %216 = vmatprep.subr.bf16.mxu0 0
    %217 = vmatpush1.bf16.msra.mxu0 0
    %218 = vmatprep.subr.bf16.mxu0 0
    %219 = vmatpush1.bf16.msra.mxu0 0
    %220 = vmatprep.subr.bf16.mxu0 0
    %221 = vmatpush1.bf16.msra.mxu0 0
    %222 = vmatprep.subr.bf16.mxu0 0
    %223 = vmatpush1.bf16.msra.mxu0 0
    %224 = vmatprep.subr.bf16.mxu0 0
    %225 = vmatpush1.bf16.msra.mxu0 0
    %226 = vmatprep.subr.bf16.mxu0 0
    %227 = vmatpush1.bf16.msra.mxu0 0
    %228 = vmatprep.subr.bf16.mxu0 0
    %229 = vmatpush1.bf16.msra.mxu0 0
    %230 = vmatprep.subr.bf16.mxu0 0
    %231 = vmatpush1.bf16.msra.mxu0 0
    %232 = vmatprep.subr.bf16.mxu0 0
    %233 = vmatpush1.bf16.msra.mxu0 0
    %234 = vmatprep.subr.bf16.mxu0 0
    %235 = vmatpush1.bf16.msra.mxu0 0
    %236 = vmatprep.subr.bf16.mxu0 0
    %237 = vmatpush1.bf16.msra.mxu0 0
    %238 = vmatprep.subr.bf16.mxu0 0
    %239 = vmatpush1.bf16.msra.mxu0 0
    %240 = vmatprep.mubr.bf16.mxu0 0
    %241 = vmatmul.mubr.bf16.gmra.mrb[0].mxu0 %v148
    %v242 = vpop.f32.mrb[0].mxu0
    %v243 = vadd.f32 %v200, %v242
    %v244 = vpop.f32.mrb[0].mxu0
    %v245 = vpop.f32.mrb[0].mxu0
    %v246 = vadd.f32 %v200, %v245
    %v247 = vpop.f32.mrb[0].mxu0
    %248 = vdwg.mxu0
    %249 = vst [vmem:[#allocation3] sm:$0xff] %v243
    %250 = vst [vmem:[#allocation3 + $0x8] sm:$0xff] %v246
    %v251 = vld [vmem:[#allocation12] sm:$0xf]
    %v252 = vld [vmem:[#allocation12 + $0x4] sm:$0xf]
    %v253 = vld [vmem:[#allocation12 + $0x8] sm:$0xf]
    %v254 = vld [vmem:[#allocation12 + $0xc] sm:$0xf]
    %v255 = vld [vmem:[#allocation14] sm:$0xf]
    %v256 = vld [vmem:[#allocation14 + $0x4] sm:$0xf]
    %v257 = vld [vmem:[#allocation14 + $0x8] sm:$0xf]
    %v258 = vld [vmem:[#allocation14 + $0xc] sm:$0xf]
    %v259 = vld [vmem:[#allocation2] sm:$0x1]
    %v260 = vld [vmem:[#allocation2 + $0x8] sm:$0x1]
    %v261 = vld [vmem:[#allocation3 + $0x7] sm:$0x1]
    %v262 = vld [vmem:[#allocation3 + $0xf] sm:$0x1]
    %v263 = vxor.u32 %v259, 2147483648
    %v264 = vxor.u32 %v260, 2147483648
    %v265 = vmul.f32 %v263, 1.442695
    %v266 = vpow.pop %v265
    %v267 = vmul.f32 %v264, 1.442695
    %v268 = vpow.pop %v267
    %v269 = vadd.f32 %v266, 1.0
    %v270 = vadd.f32 %v268, 1.0
    %v271 = vrcp.pop %v269
    %v272 = vmul.f32 1.0, %v271
    %v273 = vrcp.pop %v270
    %v274 = vmul.f32 1.0, %v273
    %v275 = vtanh.pop %v259
    %v276 = vtanh.pop %v260
    %v277 = vmul.f32 %v272, 0.0
    %v278 = vmul.f32 %v274, 0.0
    %281 = vrot.lane.b32.xlu0 %v275, 32
    %v282 = vpop.permute.xlu0 %281
    %283 = vrot.lane.b32.xlu0 %v276, 32
    %v284 = vpop.permute.xlu0 %283
    %v287 = vmul.f32 %v272, %v282
    %v288 = vmul.f32 %v274, %v284
    %291 = vrot.lane.b32.xlu0 %v287, 32
    %v292 = vpop.permute.xlu0 %291
    %293 = vrot.lane.b32.xlu0 %v288, 32
    %v294 = vpop.permute.xlu0 %293
    %v297 = vadd.f32 %v277, %v292
    %v298 = vadd.f32 %v278, %v294
    %v299 = vtanh.pop %v297
    %v300 = vtanh.pop %v298
    %303 = vrot.lane.b32.xlu0 %v299, 32
    %v304 = vpop.permute.xlu0 %303
    %305 = vrot.lane.b32.xlu0 %v300, 32
    %v306 = vpop.permute.xlu0 %305
    %v309 = vmul.f32 %v272, %v304
    %v310 = vmul.f32 %v274, %v306
    %313 = vrot.lane.b32.xlu0 %v309, 64
    %v314 = vpop.permute.xlu0 %313
    %315 = vrot.lane.b32.xlu0 %v310, 64
    %v316 = vpop.permute.xlu0 %315
    %vm319 = vcmask 253952
    %320 = vst.msk [vmem:[#allocation4] sm:$0x1] %vm319, %v314
    %321 = vst.msk [vmem:[#allocation4 + $0x8] sm:$0x1] %vm319, %v316
    %v322 = vxor.u32 %v261, 2147483648
    %v323 = vxor.u32 %v262, 2147483648
    %v324 = vmul.f32 %v322, 1.442695
    %v325 = vpow.pop %v324
    %v326 = vmul.f32 %v323, 1.442695
    %v327 = vpow.pop %v326
    %v328 = vadd.f32 %v325, 1.0
    %v329 = vadd.f32 %v327, 1.0
    %v330 = vrcp.pop %v328
    %v331 = vmul.f32 1.0, %v330
    %v332 = vrcp.pop %v329
    %v333 = vmul.f32 1.0, %v332
    %v334 = vtanh.pop %v261
    %v335 = vtanh.pop %v262
    %v336 = vmul.f32 %v331, 0.0
    %v337 = vmul.f32 %v333, 0.0
    %340 = vrot.lane.b32.xlu0 %v334, 32
    %v341 = vpop.permute.xlu0 %340
    %342 = vrot.lane.b32.xlu0 %v335, 32
    %v343 = vpop.permute.xlu0 %342
    %v346 = vmul.f32 %v331, %v341
    %v347 = vmul.f32 %v333, %v343
    %350 = vrot.lane.b32.xlu0 %v346, 32
    %v351 = vpop.permute.xlu0 %350
    %352 = vrot.lane.b32.xlu0 %v347, 32
    %v353 = vpop.permute.xlu0 %352
    %v356 = vadd.f32 %v336, %v351
    %v357 = vadd.f32 %v337, %v353
    %v358 = vtanh.pop %v356
    %v359 = vtanh.pop %v357
    %362 = vrot.lane.b32.xlu0 %v358, 32
    %v363 = vpop.permute.xlu0 %362
    %364 = vrot.lane.b32.xlu0 %v359, 32
    %v365 = vpop.permute.xlu0 %364
    %v368 = vmul.f32 %v331, %v363
    %v369 = vmul.f32 %v333, %v365
    %372 = vrot.lane.b32.xlu0 %v368, 96
    %v373 = vpop.permute.xlu0 %372
    %374 = vrot.lane.b32.xlu0 %v369, 96
    %v375 = vpop.permute.xlu0 %374
    %vm378 = vcmask 516352
    %379 = vst.msk [vmem:[#allocation4 + $0x7] sm:$0x1] %vm378, %v373
    %380 = vst.msk [vmem:[#allocation4 + $0xf] sm:$0x1] %vm378, %v375
    %v381 = vld [vmem:[#allocation2 + $0x1] sm:$0x1]
    %v382 = vld [vmem:[#allocation2 + $0x9] sm:$0x1]
    %v383 = vpack.c.bf16 %v309, %v309
    %v384 = vpack.c.bf16 %v310, %v310
    %v387 = vunpack.c.l.b16 %v383
    %v388 = vunpack.c.l.b16 %v384
    %v389 = vrot.slane %v388, 7
    %vm390 = vcmask 1041409
    %v391 = vsel %vm390, %v389, %v387
    %v392 = vpack.c.b16 %v391, %v391
    %393 = vrot.lane.b32.xlu0 %v392, 64
    %v394 = vpop.permute.xlu0 %393
    %v399 = vunpack.c.l.b16 %v251
    %v400 = vunpack.c.l.b16 %v252
    %v401 = vunpack.c.l.b16 %v253
    %v402 = vunpack.c.l.b16 %v254
    %v403 = vpack.c.b16 %v400, %v399
    %v404 = vpack.c.b16 %v402, %v401
    %vm407 = vcmask 261120
    %v409 = vsel %vm407, %v394, 0
    %411 = vmatprep.subr.bf16.mxu0 0
    %412 = vmatpush1.bf16.msra.mxu0 %v403
    %413 = vmatprep.subr.bf16.mxu0 0
    %414 = vmatpush1.bf16.msra.mxu0 %v404
    %415 = vmatprep.subr.bf16.mxu0 0
    %416 = vmatpush1.bf16.msra.mxu0 0
    %417 = vmatprep.subr.bf16.mxu0 0
    %418 = vmatpush1.bf16.msra.mxu0 0
    %419 = vmatprep.subr.bf16.mxu0 0
    %420 = vmatpush1.bf16.msra.mxu0 0
    %421 = vmatprep.subr.bf16.mxu0 0
    %422 = vmatpush1.bf16.msra.mxu0 0
    %423 = vmatprep.subr.bf16.mxu0 0
    %424 = vmatpush1.bf16.msra.mxu0 0
    %425 = vmatprep.subr.bf16.mxu0 0
    %426 = vmatpush1.bf16.msra.mxu0 0
    %427 = vmatprep.subr.bf16.mxu0 0
    %428 = vmatpush1.bf16.msra.mxu0 0
    %429 = vmatprep.subr.bf16.mxu0 0
    %430 = vmatpush1.bf16.msra.mxu0 0
    %431 = vmatprep.subr.bf16.mxu0 0
    %432 = vmatpush1.bf16.msra.mxu0 0
    %433 = vmatprep.subr.bf16.mxu0 0
    %434 = vmatpush1.bf16.msra.mxu0 0
    %435 = vmatprep.subr.bf16.mxu0 0
    %436 = vmatpush1.bf16.msra.mxu0 0
    %437 = vmatprep.subr.bf16.mxu0 0
    %438 = vmatpush1.bf16.msra.mxu0 0
    %439 = vmatprep.subr.bf16.mxu0 0
    %440 = vmatpush1.bf16.msra.mxu0 0
    %441 = vmatprep.subr.bf16.mxu0 0
    %442 = vmatpush1.bf16.msra.mxu0 0
    %443 = vmatprep.mubr.bf16.mxu0 0
    %444 = vmatmul.mubr.bf16.gmra.mrb[0].mxu0 %v409
    %v445 = vpop.f32.mrb[0].mxu0
    %v446 = vadd.f32 0.0, %v445
    %v447 = vpop.f32.mrb[0].mxu0
    %v448 = vpop.f32.mrb[0].mxu0
    %v449 = vpop.f32.mrb[0].mxu0
    %450 = vdwg.mxu0
    %v452 = vrot.slane %v446, 1
    %v455 = vadd.f32 %v381, %v446
    %v456 = vadd.f32 %v382, %v452
    %v457 = vld [vmem:[#allocation3 + $0x6] sm:$0x1]
    %v458 = vld [vmem:[#allocation3 + $0xe] sm:$0x1]
    %v459 = vpack.c.bf16 %v368, %v368
    %v460 = vpack.c.bf16 %v369, %v369
    %v463 = vunpack.c.l.b16 %v459
    %v464 = vunpack.c.l.b16 %v460
    %v465 = vrot.slane %v464, 7
    %v466 = vsel %vm390, %v465, %v463
    %v467 = vpack.c.b16 %v466, %v466
    %468 = vrot.lane.b32.xlu0 %v467, 64
    %v469 = vpop.permute.xlu0 %468
    %v474 = vunpack.c.l.b16 %v255
    %v475 = vunpack.c.l.b16 %v256
    %v476 = vunpack.c.l.b16 %v257
    %v477 = vunpack.c.l.b16 %v258
    %v478 = vpack.c.b16 %v475, %v474
    %v479 = vpack.c.b16 %v477, %v476
    %v483 = vsel %vm407, %v469, 0
    %485 = vmatprep.subr.bf16.mxu0 0
    %486 = vmatpush1.bf16.msra.mxu0 %v478
    %487 = vmatprep.subr.bf16.mxu0 0
    %488 = vmatpush1.bf16.msra.mxu0 %v479
    %489 = vmatprep.subr.bf16.mxu0 0
    %490 = vmatpush1.bf16.msra.mxu0 0
    %491 = vmatprep.subr.bf16.mxu0 0
    %492 = vmatpush1.bf16.msra.mxu0 0
    %493 = vmatprep.subr.bf16.mxu0 0
    %494 = vmatpush1.bf16.msra.mxu0 0
    %495 = vmatprep.subr.bf16.mxu0 0
    %496 = vmatpush1.bf16.msra.mxu0 0
    %497 = vmatprep.subr.bf16.mxu0 0
    %498 = vmatpush1.bf16.msra.mxu0 0
    %499 = vmatprep.subr.bf16.mxu0 0
    %500 = vmatpush1.bf16.msra.mxu0 0
    %501 = vmatprep.subr.bf16.mxu0 0
    %502 = vmatpush1.bf16.msra.mxu0 0
    %503 = vmatprep.subr.bf16.mxu0 0
    %504 = vmatpush1.bf16.msra.mxu0 0
    %505 = vmatprep.subr.bf16.mxu0 0
    %506 = vmatpush1.bf16.msra.mxu0 0
    %507 = vmatprep.subr.bf16.mxu0 0
    %508 = vmatpush1.bf16.msra.mxu0 0
    %509 = vmatprep.subr.bf16.mxu0 0
    %510 = vmatpush1.bf16.msra.mxu0 0
    %511 = vmatprep.subr.bf16.mxu0 0
    %512 = vmatpush1.bf16.msra.mxu0 0
    %513 = vmatprep.subr.bf16.mxu0 0
    %514 = vmatpush1.bf16.msra.mxu0 0
    %515 = vmatprep.subr.bf16.mxu0 0
    %516 = vmatpush1.bf16.msra.mxu0 0
    %517 = vmatprep.mubr.bf16.mxu0 0
    %518 = vmatmul.mubr.bf16.gmra.mrb[0].mxu0 %v483
    %v519 = vpop.f32.mrb[0].mxu0
    %v520 = vadd.f32 0.0, %v519
    %v521 = vpop.f32.mrb[0].mxu0
    %v522 = vpop.f32.mrb[0].mxu0
    %v523 = vpop.f32.mrb[0].mxu0
    %524 = vdwg.mxu0
    %v526 = vrot.slane %v520, 1
    %v529 = vadd.f32 %v457, %v520
    %v530 = vadd.f32 %v458, %v526
    %v531 = vxor.u32 %v455, 2147483648
    %v532 = vxor.u32 %v456, 2147483648
    %v533 = vmul.f32 %v531, 1.442695
    %v534 = vpow.pop %v533
    %v535 = vmul.f32 %v532, 1.442695
    %v536 = vpow.pop %v535
    %v537 = vadd.f32 %v534, 1.0
    %v538 = vadd.f32 %v536, 1.0
    %v539 = vrcp.pop %v537
    %v540 = vmul.f32 1.0, %v539
    %v541 = vrcp.pop %v538
    %v542 = vmul.f32 1.0, %v541
    %v543 = vtanh.pop %v455
    %v544 = vtanh.pop %v456
    %v545 = vmul.f32 %v540, %v297
    %v546 = vmul.f32 %v542, %v298
    %549 = vrot.lane.b32.xlu0 %v543, 32
    %v550 = vpop.permute.xlu0 %549
    %551 = vrot.lane.b32.xlu0 %v544, 32
    %v552 = vpop.permute.xlu0 %551
    %v555 = vmul.f32 %v540, %v550
    %v556 = vmul.f32 %v542, %v552
    %559 = vrot.lane.b32.xlu0 %v555, 32
    %v560 = vpop.permute.xlu0 %559
    %561 = vrot.lane.b32.xlu0 %v556, 32
    %v562 = vpop.permute.xlu0 %561
    %v565 = vadd.f32 %v545, %v560
    %v566 = vadd.f32 %v546, %v562
    %v567 = vtanh.pop %v565
    %v568 = vtanh.pop %v566
    %571 = vrot.lane.b32.xlu0 %v567, 32
    %v572 = vpop.permute.xlu0 %571
    %573 = vrot.lane.b32.xlu0 %v568, 32
    %v574 = vpop.permute.xlu0 %573
    %v577 = vmul.f32 %v540, %v572
    %v578 = vmul.f32 %v542, %v574
    %581 = vrot.lane.b32.xlu0 %v577, 64
    %v582 = vpop.permute.xlu0 %581
    %583 = vrot.lane.b32.xlu0 %v578, 64
    %v584 = vpop.permute.xlu0 %583
    %587 = vst.msk [vmem:[#allocation4 + $0x1] sm:$0x1] %vm319, %v582
    %588 = vst.msk [vmem:[#allocation4 + $0x9] sm:$0x1] %vm319, %v584
    %v589 = vxor.u32 %v529, 2147483648
    %v590 = vxor.u32 %v530, 2147483648
    %v591 = vmul.f32 %v589, 1.442695
    %v592 = vpow.pop %v591
    %v593 = vmul.f32 %v590, 1.442695
    %v594 = vpow.pop %v593
    %v595 = vadd.f32 %v592, 1.0
    %v596 = vadd.f32 %v594, 1.0
    %v597 = vrcp.pop %v595
    %v598 = vmul.f32 1.0, %v597
    %v599 = vrcp.pop %v596
    %v600 = vmul.f32 1.0, %v599
    %v601 = vtanh.pop %v529
    %v602 = vtanh.pop %v530
    %v603 = vmul.f32 %v598, %v356
    %v604 = vmul.f32 %v600, %v357
    %607 = vrot.lane.b32.xlu0 %v601, 32
    %v608 = vpop.permute.xlu0 %607
    %609 = vrot.lane.b32.xlu0 %v602, 32
    %v610 = vpop.permute.xlu0 %609
    %v613 = vmul.f32 %v598, %v608
    %v614 = vmul.f32 %v600, %v610
    %617 = vrot.lane.b32.xlu0 %v613, 32
    %v618 = vpop.permute.xlu0 %617
    %619 = vrot.lane.b32.xlu0 %v614, 32
    %v620 = vpop.permute.xlu0 %619
    %v623 = vadd.f32 %v603, %v618
    %v624 = vadd.f32 %v604, %v620
    %v625 = vtanh.pop %v623
    %v626 = vtanh.pop %v624
    %629 = vrot.lane.b32.xlu0 %v625, 32
    %v630 = vpop.permute.xlu0 %629
    %631 = vrot.lane.b32.xlu0 %v626, 32
    %v632 = vpop.permute.xlu0 %631
    %v635 = vmul.f32 %v598, %v630
    %v636 = vmul.f32 %v600, %v632
    %639 = vrot.lane.b32.xlu0 %v635, 96
    %v640 = vpop.permute.xlu0 %639
    %641 = vrot.lane.b32.xlu0 %v636, 96
    %v642 = vpop.permute.xlu0 %641
    %645 = vst.msk [vmem:[#allocation4 + $0x6] sm:$0x1] %vm378, %v640
    %646 = vst.msk [vmem:[#allocation4 + $0xe] sm:$0x1] %vm378, %v642
    %v647 = vld [vmem:[#allocation2 + $0x2] sm:$0x1]
    %v648 = vld [vmem:[#allocation2 + $0xa] sm:$0x1]
    %v649 = vpack.c.bf16 %v577, %v577
    %v650 = vpack.c.bf16 %v578, %v578
    %v653 = vunpack.c.l.b16 %v649
    %v654 = vunpack.c.l.b16 %v650
    %v655 = vrot.slane %v654, 7
    %v656 = vsel %vm390, %v655, %v653
    %v657 = vpack.c.b16 %v656, %v656
    %658 = vrot.lane.b32.xlu0 %v657, 64
    %v659 = vpop.permute.xlu0 %658
    %v661 = vsel %vm407, %v659, 0
    %663 = vmatprep.subr.bf16.mxu0 0
    %664 = vmatpush1.bf16.msra.mxu0 %v403
    %665 = vmatprep.subr.bf16.mxu0 0
    %666 = vmatpush1.bf16.msra.mxu0 %v404
    %667 = vmatprep.subr.bf16.mxu0 0
    %668 = vmatpush1.bf16.msra.mxu0 0
    %669 = vmatprep.subr.bf16.mxu0 0
    %670 = vmatpush1.bf16.msra.mxu0 0
    %671 = vmatprep.subr.bf16.mxu0 0
    %672 = vmatpush1.bf16.msra.mxu0 0
    %673 = vmatprep.subr.bf16.mxu0 0
    %674 = vmatpush1.bf16.msra.mxu0 0
    %675 = vmatprep.subr.bf16.mxu0 0
    %676 = vmatpush1.bf16.msra.mxu0 0
    %677 = vmatprep.subr.bf16.mxu0 0
    %678 = vmatpush1.bf16.msra.mxu0 0
    %679 = vmatprep.subr.bf16.mxu0 0
    %680 = vmatpush1.bf16.msra.mxu0 0
    %681 = vmatprep.subr.bf16.mxu0 0
    %682 = vmatpush1.bf16.msra.mxu0 0
    %683 = vmatprep.subr.bf16.mxu0 0
    %684 = vmatpush1.bf16.msra.mxu0 0
    %685 = vmatprep.subr.bf16.mxu0 0
    %686 = vmatpush1.bf16.msra.mxu0 0
    %687 = vmatprep.subr.bf16.mxu0 0
    %688 = vmatpush1.bf16.msra.mxu0 0
    %689 = vmatprep.subr.bf16.mxu0 0
    %690 = vmatpush1.bf16.msra.mxu0 0
    %691 = vmatprep.subr.bf16.mxu0 0
    %692 = vmatpush1.bf16.msra.mxu0 0
    %693 = vmatprep.subr.bf16.mxu0 0
    %694 = vmatpush1.bf16.msra.mxu0 0
    %695 = vmatprep.mubr.bf16.mxu0 0
    %696 = vmatmul.mubr.bf16.gmra.mrb[0].mxu0 %v661
    %v697 = vpop.f32.mrb[0].mxu0
    %v698 = vadd.f32 0.0, %v697
    %v699 = vpop.f32.mrb[0].mxu0
    %v700 = vpop.f32.mrb[0].mxu0
    %v701 = vpop.f32.mrb[0].mxu0
    %702 = vdwg.mxu0
    %v704 = vrot.slane %v698, 1
    %v707 = vadd.f32 %v647, %v698
    %v708 = vadd.f32 %v648, %v704
    %v709 = vld [vmem:[#allocation3 + $0x5] sm:$0x1]
    %v710 = vld [vmem:[#allocation3 + $0xd] sm:$0x1]
    %v711 = vpack.c.bf16 %v635, %v635
    %v712 = vpack.c.bf16 %v636, %v636
    %v715 = vunpack.c.l.b16 %v711
    %v716 = vunpack.c.l.b16 %v712
    %v717 = vrot.slane %v716, 7
    %v718 = vsel %vm390, %v717, %v715
    %v719 = vpack.c.b16 %v718, %v718
    %720 = vrot.lane.b32.xlu0 %v719, 64
    %v721 = vpop.permute.xlu0 %720
    %v723 = vsel %vm407, %v721, 0
    %725 = vmatprep.subr.bf16.mxu0 0
    %726 = vmatpush1.bf16.msra.mxu0 %v478
    %727 = vmatprep.subr.bf16.mxu0 0
    %728 = vmatpush1.bf16.msra.mxu0 %v479
    %729 = vmatprep.subr.bf16.mxu0 0
    %730 = vmatpush1.bf16.msra.mxu0 0
    %731 = vmatprep.subr.bf16.mxu0 0
    %732 = vmatpush1.bf16.msra.mxu0 0
    %733 = vmatprep.subr.bf16.mxu0 0
    %734 = vmatpush1.bf16.msra.mxu0 0
    %735 = vmatprep.subr.bf16.mxu0 0
    %736 = vmatpush1.bf16.msra.mxu0 0
    %737 = vmatprep.subr.bf16.mxu0 0
    %738 = vmatpush1.bf16.msra.mxu0 0
    %739 = vmatprep.subr.bf16.mxu0 0
    %740 = vmatpush1.bf16.msra.mxu0 0
    %741 = vmatprep.subr.bf16.mxu0 0
    %742 = vmatpush1.bf16.msra.mxu0 0
    %743 = vmatprep.subr.bf16.mxu0 0
    %744 = vmatpush1.bf16.msra.mxu0 0
    %745 = vmatprep.subr.bf16.mxu0 0
    %746 = vmatpush1.bf16.msra.mxu0 0
    %747 = vmatprep.subr.bf16.mxu0 0
    %748 = vmatpush1.bf16.msra.mxu0 0
    %749 = vmatprep.subr.bf16.mxu0 0
    %750 = vmatpush1.bf16.msra.mxu0 0
    %751 = vmatprep.subr.bf16.mxu0 0
    %752 = vmatpush1.bf16.msra.mxu0 0
    %753 = vmatprep.subr.bf16.mxu0 0
    %754 = vmatpush1.bf16.msra.mxu0 0
    %755 = vmatprep.subr.bf16.mxu0 0
    %756 = vmatpush1.bf16.msra.mxu0 0
    %757 = vmatprep.mubr.bf16.mxu0 0
    %758 = vmatmul.mubr.bf16.gmra.mrb[0].mxu0 %v723
    %v759 = vpop.f32.mrb[0].mxu0
    %v760 = vadd.f32 0.0, %v759
    %v761 = vpop.f32.mrb[0].mxu0
    %v762 = vpop.f32.mrb[0].mxu0
    %v763 = vpop.f32.mrb[0].mxu0
    %764 = vdwg.mxu0
    %v766 = vrot.slane %v760, 1
    %v769 = vadd.f32 %v709, %v760
    %v770 = vadd.f32 %v710, %v766
    %v771 = vxor.u32 %v707, 2147483648
    %v772 = vxor.u32 %v708, 2147483648
    %v773 = vmul.f32 %v771, 1.442695
    %v774 = vpow.pop %v773
    %v775 = vmul.f32 %v772, 1.442695
    %v776 = vpow.pop %v775
    %v777 = vadd.f32 %v774, 1.0
    %v778 = vadd.f32 %v776, 1.0
    %v779 = vrcp.pop %v777
    %v780 = vmul.f32 1.0, %v779
    %v781 = vrcp.pop %v778
    %v782 = vmul.f32 1.0, %v781
    %v783 = vtanh.pop %v707
    %v784 = vtanh.pop %v708
    %v785 = vmul.f32 %v780, %v565
    %v786 = vmul.f32 %v782, %v566
    %789 = vrot.lane.b32.xlu0 %v783, 32
    %v790 = vpop.permute.xlu0 %789
    %791 = vrot.lane.b32.xlu0 %v784, 32
    %v792 = vpop.permute.xlu0 %791
    %v795 = vmul.f32 %v780, %v790
    %v796 = vmul.f32 %v782, %v792
    %799 = vrot.lane.b32.xlu0 %v795, 32
    %v800 = vpop.permute.xlu0 %799
    %801 = vrot.lane.b32.xlu0 %v796, 32
    %v802 = vpop.permute.xlu0 %801
    %v805 = vadd.f32 %v785, %v800
    %v806 = vadd.f32 %v786, %v802
    %v807 = vtanh.pop %v805
    %v808 = vtanh.pop %v806
    %811 = vrot.lane.b32.xlu0 %v807, 32
    %v812 = vpop.permute.xlu0 %811
    %813 = vrot.lane.b32.xlu0 %v808, 32
    %v814 = vpop.permute.xlu0 %813
    %v817 = vmul.f32 %v780, %v812
    %v818 = vmul.f32 %v782, %v814
    %821 = vrot.lane.b32.xlu0 %v817, 64
    %v822 = vpop.permute.xlu0 %821
    %823 = vrot.lane.b32.xlu0 %v818, 64
    %v824 = vpop.permute.xlu0 %823
    %827 = vst.msk [vmem:[#allocation4 + $0x2] sm:$0x1] %vm319, %v822
    %828 = vst.msk [vmem:[#allocation4 + $0xa] sm:$0x1] %vm319, %v824
    %v829 = vxor.u32 %v769, 2147483648
    %v830 = vxor.u32 %v770, 2147483648
    %v831 = vmul.f32 %v829, 1.442695
    %v832 = vpow.pop %v831
    %v833 = vmul.f32 %v830, 1.442695
    %v834 = vpow.pop %v833
    %v835 = vadd.f32 %v832, 1.0
    %v836 = vadd.f32 %v834, 1.0
    %v837 = vrcp.pop %v835
    %v838 = vmul.f32 1.0, %v837
    %v839 = vrcp.pop %v836
    %v840 = vmul.f32 1.0, %v839
    %v841 = vtanh.pop %v769
    %v842 = vtanh.pop %v770
    %v843 = vmul.f32 %v838, %v623
    %v844 = vmul.f32 %v840, %v624
    %847 = vrot.lane.b32.xlu0 %v841, 32
    %v848 = vpop.permute.xlu0 %847
    %849 = vrot.lane.b32.xlu0 %v842, 32
    %v850 = vpop.permute.xlu0 %849
    %v853 = vmul.f32 %v838, %v848
    %v854 = vmul.f32 %v840, %v850
    %857 = vrot.lane.b32.xlu0 %v853, 32
    %v858 = vpop.permute.xlu0 %857
    %859 = vrot.lane.b32.xlu0 %v854, 32
    %v860 = vpop.permute.xlu0 %859
    %v863 = vadd.f32 %v843, %v858
    %v864 = vadd.f32 %v844, %v860
    %v865 = vtanh.pop %v863
    %v866 = vtanh.pop %v864
    %869 = vrot.lane.b32.xlu0 %v865, 32
    %v870 = vpop.permute.xlu0 %869
    %871 = vrot.lane.b32.xlu0 %v866, 32
    %v872 = vpop.permute.xlu0 %871
    %v875 = vmul.f32 %v838, %v870
    %v876 = vmul.f32 %v840, %v872
    %879 = vrot.lane.b32.xlu0 %v875, 96
    %v880 = vpop.permute.xlu0 %879
    %881 = vrot.lane.b32.xlu0 %v876, 96
    %v882 = vpop.permute.xlu0 %881
    %885 = vst.msk [vmem:[#allocation4 + $0x5] sm:$0x1] %vm378, %v880
    %886 = vst.msk [vmem:[#allocation4 + $0xd] sm:$0x1] %vm378, %v882
    %v887 = vld [vmem:[#allocation2 + $0x3] sm:$0x1]
    %v888 = vld [vmem:[#allocation2 + $0xb] sm:$0x1]
    %v889 = vpack.c.bf16 %v817, %v817
    %v890 = vpack.c.bf16 %v818, %v818
    %v893 = vunpack.c.l.b16 %v889
    %v894 = vunpack.c.l.b16 %v890
    %v895 = vrot.slane %v894, 7
    %v896 = vsel %vm390, %v895, %v893
    %v897 = vpack.c.b16 %v896, %v896
    %898 = vrot.lane.b32.xlu0 %v897, 64
    %v899 = vpop.permute.xlu0 %898
    %v901 = vsel %vm407, %v899, 0
    %903 = vmatprep.subr.bf16.mxu0 0
    %904 = vmatpush1.bf16.msra.mxu0 %v403
    %905 = vmatprep.subr.bf16.mxu0 0
    %906 = vmatpush1.bf16.msra.mxu0 %v404
    %907 = vmatprep.subr.bf16.mxu0 0
    %908 = vmatpush1.bf16.msra.mxu0 0
    %909 = vmatprep.subr.bf16.mxu0 0
    %910 = vmatpush1.bf16.msra.mxu0 0
    %911 = vmatprep.subr.bf16.mxu0 0
    %912 = vmatpush1.bf16.msra.mxu0 0
    %913 = vmatprep.subr.bf16.mxu0 0
    %914 = vmatpush1.bf16.msra.mxu0 0
    %915 = vmatprep.subr.bf16.mxu0 0
    %916 = vmatpush1.bf16.msra.mxu0 0
    %917 = vmatprep.subr.bf16.mxu0 0
    %918 = vmatpush1.bf16.msra.mxu0 0
    %919 = vmatprep.subr.bf16.mxu0 0
    %920 = vmatpush1.bf16.msra.mxu0 0
    %921 = vmatprep.subr.bf16.mxu0 0
    %922 = vmatpush1.bf16.msra.mxu0 0
    %923 = vmatprep.subr.bf16.mxu0 0
    %924 = vmatpush1.bf16.msra.mxu0 0
    %925 = vmatprep.subr.bf16.mxu0 0
    %926 = vmatpush1.bf16.msra.mxu0 0
    %927 = vmatprep.subr.bf16.mxu0 0
    %928 = vmatpush1.bf16.msra.mxu0 0
    %929 = vmatprep.subr.bf16.mxu0 0
    %930 = vmatpush1.bf16.msra.mxu0 0
    %931 = vmatprep.subr.bf16.mxu0 0
    %932 = vmatpush1.bf16.msra.mxu0 0
    %933 = vmatprep.subr.bf16.mxu0 0
    %934 = vmatpush1.bf16.msra.mxu0 0
    %935 = vmatprep.mubr.bf16.mxu0 0
    %936 = vmatmul.mubr.bf16.gmra.mrb[0].mxu0 %v901
    %v937 = vpop.f32.mrb[0].mxu0
    %v938 = vadd.f32 0.0, %v937
    %v939 = vpop.f32.mrb[0].mxu0
    %v940 = vpop.f32.mrb[0].mxu0
    %v941 = vpop.f32.mrb[0].mxu0
    %942 = vdwg.mxu0
    %v944 = vrot.slane %v938, 1
    %v947 = vadd.f32 %v887, %v938
    %v948 = vadd.f32 %v888, %v944
    %v949 = vld [vmem:[#allocation3 + $0x4] sm:$0x1]
    %v950 = vld [vmem:[#allocation3 + $0xc] sm:$0x1]
    %v951 = vpack.c.bf16 %v875, %v875
    %v952 = vpack.c.bf16 %v876, %v876
    %v955 = vunpack.c.l.b16 %v951
    %v956 = vunpack.c.l.b16 %v952
    %v957 = vrot.slane %v956, 7
    %v958 = vsel %vm390, %v957, %v955
    %v959 = vpack.c.b16 %v958, %v958
    %960 = vrot.lane.b32.xlu0 %v959, 64
    %v961 = vpop.permute.xlu0 %960
    %v963 = vsel %vm407, %v961, 0
    %965 = vmatprep.subr.bf16.mxu0 0
    %966 = vmatpush1.bf16.msra.mxu0 %v478
    %967 = vmatprep.subr.bf16.mxu0 0
    %968 = vmatpush1.bf16.msra.mxu0 %v479
    %969 = vmatprep.subr.bf16.mxu0 0
    %970 = vmatpush1.bf16.msra.mxu0 0
    %971 = vmatprep.subr.bf16.mxu0 0
    %972 = vmatpush1.bf16.msra.mxu0 0
    %973 = vmatprep.subr.bf16.mxu0 0
    %974 = vmatpush1.bf16.msra.mxu0 0
    %975 = vmatprep.subr.bf16.mxu0 0
    %976 = vmatpush1.bf16.msra.mxu0 0
    %977 = vmatprep.subr.bf16.mxu0 0
    %978 = vmatpush1.bf16.msra.mxu0 0
    %979 = vmatprep.subr.bf16.mxu0 0
    %980 = vmatpush1.bf16.msra.mxu0 0
    %981 = vmatprep.subr.bf16.mxu0 0
    %982 = vmatpush1.bf16.msra.mxu0 0
    %983 = vmatprep.subr.bf16.mxu0 0
    %984 = vmatpush1.bf16.msra.mxu0 0
    %985 = vmatprep.subr.bf16.mxu0 0
    %986 = vmatpush1.bf16.msra.mxu0 0
    %987 = vmatprep.subr.bf16.mxu0 0
    %988 = vmatpush1.bf16.msra.mxu0 0
    %989 = vmatprep.subr.bf16.mxu0 0
    %990 = vmatpush1.bf16.msra.mxu0 0
    %991 = vmatprep.subr.bf16.mxu0 0
    %992 = vmatpush1.bf16.msra.mxu0 0
    %993 = vmatprep.subr.bf16.mxu0 0
    %994 = vmatpush1.bf16.msra.mxu0 0
    %995 = vmatprep.subr.bf16.mxu0 0
    %996 = vmatpush1.bf16.msra.mxu0 0
    %997 = vmatprep.mubr.bf16.mxu0 0
    %998 = vmatmul.mubr.bf16.gmra.mrb[0].mxu0 %v963
    %v999 = vpop.f32.mrb[0].mxu0
    %v1000 = vadd.f32 0.0, %v999
    %v1001 = vpop.f32.mrb[0].mxu0
    %v1002 = vpop.f32.mrb[0].mxu0
    %v1003 = vpop.f32.mrb[0].mxu0
    %1004 = vdwg.mxu0
    %v1006 = vrot.slane %v1000, 1
    %v1009 = vadd.f32 %v949, %v1000
    %v1010 = vadd.f32 %v950, %v1006
    %v1011 = vxor.u32 %v947, 2147483648
    %v1012 = vxor.u32 %v948, 2147483648
    %v1013 = vmul.f32 %v1011, 1.442695
    %v1014 = vpow.pop %v1013
    %v1015 = vmul.f32 %v1012, 1.442695
    %v1016 = vpow.pop %v1015
    %v1017 = vadd.f32 %v1014, 1.0
    %v1018 = vadd.f32 %v1016, 1.0
    %v1019 = vrcp.pop %v1017
    %v1020 = vmul.f32 1.0, %v1019
    %v1021 = vrcp.pop %v1018
    %v1022 = vmul.f32 1.0, %v1021
    %v1023 = vtanh.pop %v947
    %v1024 = vtanh.pop %v948
    %v1025 = vmul.f32 %v1020, %v805
    %v1026 = vmul.f32 %v1022, %v806
    %1029 = vrot.lane.b32.xlu0 %v1023, 32
    %v1030 = vpop.permute.xlu0 %1029
    %1031 = vrot.lane.b32.xlu0 %v1024, 32
    %v1032 = vpop.permute.xlu0 %1031
    %v1035 = vmul.f32 %v1020, %v1030
    %v1036 = vmul.f32 %v1022, %v1032
    %1039 = vrot.lane.b32.xlu0 %v1035, 32
    %v1040 = vpop.permute.xlu0 %1039
    %1041 = vrot.lane.b32.xlu0 %v1036, 32
    %v1042 = vpop.permute.xlu0 %1041
    %v1045 = vadd.f32 %v1025, %v1040
    %v1046 = vadd.f32 %v1026, %v1042
    %v1047 = vtanh.pop %v1045
    %v1048 = vtanh.pop %v1046
    %1051 = vrot.lane.b32.xlu0 %v1047, 32
    %v1052 = vpop.permute.xlu0 %1051
    %1053 = vrot.lane.b32.xlu0 %v1048, 32
    %v1054 = vpop.permute.xlu0 %1053
    %v1057 = vmul.f32 %v1020, %v1052
    %v1058 = vmul.f32 %v1022, %v1054
    %1061 = vrot.lane.b32.xlu0 %v1057, 64
    %v1062 = vpop.permute.xlu0 %1061
    %1063 = vrot.lane.b32.xlu0 %v1058, 64
    %v1064 = vpop.permute.xlu0 %1063
    %1067 = vst.msk [vmem:[#allocation4 + $0x3] sm:$0x1] %vm319, %v1062
    %1068 = vst.msk [vmem:[#allocation4 + $0xb] sm:$0x1] %vm319, %v1064
    %v1069 = vxor.u32 %v1009, 2147483648
    %v1070 = vxor.u32 %v1010, 2147483648
    %v1071 = vmul.f32 %v1069, 1.442695
    %v1072 = vpow.pop %v1071
    %v1073 = vmul.f32 %v1070, 1.442695
    %v1074 = vpow.pop %v1073
    %v1075 = vadd.f32 %v1072, 1.0
    %v1076 = vadd.f32 %v1074, 1.0
    %v1077 = vrcp.pop %v1075
    %v1078 = vmul.f32 1.0, %v1077
    %v1079 = vrcp.pop %v1076
    %v1080 = vmul.f32 1.0, %v1079
    %v1081 = vtanh.pop %v1009
    %v1082 = vtanh.pop %v1010
    %v1083 = vmul.f32 %v1078, %v863
    %v1084 = vmul.f32 %v1080, %v864
    %1087 = vrot.lane.b32.xlu0 %v1081, 32
    %v1088 = vpop.permute.xlu0 %1087
    %1089 = vrot.lane.b32.xlu0 %v1082, 32
    %v1090 = vpop.permute.xlu0 %1089
    %v1093 = vmul.f32 %v1078, %v1088
    %v1094 = vmul.f32 %v1080, %v1090
    %1097 = vrot.lane.b32.xlu0 %v1093, 32
    %v1098 = vpop.permute.xlu0 %1097
    %1099 = vrot.lane.b32.xlu0 %v1094, 32
    %v1100 = vpop.permute.xlu0 %1099
    %v1103 = vadd.f32 %v1083, %v1098
    %v1104 = vadd.f32 %v1084, %v1100
    %v1105 = vtanh.pop %v1103
    %v1106 = vtanh.pop %v1104
    %1109 = vrot.lane.b32.xlu0 %v1105, 32
    %v1110 = vpop.permute.xlu0 %1109
    %1111 = vrot.lane.b32.xlu0 %v1106, 32
    %v1112 = vpop.permute.xlu0 %1111
    %v1115 = vmul.f32 %v1078, %v1110
    %v1116 = vmul.f32 %v1080, %v1112
    %1119 = vrot.lane.b32.xlu0 %v1115, 96
    %v1120 = vpop.permute.xlu0 %1119
    %1121 = vrot.lane.b32.xlu0 %v1116, 96
    %v1122 = vpop.permute.xlu0 %1121
    %1125 = vst.msk [vmem:[#allocation4 + $0x4] sm:$0x1] %vm378, %v1120
    %1126 = vst.msk [vmem:[#allocation4 + $0xc] sm:$0x1] %vm378, %v1122
    %v1127 = vld [vmem:[#allocation2 + $0x4] sm:$0x1]
    %v1128 = vld [vmem:[#allocation2 + $0xc] sm:$0x1]
    %v1129 = vpack.c.bf16 %v1057, %v1057
    %v1130 = vpack.c.bf16 %v1058, %v1058
    %v1133 = vunpack.c.l.b16 %v1129
    %v1134 = vunpack.c.l.b16 %v1130
    %v1135 = vrot.slane %v1134, 7
    %v1136 = vsel %vm390, %v1135, %v1133
    %v1137 = vpack.c.b16 %v1136, %v1136
    %1138 = vrot.lane.b32.xlu0 %v1137, 64
    %v1139 = vpop.permute.xlu0 %1138
    %v1141 = vsel %vm407, %v1139, 0
    %1143 = vmatprep.subr.bf16.mxu0 0
    %1144 = vmatpush1.bf16.msra.mxu0 %v403
    %1145 = vmatprep.subr.bf16.mxu0 0
    %1146 = vmatpush1.bf16.msra.mxu0 %v404
    %1147 = vmatprep.subr.bf16.mxu0 0
    %1148 = vmatpush1.bf16.msra.mxu0 0
    %1149 = vmatprep.subr.bf16.mxu0 0
    %1150 = vmatpush1.bf16.msra.mxu0 0
    %1151 = vmatprep.subr.bf16.mxu0 0
    %1152 = vmatpush1.bf16.msra.mxu0 0
    %1153 = vmatprep.subr.bf16.mxu0 0
    %1154 = vmatpush1.bf16.msra.mxu0 0
    %1155 = vmatprep.subr.bf16.mxu0 0
    %1156 = vmatpush1.bf16.msra.mxu0 0
    %1157 = vmatprep.subr.bf16.mxu0 0
    %1158 = vmatpush1.bf16.msra.mxu0 0
    %1159 = vmatprep.subr.bf16.mxu0 0
    %1160 = vmatpush1.bf16.msra.mxu0 0
    %1161 = vmatprep.subr.bf16.mxu0 0
    %1162 = vmatpush1.bf16.msra.mxu0 0
    %1163 = vmatprep.subr.bf16.mxu0 0
    %1164 = vmatpush1.bf16.msra.mxu0 0
    %1165 = vmatprep.subr.bf16.mxu0 0
    %1166 = vmatpush1.bf16.msra.mxu0 0
    %1167 = vmatprep.subr.bf16.mxu0 0
    %1168 = vmatpush1.bf16.msra.mxu0 0
    %1169 = vmatprep.subr.bf16.mxu0 0
    %1170 = vmatpush1.bf16.msra.mxu0 0
    %1171 = vmatprep.subr.bf16.mxu0 0
    %1172 = vmatpush1.bf16.msra.mxu0 0
    %1173 = vmatprep.subr.bf16.mxu0 0
    %1174 = vmatpush1.bf16.msra.mxu0 0
    %1175 = vmatprep.mubr.bf16.mxu0 0
    %1176 = vmatmul.mubr.bf16.gmra.mrb[0].mxu0 %v1141
    %v1177 = vpop.f32.mrb[0].mxu0
    %v1178 = vadd.f32 0.0, %v1177
    %v1179 = vpop.f32.mrb[0].mxu0
    %v1180 = vpop.f32.mrb[0].mxu0
    %v1181 = vpop.f32.mrb[0].mxu0
    %1182 = vdwg.mxu0
    %v1184 = vrot.slane %v1178, 1
    %v1187 = vadd.f32 %v1127, %v1178
    %v1188 = vadd.f32 %v1128, %v1184
    %v1189 = vld [vmem:[#allocation3 + $0x3] sm:$0x1]
    %v1190 = vld [vmem:[#allocation3 + $0xb] sm:$0x1]
    %v1191 = vpack.c.bf16 %v1115, %v1115
    %v1192 = vpack.c.bf16 %v1116, %v1116
    %v1195 = vunpack.c.l.b16 %v1191
    %v1196 = vunpack.c.l.b16 %v1192
    %v1197 = vrot.slane %v1196, 7
    %v1198 = vsel %vm390, %v1197, %v1195
    %v1199 = vpack.c.b16 %v1198, %v1198
    %1200 = vrot.lane.b32.xlu0 %v1199, 64
    %v1201 = vpop.permute.xlu0 %1200
    %v1203 = vsel %vm407, %v1201, 0
    %1205 = vmatprep.subr.bf16.mxu0 0
    %1206 = vmatpush1.bf16.msra.mxu0 %v478
    %1207 = vmatprep.subr.bf16.mxu0 0
    %1208 = vmatpush1.bf16.msra.mxu0 %v479
    %1209 = vmatprep.subr.bf16.mxu0 0
    %1210 = vmatpush1.bf16.msra.mxu0 0
    %1211 = vmatprep.subr.bf16.mxu0 0
    %1212 = vmatpush1.bf16.msra.mxu0 0
    %1213 = vmatprep.subr.bf16.mxu0 0
    %1214 = vmatpush1.bf16.msra.mxu0 0
    %1215 = vmatprep.subr.bf16.mxu0 0
    %1216 = vmatpush1.bf16.msra.mxu0 0
    %1217 = vmatprep.subr.bf16.mxu0 0
    %1218 = vmatpush1.bf16.msra.mxu0 0
    %1219 = vmatprep.subr.bf16.mxu0 0
    %1220 = vmatpush1.bf16.msra.mxu0 0
    %1221 = vmatprep.subr.bf16.mxu0 0
    %1222 = vmatpush1.bf16.msra.mxu0 0
    %1223 = vmatprep.subr.bf16.mxu0 0
    %1224 = vmatpush1.bf16.msra.mxu0 0
    %1225 = vmatprep.subr.bf16.mxu0 0
    %1226 = vmatpush1.bf16.msra.mxu0 0
    %1227 = vmatprep.subr.bf16.mxu0 0
    %1228 = vmatpush1.bf16.msra.mxu0 0
    %1229 = vmatprep.subr.bf16.mxu0 0
    %1230 = vmatpush1.bf16.msra.mxu0 0
    %1231 = vmatprep.subr.bf16.mxu0 0
    %1232 = vmatpush1.bf16.msra.mxu0 0
    %1233 = vmatprep.subr.bf16.mxu0 0
    %1234 = vmatpush1.bf16.msra.mxu0 0
    %1235 = vmatprep.subr.bf16.mxu0 0
    %1236 = vmatpush1.bf16.msra.mxu0 0
    %1237 = vmatprep.mubr.bf16.mxu0 0
    %1238 = vmatmul.mubr.bf16.gmra.mrb[0].mxu0 %v1203
    %v1239 = vpop.f32.mrb[0].mxu0
    %v1240 = vadd.f32 0.0, %v1239
    %v1241 = vpop.f32.mrb[0].mxu0
    %v1242 = vpop.f32.mrb[0].mxu0
    %v1243 = vpop.f32.mrb[0].mxu0
    %1244 = vdwg.mxu0
    %v1246 = vrot.slane %v1240, 1
    %v1249 = vadd.f32 %v1189, %v1240
    %v1250 = vadd.f32 %v1190, %v1246
    %v1251 = vxor.u32 %v1187, 2147483648
    %v1252 = vxor.u32 %v1188, 2147483648
    %v1253 = vmul.f32 %v1251, 1.442695
    %v1254 = vpow.pop %v1253
    %v1255 = vmul.f32 %v1252, 1.442695
    %v1256 = vpow.pop %v1255
    %v1257 = vadd.f32 %v1254, 1.0
    %v1258 = vadd.f32 %v1256, 1.0
    %v1259 = vrcp.pop %v1257
    %v1260 = vmul.f32 1.0, %v1259
    %v1261 = vrcp.pop %v1258
    %v1262 = vmul.f32 1.0, %v1261
    %v1263 = vtanh.pop %v1187
    %v1264 = vtanh.pop %v1188
    %v1265 = vmul.f32 %v1260, %v1045
    %v1266 = vmul.f32 %v1262, %v1046
    %1269 = vrot.lane.b32.xlu0 %v1263, 32
    %v1270 = vpop.permute.xlu0 %1269
    %1271 = vrot.lane.b32.xlu0 %v1264, 32
    %v1272 = vpop.permute.xlu0 %1271
    %v1275 = vmul.f32 %v1260, %v1270
    %v1276 = vmul.f32 %v1262, %v1272
    %1279 = vrot.lane.b32.xlu0 %v1275, 32
    %v1280 = vpop.permute.xlu0 %1279
    %1281 = vrot.lane.b32.xlu0 %v1276, 32
    %v1282 = vpop.permute.xlu0 %1281
    %v1285 = vadd.f32 %v1265, %v1280
    %v1286 = vadd.f32 %v1266, %v1282
    %v1287 = vtanh.pop %v1285
    %v1288 = vtanh.pop %v1286
    %1291 = vrot.lane.b32.xlu0 %v1287, 32
    %v1292 = vpop.permute.xlu0 %1291
    %1293 = vrot.lane.b32.xlu0 %v1288, 32
    %v1294 = vpop.permute.xlu0 %1293
    %v1297 = vmul.f32 %v1260, %v1292
    %v1298 = vmul.f32 %v1262, %v1294
    %1301 = vrot.lane.b32.xlu0 %v1297, 64
    %v1302 = vpop.permute.xlu0 %1301
    %1303 = vrot.lane.b32.xlu0 %v1298, 64
    %v1304 = vpop.permute.xlu0 %1303
    %1307 = vst.msk [vmem:[#allocation4 + $0x4] sm:$0x1] %vm319, %v1302
    %1308 = vst.msk [vmem:[#allocation4 + $0xc] sm:$0x1] %vm319, %v1304
    %v1309 = vxor.u32 %v1249, 2147483648
    %v1310 = vxor.u32 %v1250, 2147483648
    %v1311 = vmul.f32 %v1309, 1.442695
    %v1312 = vpow.pop %v1311
    %v1313 = vmul.f32 %v1310, 1.442695
    %v1314 = vpow.pop %v1313
    %v1315 = vadd.f32 %v1312, 1.0
    %v1316 = vadd.f32 %v1314, 1.0
    %v1317 = vrcp.pop %v1315
    %v1318 = vmul.f32 1.0, %v1317
    %v1319 = vrcp.pop %v1316
    %v1320 = vmul.f32 1.0, %v1319
    %v1321 = vtanh.pop %v1249
    %v1322 = vtanh.pop %v1250
    %v1323 = vmul.f32 %v1318, %v1103
    %v1324 = vmul.f32 %v1320, %v1104
    %1327 = vrot.lane.b32.xlu0 %v1321, 32
    %v1328 = vpop.permute.xlu0 %1327
    %1329 = vrot.lane.b32.xlu0 %v1322, 32
    %v1330 = vpop.permute.xlu0 %1329
    %v1333 = vmul.f32 %v1318, %v1328
    %v1334 = vmul.f32 %v1320, %v1330
    %1337 = vrot.lane.b32.xlu0 %v1333, 32
    %v1338 = vpop.permute.xlu0 %1337
    %1339 = vrot.lane.b32.xlu0 %v1334, 32
    %v1340 = vpop.permute.xlu0 %1339
    %v1343 = vadd.f32 %v1323, %v1338
    %v1344 = vadd.f32 %v1324, %v1340
    %v1345 = vtanh.pop %v1343
    %v1346 = vtanh.pop %v1344
    %1349 = vrot.lane.b32.xlu0 %v1345, 32
    %v1350 = vpop.permute.xlu0 %1349
    %1351 = vrot.lane.b32.xlu0 %v1346, 32
    %v1352 = vpop.permute.xlu0 %1351
    %v1355 = vmul.f32 %v1318, %v1350
    %v1356 = vmul.f32 %v1320, %v1352
    %1359 = vrot.lane.b32.xlu0 %v1355, 96
    %v1360 = vpop.permute.xlu0 %1359
    %1361 = vrot.lane.b32.xlu0 %v1356, 96
    %v1362 = vpop.permute.xlu0 %1361
    %1365 = vst.msk [vmem:[#allocation4 + $0x3] sm:$0x1] %vm378, %v1360
    %1366 = vst.msk [vmem:[#allocation4 + $0xb] sm:$0x1] %vm378, %v1362
    %v1367 = vld [vmem:[#allocation2 + $0x5] sm:$0x1]
    %v1368 = vld [vmem:[#allocation2 + $0xd] sm:$0x1]
    %v1369 = vpack.c.bf16 %v1297, %v1297
    %v1370 = vpack.c.bf16 %v1298, %v1298
    %v1373 = vunpack.c.l.b16 %v1369
    %v1374 = vunpack.c.l.b16 %v1370
    %v1375 = vrot.slane %v1374, 7
    %v1376 = vsel %vm390, %v1375, %v1373
    %v1377 = vpack.c.b16 %v1376, %v1376
    %1378 = vrot.lane.b32.xlu0 %v1377, 64
    %v1379 = vpop.permute.xlu0 %1378
    %v1381 = vsel %vm407, %v1379, 0
    %1383 = vmatprep.subr.bf16.mxu0 0
    %1384 = vmatpush1.bf16.msra.mxu0 %v403
    %1385 = vmatprep.subr.bf16.mxu0 0
    %1386 = vmatpush1.bf16.msra.mxu0 %v404
    %1387 = vmatprep.subr.bf16.mxu0 0
    %1388 = vmatpush1.bf16.msra.mxu0 0
    %1389 = vmatprep.subr.bf16.mxu0 0
    %1390 = vmatpush1.bf16.msra.mxu0 0
    %1391 = vmatprep.subr.bf16.mxu0 0
    %1392 = vmatpush1.bf16.msra.mxu0 0
    %1393 = vmatprep.subr.bf16.mxu0 0
    %1394 = vmatpush1.bf16.msra.mxu0 0
    %1395 = vmatprep.subr.bf16.mxu0 0
    %1396 = vmatpush1.bf16.msra.mxu0 0
    %1397 = vmatprep.subr.bf16.mxu0 0
    %1398 = vmatpush1.bf16.msra.mxu0 0
    %1399 = vmatprep.subr.bf16.mxu0 0
    %1400 = vmatpush1.bf16.msra.mxu0 0
    %1401 = vmatprep.subr.bf16.mxu0 0
    %1402 = vmatpush1.bf16.msra.mxu0 0
    %1403 = vmatprep.subr.bf16.mxu0 0
    %1404 = vmatpush1.bf16.msra.mxu0 0
    %1405 = vmatprep.subr.bf16.mxu0 0
    %1406 = vmatpush1.bf16.msra.mxu0 0
    %1407 = vmatprep.subr.bf16.mxu0 0
    %1408 = vmatpush1.bf16.msra.mxu0 0
    %1409 = vmatprep.subr.bf16.mxu0 0
    %1410 = vmatpush1.bf16.msra.mxu0 0
    %1411 = vmatprep.subr.bf16.mxu0 0
    %1412 = vmatpush1.bf16.msra.mxu0 0
    %1413 = vmatprep.subr.bf16.mxu0 0
    %1414 = vmatpush1.bf16.msra.mxu0 0
    %1415 = vmatprep.mubr.bf16.mxu0 0
    %1416 = vmatmul.mubr.bf16.gmra.mrb[0].mxu0 %v1381
    %v1417 = vpop.f32.mrb[0].mxu0
    %v1418 = vadd.f32 0.0, %v1417
    %v1419 = vpop.f32.mrb[0].mxu0
    %v1420 = vpop.f32.mrb[0].mxu0
    %v1421 = vpop.f32.mrb[0].mxu0
    %1422 = vdwg.mxu0
    %v1424 = vrot.slane %v1418, 1
    %v1427 = vadd.f32 %v1367, %v1418
    %v1428 = vadd.f32 %v1368, %v1424
    %v1429 = vld [vmem:[#allocation3 + $0x2] sm:$0x1]
    %v1430 = vld [vmem:[#allocation3 + $0xa] sm:$0x1]
    %v1431 = vpack.c.bf16 %v1355, %v1355
    %v1432 = vpack.c.bf16 %v1356, %v1356
    %v1435 = vunpack.c.l.b16 %v1431
    %v1436 = vunpack.c.l.b16 %v1432
    %v1437 = vrot.slane %v1436, 7
    %v1438 = vsel %vm390, %v1437, %v1435
    %v1439 = vpack.c.b16 %v1438, %v1438
    %1440 = vrot.lane.b32.xlu0 %v1439, 64
    %v1441 = vpop.permute.xlu0 %1440
    %v1443 = vsel %vm407, %v1441, 0
    %1445 = vmatprep.subr.bf16.mxu0 0
    %1446 = vmatpush1.bf16.msra.mxu0 %v478
    %1447 = vmatprep.subr.bf16.mxu0 0
    %1448 = vmatpush1.bf16.msra.mxu0 %v479
    %1449 = vmatprep.subr.bf16.mxu0 0
    %1450 = vmatpush1.bf16.msra.mxu0 0
    %1451 = vmatprep.subr.bf16.mxu0 0
    %1452 = vmatpush1.bf16.msra.mxu0 0
    %1453 = vmatprep.subr.bf16.mxu0 0
    %1454 = vmatpush1.bf16.msra.mxu0 0
    %1455 = vmatprep.subr.bf16.mxu0 0
    %1456 = vmatpush1.bf16.msra.mxu0 0
    %1457 = vmatprep.subr.bf16.mxu0 0
    %1458 = vmatpush1.bf16.msra.mxu0 0
    %1459 = vmatprep.subr.bf16.mxu0 0
    %1460 = vmatpush1.bf16.msra.mxu0 0
    %1461 = vmatprep.subr.bf16.mxu0 0
    %1462 = vmatpush1.bf16.msra.mxu0 0
    %1463 = vmatprep.subr.bf16.mxu0 0
    %1464 = vmatpush1.bf16.msra.mxu0 0
    %1465 = vmatprep.subr.bf16.mxu0 0
    %1466 = vmatpush1.bf16.msra.mxu0 0
    %1467 = vmatprep.subr.bf16.mxu0 0
    %1468 = vmatpush1.bf16.msra.mxu0 0
    %1469 = vmatprep.subr.bf16.mxu0 0
    %1470 = vmatpush1.bf16.msra.mxu0 0
    %1471 = vmatprep.subr.bf16.mxu0 0
    %1472 = vmatpush1.bf16.msra.mxu0 0
    %1473 = vmatprep.subr.bf16.mxu0 0
    %1474 = vmatpush1.bf16.msra.mxu0 0
    %1475 = vmatprep.subr.bf16.mxu0 0
    %1476 = vmatpush1.bf16.msra.mxu0 0
    %1477 = vmatprep.mubr.bf16.mxu0 0
    %1478 = vmatmul.mubr.bf16.gmra.mrb[0].mxu0 %v1443
    %v1479 = vpop.f32.mrb[0].mxu0
    %v1480 = vadd.f32 0.0, %v1479
    %v1481 = vpop.f32.mrb[0].mxu0
    %v1482 = vpop.f32.mrb[0].mxu0
    %v1483 = vpop.f32.mrb[0].mxu0
    %1484 = vdwg.mxu0
    %v1486 = vrot.slane %v1480, 1
    %v1489 = vadd.f32 %v1429, %v1480
    %v1490 = vadd.f32 %v1430, %v1486
    %v1491 = vxor.u32 %v1427, 2147483648
    %v1492 = vxor.u32 %v1428, 2147483648
    %v1493 = vmul.f32 %v1491, 1.442695
    %v1494 = vpow.pop %v1493
    %v1495 = vmul.f32 %v1492, 1.442695
    %v1496 = vpow.pop %v1495
    %v1497 = vadd.f32 %v1494, 1.0
    %v1498 = vadd.f32 %v1496, 1.0
    %v1499 = vrcp.pop %v1497
    %v1500 = vmul.f32 1.0, %v1499
    %v1501 = vrcp.pop %v1498
    %v1502 = vmul.f32 1.0, %v1501
    %v1503 = vtanh.pop %v1427
    %v1504 = vtanh.pop %v1428
    %v1505 = vmul.f32 %v1500, %v1285
    %v1506 = vmul.f32 %v1502, %v1286
    %1509 = vrot.lane.b32.xlu0 %v1503, 32
    %v1510 = vpop.permute.xlu0 %1509
    %1511 = vrot.lane.b32.xlu0 %v1504, 32
    %v1512 = vpop.permute.xlu0 %1511
    %v1515 = vmul.f32 %v1500, %v1510
    %v1516 = vmul.f32 %v1502, %v1512
    %1519 = vrot.lane.b32.xlu0 %v1515, 32
    %v1520 = vpop.permute.xlu0 %1519
    %1521 = vrot.lane.b32.xlu0 %v1516, 32
    %v1522 = vpop.permute.xlu0 %1521
    %v1525 = vadd.f32 %v1505, %v1520
    %v1526 = vadd.f32 %v1506, %v1522
    %v1527 = vtanh.pop %v1525
    %v1528 = vtanh.pop %v1526
    %1531 = vrot.lane.b32.xlu0 %v1527, 32
    %v1532 = vpop.permute.xlu0 %1531
    %1533 = vrot.lane.b32.xlu0 %v1528, 32
    %v1534 = vpop.permute.xlu0 %1533
    %v1537 = vmul.f32 %v1500, %v1532
    %v1538 = vmul.f32 %v1502, %v1534
    %1541 = vrot.lane.b32.xlu0 %v1537, 64
    %v1542 = vpop.permute.xlu0 %1541
    %1543 = vrot.lane.b32.xlu0 %v1538, 64
    %v1544 = vpop.permute.xlu0 %1543
    %1547 = vst.msk [vmem:[#allocation4 + $0x5] sm:$0x1] %vm319, %v1542
    %1548 = vst.msk [vmem:[#allocation4 + $0xd] sm:$0x1] %vm319, %v1544
    %v1549 = vxor.u32 %v1489, 2147483648
    %v1550 = vxor.u32 %v1490, 2147483648
    %v1551 = vmul.f32 %v1549, 1.442695
    %v1552 = vpow.pop %v1551
    %v1553 = vmul.f32 %v1550, 1.442695
    %v1554 = vpow.pop %v1553
    %v1555 = vadd.f32 %v1552, 1.0
    %v1556 = vadd.f32 %v1554, 1.0
    %v1557 = vrcp.pop %v1555
    %v1558 = vmul.f32 1.0, %v1557
    %v1559 = vrcp.pop %v1556
    %v1560 = vmul.f32 1.0, %v1559
    %v1561 = vtanh.pop %v1489
    %v1562 = vtanh.pop %v1490
    %v1563 = vmul.f32 %v1558, %v1343
    %v1564 = vmul.f32 %v1560, %v1344
    %1567 = vrot.lane.b32.xlu0 %v1561, 32
    %v1568 = vpop.permute.xlu0 %1567
    %1569 = vrot.lane.b32.xlu0 %v1562, 32
    %v1570 = vpop.permute.xlu0 %1569
    %v1573 = vmul.f32 %v1558, %v1568
    %v1574 = vmul.f32 %v1560, %v1570
    %1577 = vrot.lane.b32.xlu0 %v1573, 32
    %v1578 = vpop.permute.xlu0 %1577
    %1579 = vrot.lane.b32.xlu0 %v1574, 32
    %v1580 = vpop.permute.xlu0 %1579
    %v1583 = vadd.f32 %v1563, %v1578
    %v1584 = vadd.f32 %v1564, %v1580
    %v1585 = vtanh.pop %v1583
    %v1586 = vtanh.pop %v1584
    %1589 = vrot.lane.b32.xlu0 %v1585, 32
    %v1590 = vpop.permute.xlu0 %1589
    %1591 = vrot.lane.b32.xlu0 %v1586, 32
    %v1592 = vpop.permute.xlu0 %1591
    %v1595 = vmul.f32 %v1558, %v1590
    %v1596 = vmul.f32 %v1560, %v1592
    %1599 = vrot.lane.b32.xlu0 %v1595, 96
    %v1600 = vpop.permute.xlu0 %1599
    %1601 = vrot.lane.b32.xlu0 %v1596, 96
    %v1602 = vpop.permute.xlu0 %1601
    %1605 = vst.msk [vmem:[#allocation4 + $0x2] sm:$0x1] %vm378, %v1600
    %1606 = vst.msk [vmem:[#allocation4 + $0xa] sm:$0x1] %vm378, %v1602
    %v1607 = vld [vmem:[#allocation2 + $0x6] sm:$0x1]
    %v1608 = vld [vmem:[#allocation2 + $0xe] sm:$0x1]
    %v1609 = vpack.c.bf16 %v1537, %v1537
    %v1610 = vpack.c.bf16 %v1538, %v1538
    %v1613 = vunpack.c.l.b16 %v1609
    %v1614 = vunpack.c.l.b16 %v1610
    %v1615 = vrot.slane %v1614, 7
    %v1616 = vsel %vm390, %v1615, %v1613
    %v1617 = vpack.c.b16 %v1616, %v1616
    %1618 = vrot.lane.b32.xlu0 %v1617, 64
    %v1619 = vpop.permute.xlu0 %1618
    %v1621 = vsel %vm407, %v1619, 0
    %1623 = vmatprep.subr.bf16.mxu0 0
    %1624 = vmatpush1.bf16.msra.mxu0 %v403
    %1625 = vmatprep.subr.bf16.mxu0 0
    %1626 = vmatpush1.bf16.msra.mxu0 %v404
    %1627 = vmatprep.subr.bf16.mxu0 0
    %1628 = vmatpush1.bf16.msra.mxu0 0
    %1629 = vmatprep.subr.bf16.mxu0 0
    %1630 = vmatpush1.bf16.msra.mxu0 0
    %1631 = vmatprep.subr.bf16.mxu0 0
    %1632 = vmatpush1.bf16.msra.mxu0 0
    %1633 = vmatprep.subr.bf16.mxu0 0
    %1634 = vmatpush1.bf16.msra.mxu0 0
    %1635 = vmatprep.subr.bf16.mxu0 0
    %1636 = vmatpush1.bf16.msra.mxu0 0
    %1637 = vmatprep.subr.bf16.mxu0 0
    %1638 = vmatpush1.bf16.msra.mxu0 0
    %1639 = vmatprep.subr.bf16.mxu0 0
    %1640 = vmatpush1.bf16.msra.mxu0 0
    %1641 = vmatprep.subr.bf16.mxu0 0
    %1642 = vmatpush1.bf16.msra.mxu0 0
    %1643 = vmatprep.subr.bf16.mxu0 0
    %1644 = vmatpush1.bf16.msra.mxu0 0
    %1645 = vmatprep.subr.bf16.mxu0 0
    %1646 = vmatpush1.bf16.msra.mxu0 0
    %1647 = vmatprep.subr.bf16.mxu0 0
    %1648 = vmatpush1.bf16.msra.mxu0 0
    %1649 = vmatprep.subr.bf16.mxu0 0
    %1650 = vmatpush1.bf16.msra.mxu0 0
    %1651 = vmatprep.subr.bf16.mxu0 0
    %1652 = vmatpush1.bf16.msra.mxu0 0
    %1653 = vmatprep.subr.bf16.mxu0 0
    %1654 = vmatpush1.bf16.msra.mxu0 0
    %1655 = vmatprep.mubr.bf16.mxu0 0
    %1656 = vmatmul.mubr.bf16.gmra.mrb[0].mxu0 %v1621
    %v1657 = vpop.f32.mrb[0].mxu0
    %v1658 = vadd.f32 0.0, %v1657
    %v1659 = vpop.f32.mrb[0].mxu0
    %v1660 = vpop.f32.mrb[0].mxu0
    %v1661 = vpop.f32.mrb[0].mxu0
    %1662 = vdwg.mxu0
    %v1664 = vrot.slane %v1658, 1
    %v1667 = vadd.f32 %v1607, %v1658
    %v1668 = vadd.f32 %v1608, %v1664
    %v1669 = vld [vmem:[#allocation3 + $0x1] sm:$0x1]
    %v1670 = vld [vmem:[#allocation3 + $0x9] sm:$0x1]
    %v1671 = vpack.c.bf16 %v1595, %v1595
    %v1672 = vpack.c.bf16 %v1596, %v1596
    %v1675 = vunpack.c.l.b16 %v1671
    %v1676 = vunpack.c.l.b16 %v1672
    %v1677 = vrot.slane %v1676, 7
    %v1678 = vsel %vm390, %v1677, %v1675
    %v1679 = vpack.c.b16 %v1678, %v1678
    %1680 = vrot.lane.b32.xlu0 %v1679, 64
    %v1681 = vpop.permute.xlu0 %1680
    %v1683 = vsel %vm407, %v1681, 0
    %1685 = vmatprep.subr.bf16.mxu0 0
    %1686 = vmatpush1.bf16.msra.mxu0 %v478
    %1687 = vmatprep.subr.bf16.mxu0 0
    %1688 = vmatpush1.bf16.msra.mxu0 %v479
    %1689 = vmatprep.subr.bf16.mxu0 0
    %1690 = vmatpush1.bf16.msra.mxu0 0
    %1691 = vmatprep.subr.bf16.mxu0 0
    %1692 = vmatpush1.bf16.msra.mxu0 0
    %1693 = vmatprep.subr.bf16.mxu0 0
    %1694 = vmatpush1.bf16.msra.mxu0 0
    %1695 = vmatprep.subr.bf16.mxu0 0
    %1696 = vmatpush1.bf16.msra.mxu0 0
    %1697 = vmatprep.subr.bf16.mxu0 0
    %1698 = vmatpush1.bf16.msra.mxu0 0
    %1699 = vmatprep.subr.bf16.mxu0 0
    %1700 = vmatpush1.bf16.msra.mxu0 0
    %1701 = vmatprep.subr.bf16.mxu0 0
    %1702 = vmatpush1.bf16.msra.mxu0 0
    %1703 = vmatprep.subr.bf16.mxu0 0
    %1704 = vmatpush1.bf16.msra.mxu0 0
    %1705 = vmatprep.subr.bf16.mxu0 0
    %1706 = vmatpush1.bf16.msra.mxu0 0
    %1707 = vmatprep.subr.bf16.mxu0 0
    %1708 = vmatpush1.bf16.msra.mxu0 0
    %1709 = vmatprep.subr.bf16.mxu0 0
    %1710 = vmatpush1.bf16.msra.mxu0 0
    %1711 = vmatprep.subr.bf16.mxu0 0
    %1712 = vmatpush1.bf16.msra.mxu0 0
    %1713 = vmatprep.subr.bf16.mxu0 0
    %1714 = vmatpush1.bf16.msra.mxu0 0
    %1715 = vmatprep.subr.bf16.mxu0 0
    %1716 = vmatpush1.bf16.msra.mxu0 0
    %1717 = vmatprep.mubr.bf16.mxu0 0
    %1718 = vmatmul.mubr.bf16.gmra.mrb[0].mxu0 %v1683
    %v1719 = vpop.f32.mrb[0].mxu0
    %v1720 = vadd.f32 0.0, %v1719
    %v1721 = vpop.f32.mrb[0].mxu0
    %v1722 = vpop.f32.mrb[0].mxu0
    %v1723 = vpop.f32.mrb[0].mxu0
    %1724 = vdwg.mxu0
    %v1726 = vrot.slane %v1720, 1
    %v1729 = vadd.f32 %v1669, %v1720
    %v1730 = vadd.f32 %v1670, %v1726
    %v1731 = vxor.u32 %v1667, 2147483648
    %v1732 = vxor.u32 %v1668, 2147483648
    %v1733 = vmul.f32 %v1731, 1.442695
    %v1734 = vpow.pop %v1733
    %v1735 = vmul.f32 %v1732, 1.442695
    %v1736 = vpow.pop %v1735
    %v1737 = vadd.f32 %v1734, 1.0
    %v1738 = vadd.f32 %v1736, 1.0
    %v1739 = vrcp.pop %v1737
    %v1740 = vmul.f32 1.0, %v1739
    %v1741 = vrcp.pop %v1738
    %v1742 = vmul.f32 1.0, %v1741
    %v1743 = vtanh.pop %v1667
    %v1744 = vtanh.pop %v1668
    %v1745 = vmul.f32 %v1740, %v1525
    %v1746 = vmul.f32 %v1742, %v1526
    %1749 = vrot.lane.b32.xlu0 %v1743, 32
    %v1750 = vpop.permute.xlu0 %1749
    %1751 = vrot.lane.b32.xlu0 %v1744, 32
    %v1752 = vpop.permute.xlu0 %1751
    %v1755 = vmul.f32 %v1740, %v1750
    %v1756 = vmul.f32 %v1742, %v1752
    %1759 = vrot.lane.b32.xlu0 %v1755, 32
    %v1760 = vpop.permute.xlu0 %1759
    %1761 = vrot.lane.b32.xlu0 %v1756, 32
    %v1762 = vpop.permute.xlu0 %1761
    %v1765 = vadd.f32 %v1745, %v1760
    %v1766 = vadd.f32 %v1746, %v1762
    %v1767 = vtanh.pop %v1765
    %v1768 = vtanh.pop %v1766
    %1771 = vrot.lane.b32.xlu0 %v1767, 32
    %v1772 = vpop.permute.xlu0 %1771
    %1773 = vrot.lane.b32.xlu0 %v1768, 32
    %v1774 = vpop.permute.xlu0 %1773
    %v1777 = vmul.f32 %v1740, %v1772
    %v1778 = vmul.f32 %v1742, %v1774
    %1781 = vrot.lane.b32.xlu0 %v1777, 64
    %v1782 = vpop.permute.xlu0 %1781
    %1783 = vrot.lane.b32.xlu0 %v1778, 64
    %v1784 = vpop.permute.xlu0 %1783
    %1787 = vst.msk [vmem:[#allocation4 + $0x6] sm:$0x1] %vm319, %v1782
    %1788 = vst.msk [vmem:[#allocation4 + $0xe] sm:$0x1] %vm319, %v1784
    %v1789 = vxor.u32 %v1729, 2147483648
    %v1790 = vxor.u32 %v1730, 2147483648
    %v1791 = vmul.f32 %v1789, 1.442695
    %v1792 = vpow.pop %v1791
    %v1793 = vmul.f32 %v1790, 1.442695
    %v1794 = vpow.pop %v1793
    %v1795 = vadd.f32 %v1792, 1.0
    %v1796 = vadd.f32 %v1794, 1.0
    %v1797 = vrcp.pop %v1795
    %v1798 = vmul.f32 1.0, %v1797
    %v1799 = vrcp.pop %v1796
    %v1800 = vmul.f32 1.0, %v1799
    %v1801 = vtanh.pop %v1729
    %v1802 = vtanh.pop %v1730
    %v1803 = vmul.f32 %v1798, %v1583
    %v1804 = vmul.f32 %v1800, %v1584
    %1807 = vrot.lane.b32.xlu0 %v1801, 32
    %v1808 = vpop.permute.xlu0 %1807
    %1809 = vrot.lane.b32.xlu0 %v1802, 32
    %v1810 = vpop.permute.xlu0 %1809
    %v1813 = vmul.f32 %v1798, %v1808
    %v1814 = vmul.f32 %v1800, %v1810
    %1817 = vrot.lane.b32.xlu0 %v1813, 32
    %v1818 = vpop.permute.xlu0 %1817
    %1819 = vrot.lane.b32.xlu0 %v1814, 32
    %v1820 = vpop.permute.xlu0 %1819
    %v1823 = vadd.f32 %v1803, %v1818
    %v1824 = vadd.f32 %v1804, %v1820
    %v1825 = vtanh.pop %v1823
    %v1826 = vtanh.pop %v1824
    %1829 = vrot.lane.b32.xlu0 %v1825, 32
    %v1830 = vpop.permute.xlu0 %1829
    %1831 = vrot.lane.b32.xlu0 %v1826, 32
    %v1832 = vpop.permute.xlu0 %1831
    %v1835 = vmul.f32 %v1798, %v1830
    %v1836 = vmul.f32 %v1800, %v1832
    %1839 = vrot.lane.b32.xlu0 %v1835, 96
    %v1840 = vpop.permute.xlu0 %1839
    %1841 = vrot.lane.b32.xlu0 %v1836, 96
    %v1842 = vpop.permute.xlu0 %1841
    %1845 = vst.msk [vmem:[#allocation4 + $0x1] sm:$0x1] %vm378, %v1840
    %1846 = vst.msk [vmem:[#allocation4 + $0x9] sm:$0x1] %vm378, %v1842
    %v1847 = vld [vmem:[#allocation2 + $0x7] sm:$0x1]
    %v1848 = vld [vmem:[#allocation2 + $0xf] sm:$0x1]
    %v1849 = vpack.c.bf16 %v1777, %v1777
    %v1850 = vpack.c.bf16 %v1778, %v1778
    %v1853 = vunpack.c.l.b16 %v1849
    %v1854 = vunpack.c.l.b16 %v1850
    %v1855 = vrot.slane %v1854, 7
    %v1856 = vsel %vm390, %v1855, %v1853
    %v1857 = vpack.c.b16 %v1856, %v1856
    %1858 = vrot.lane.b32.xlu0 %v1857, 64
    %v1859 = vpop.permute.xlu0 %1858
    %v1861 = vsel %vm407, %v1859, 0
    %1863 = vmatprep.subr.bf16.mxu0 0
    %1864 = vmatpush1.bf16.msra.mxu0 %v403
    %1865 = vmatprep.subr.bf16.mxu0 0
    %1866 = vmatpush1.bf16.msra.mxu0 %v404
    %1867 = vmatprep.subr.bf16.mxu0 0
    %1868 = vmatpush1.bf16.msra.mxu0 0
    %1869 = vmatprep.subr.bf16.mxu0 0
    %1870 = vmatpush1.bf16.msra.mxu0 0
    %1871 = vmatprep.subr.bf16.mxu0 0
    %1872 = vmatpush1.bf16.msra.mxu0 0
    %1873 = vmatprep.subr.bf16.mxu0 0
    %1874 = vmatpush1.bf16.msra.mxu0 0
    %1875 = vmatprep.subr.bf16.mxu0 0
    %1876 = vmatpush1.bf16.msra.mxu0 0
    %1877 = vmatprep.subr.bf16.mxu0 0
    %1878 = vmatpush1.bf16.msra.mxu0 0
    %1879 = vmatprep.subr.bf16.mxu0 0
    %1880 = vmatpush1.bf16.msra.mxu0 0
    %1881 = vmatprep.subr.bf16.mxu0 0
    %1882 = vmatpush1.bf16.msra.mxu0 0
    %1883 = vmatprep.subr.bf16.mxu0 0
    %1884 = vmatpush1.bf16.msra.mxu0 0
    %1885 = vmatprep.subr.bf16.mxu0 0
    %1886 = vmatpush1.bf16.msra.mxu0 0
    %1887 = vmatprep.subr.bf16.mxu0 0
    %1888 = vmatpush1.bf16.msra.mxu0 0
    %1889 = vmatprep.subr.bf16.mxu0 0
    %1890 = vmatpush1.bf16.msra.mxu0 0
    %1891 = vmatprep.subr.bf16.mxu0 0
    %1892 = vmatpush1.bf16.msra.mxu0 0
    %1893 = vmatprep.subr.bf16.mxu0 0
    %1894 = vmatpush1.bf16.msra.mxu0 0
    %1895 = vmatprep.mubr.bf16.mxu0 0
    %1896 = vmatmul.mubr.bf16.gmra.mrb[0].mxu0 %v1861
    %v1897 = vpop.f32.mrb[0].mxu0
    %v1898 = vadd.f32 0.0, %v1897
    %v1899 = vpop.f32.mrb[0].mxu0
    %v1900 = vpop.f32.mrb[0].mxu0
    %v1901 = vpop.f32.mrb[0].mxu0
    %1902 = vdwg.mxu0
    %v1904 = vrot.slane %v1898, 1
    %v1907 = vadd.f32 %v1847, %v1898
    %v1908 = vadd.f32 %v1848, %v1904
    %v1909 = vld [vmem:[#allocation3] sm:$0x1]
    %v1910 = vld [vmem:[#allocation3 + $0x8] sm:$0x1]
    %v1911 = vpack.c.bf16 %v1835, %v1835
    %v1912 = vpack.c.bf16 %v1836, %v1836
    %v1915 = vunpack.c.l.b16 %v1911
    %v1916 = vunpack.c.l.b16 %v1912
    %v1917 = vrot.slane %v1916, 7
    %v1918 = vsel %vm390, %v1917, %v1915
    %v1919 = vpack.c.b16 %v1918, %v1918
    %1920 = vrot.lane.b32.xlu0 %v1919, 64
    %v1921 = vpop.permute.xlu0 %1920
    %v1923 = vsel %vm407, %v1921, 0
    %1925 = vmatprep.subr.bf16.mxu0 0
    %1926 = vmatpush1.bf16.msra.mxu0 %v478
    %1927 = vmatprep.subr.bf16.mxu0 0
    %1928 = vmatpush1.bf16.msra.mxu0 %v479
    %1929 = vmatprep.subr.bf16.mxu0 0
    %1930 = vmatpush1.bf16.msra.mxu0 0
    %1931 = vmatprep.subr.bf16.mxu0 0
    %1932 = vmatpush1.bf16.msra.mxu0 0
    %1933 = vmatprep.subr.bf16.mxu0 0
    %1934 = vmatpush1.bf16.msra.mxu0 0
    %1935 = vmatprep.subr.bf16.mxu0 0
    %1936 = vmatpush1.bf16.msra.mxu0 0
    %1937 = vmatprep.subr.bf16.mxu0 0
    %1938 = vmatpush1.bf16.msra.mxu0 0
    %1939 = vmatprep.subr.bf16.mxu0 0
    %1940 = vmatpush1.bf16.msra.mxu0 0
    %1941 = vmatprep.subr.bf16.mxu0 0
    %1942 = vmatpush1.bf16.msra.mxu0 0
    %1943 = vmatprep.subr.bf16.mxu0 0
    %1944 = vmatpush1.bf16.msra.mxu0 0
    %1945 = vmatprep.subr.bf16.mxu0 0
    %1946 = vmatpush1.bf16.msra.mxu0 0
    %1947 = vmatprep.subr.bf16.mxu0 0
    %1948 = vmatpush1.bf16.msra.mxu0 0
    %1949 = vmatprep.subr.bf16.mxu0 0
    %1950 = vmatpush1.bf16.msra.mxu0 0
    %1951 = vmatprep.subr.bf16.mxu0 0
    %1952 = vmatpush1.bf16.msra.mxu0 0
    %1953 = vmatprep.subr.bf16.mxu0 0
    %1954 = vmatpush1.bf16.msra.mxu0 0
    %1955 = vmatprep.subr.bf16.mxu0 0
    %1956 = vmatpush1.bf16.msra.mxu0 0
    %1957 = vmatprep.mubr.bf16.mxu0 0
    %1958 = vmatmul.mubr.bf16.gmra.mrb[0].mxu0 %v1923
    %v1959 = vpop.f32.mrb[0].mxu0
    %v1960 = vadd.f32 0.0, %v1959
    %v1961 = vpop.f32.mrb[0].mxu0
    %v1962 = vpop.f32.mrb[0].mxu0
    %v1963 = vpop.f32.mrb[0].mxu0
    %1964 = vdwg.mxu0
    %v1966 = vrot.slane %v1960, 1
    %v1969 = vadd.f32 %v1909, %v1960
    %v1970 = vadd.f32 %v1910, %v1966
    %v1971 = vxor.u32 %v1907, 2147483648
    %v1972 = vxor.u32 %v1908, 2147483648
    %v1973 = vmul.f32 %v1971, 1.442695
    %v1974 = vpow.pop %v1973
    %v1975 = vmul.f32 %v1972, 1.442695
    %v1976 = vpow.pop %v1975
    %v1977 = vadd.f32 %v1974, 1.0
    %v1978 = vadd.f32 %v1976, 1.0
    %v1979 = vrcp.pop %v1977
    %v1980 = vmul.f32 1.0, %v1979
    %v1981 = vrcp.pop %v1978
    %v1982 = vmul.f32 1.0, %v1981
    %v1983 = vtanh.pop %v1907
    %v1984 = vtanh.pop %v1908
    %v1985 = vmul.f32 %v1980, %v1765
    %v1986 = vmul.f32 %v1982, %v1766
    %1989 = vrot.lane.b32.xlu0 %v1983, 32
    %v1990 = vpop.permute.xlu0 %1989
    %1991 = vrot.lane.b32.xlu0 %v1984, 32
    %v1992 = vpop.permute.xlu0 %1991
    %v1995 = vmul.f32 %v1980, %v1990
    %v1996 = vmul.f32 %v1982, %v1992
    %1999 = vrot.lane.b32.xlu0 %v1995, 32
    %v2000 = vpop.permute.xlu0 %1999
    %2001 = vrot.lane.b32.xlu0 %v1996, 32
    %v2002 = vpop.permute.xlu0 %2001
    %v2005 = vadd.f32 %v1985, %v2000
    %v2006 = vadd.f32 %v1986, %v2002
    %v2007 = vtanh.pop %v2005
    %v2008 = vtanh.pop %v2006
    %2011 = vrot.lane.b32.xlu0 %v2007, 32
    %v2012 = vpop.permute.xlu0 %2011
    %2013 = vrot.lane.b32.xlu0 %v2008, 32
    %v2014 = vpop.permute.xlu0 %2013
    %v2017 = vmul.f32 %v1980, %v2012
    %v2018 = vmul.f32 %v1982, %v2014
    %2021 = vrot.lane.b32.xlu0 %v2017, 64
    %v2022 = vpop.permute.xlu0 %2021
    %2023 = vrot.lane.b32.xlu0 %v2018, 64
    %v2024 = vpop.permute.xlu0 %2023
    %2027 = vst.msk [vmem:[#allocation4 + $0x7] sm:$0x1] %vm319, %v2022
    %2028 = vst.msk [vmem:[#allocation4 + $0xf] sm:$0x1] %vm319, %v2024
    %v2029 = vxor.u32 %v1969, 2147483648
    %v2030 = vxor.u32 %v1970, 2147483648
    %v2031 = vmul.f32 %v2029, 1.442695
    %v2032 = vpow.pop %v2031
    %v2033 = vmul.f32 %v2030, 1.442695
    %v2034 = vpow.pop %v2033
    %v2035 = vadd.f32 %v2032, 1.0
    %v2036 = vadd.f32 %v2034, 1.0
    %v2037 = vrcp.pop %v2035
    %v2038 = vmul.f32 1.0, %v2037
    %v2039 = vrcp.pop %v2036
    %v2040 = vmul.f32 1.0, %v2039
    %v2041 = vtanh.pop %v1969
    %v2042 = vtanh.pop %v1970
    %v2043 = vmul.f32 %v2038, %v1823
    %v2044 = vmul.f32 %v2040, %v1824
    %2047 = vrot.lane.b32.xlu0 %v2041, 32
    %v2048 = vpop.permute.xlu0 %2047
    %2049 = vrot.lane.b32.xlu0 %v2042, 32
    %v2050 = vpop.permute.xlu0 %2049
    %v2053 = vmul.f32 %v2038, %v2048
    %v2054 = vmul.f32 %v2040, %v2050
    %2057 = vrot.lane.b32.xlu0 %v2053, 32
    %v2058 = vpop.permute.xlu0 %2057
    %2059 = vrot.lane.b32.xlu0 %v2054, 32
    %v2060 = vpop.permute.xlu0 %2059
    %v2063 = vadd.f32 %v2043, %v2058
    %v2064 = vadd.f32 %v2044, %v2060
    %v2065 = vtanh.pop %v2063
    %v2066 = vtanh.pop %v2064
    %2069 = vrot.lane.b32.xlu0 %v2065, 32
    %v2070 = vpop.permute.xlu0 %2069
    %2071 = vrot.lane.b32.xlu0 %v2066, 32
    %v2072 = vpop.permute.xlu0 %2071
    %v2075 = vmul.f32 %v2038, %v2070
    %v2076 = vmul.f32 %v2040, %v2072
    %2079 = vrot.lane.b32.xlu0 %v2075, 96
    %v2080 = vpop.permute.xlu0 %2079
    %2081 = vrot.lane.b32.xlu0 %v2076, 96
    %v2082 = vpop.permute.xlu0 %2081
    %2085 = vst.msk [vmem:[#allocation4] sm:$0x1] %vm378, %v2080
    %2086 = vst.msk [vmem:[#allocation4 + $0x8] sm:$0x1] %vm378, %v2082
    %v2087 = vld [vmem:[#allocation4] sm:$0xff]
    %v2088 = vld [vmem:[#allocation4 + $0x8] sm:$0xff]
    %v2089 = vld [vmem:[#allocation15] sm:$0x1]
    %v2091 = vlaneseq
    %v2092 = vshrl.u32 %v2091, 7
    %v2093 = vsub.s32 0, %v2092
    %v2094 = vrot.slane %v2089, %v2093
    %v2096 = vmul.f32 %v2087, %v2094
    %v2097 = vmul.f32 %v2088, %v2094
    %vm2098 = vcmask 523264
    %v2099 = vsel %vm2098, %v2096, 0.0
    %2100 = vadd.xlane.f32.xlu0 %v2099
    %v2101 = vpop.xlane.xlu0 %2100
    %v2102 = vsel %vm2098, %v2097, 0.0
    %2103 = vadd.xlane.f32.xlu0 %v2102
    %v2104 = vpop.xlane.xlu0 %2103
    %s2105 = sld [smem:[#allocation5]]
    %v2106 = vstv %s2105
    %v2107 = vadd.f32 %v2101, %v2106
    %v2108 = vadd.f32 %v2104, %v2106
    %v2111 = vlaneseq
    %v2112 = vand.u32 %v2111, 127
    %v2113 = vlaneseq
    %v2114 = vshrl.u32 %v2113, 7
    %v2115 = vsub.s32 %v2112, %v2114
    %v2116 = vrot.slane %v2107, %v2115
    %v2117 = vlaneseq
    %v2118 = vshrl.u32 %v2117, 7
    %v2119 = vsub.s32 %v2112, %v2118
    %v2120 = vrot.slane %v2108, %v2119
    %v2121 = vsel %vm390, %v2120, %v2116
    %vm2123 = vcmask 58368
    %v2124 = vsel %vm2123, %v2121, -inf
    %2125 = vmax.xlane.f32.xlu0 %v2124
    %v2126 = vpop.xlane.xlu0 %2125
    %v2128 = vlaneseq
    %v2129 = vshrl.u32 %v2128, 7
    %v2130 = vsub.s32 0, %v2129
    %v2131 = vrot.slane %v2126, %v2130
    %v2132 = vlaneseq
    %v2133 = vshrl.u32 %v2132, 7
    %v2134 = vsub.s32 1, %v2133
    %v2135 = vrot.slane %v2126, %v2134
    %v2138 = vsub.f32 %v2107, %v2131
    %v2139 = vsub.f32 %v2108, %v2135
    %v2140 = vmul.f32 %v2138, 1.442695
    %v2141 = vpow.pop %v2140
    %v2142 = vmul.f32 %v2139, 1.442695
    %v2143 = vpow.pop %v2142
    %2146 = vset.pattern.permute.xlu0 0
    %2147 = vperm.xlu0 %2146, %v2141
    %v2148 = vpop.permute.xlu0 %2147
    %2149 = vset.pattern.permute.xlu0 0
    %2150 = vperm.xlu0 %2149, %v2143
    %v2151 = vpop.permute.xlu0 %2150
    %v2152 = vlaneseq
    %v2153 = vshrl.u32 %v2152, 7
    %v2154 = vsub.s32 %v2112, %v2153
    %v2155 = vrot.slane %v2148, %v2154
    %v2156 = vlaneseq
    %v2157 = vshrl.u32 %v2156, 7
    %v2158 = vsub.s32 %v2112, %v2157
    %v2159 = vrot.slane %v2151, %v2158
    %v2160 = vsel %vm390, %v2159, %v2155
    %v2162 = vsel %vm2123, %v2160, 0.0
    %2163 = vadd.xlane.f32.xlu0 %v2162
    %v2164 = vpop.xlane.xlu0 %2163
    %v2166 = vlaneseq
    %v2167 = vshrl.u32 %v2166, 7
    %v2168 = vsub.s32 0, %v2167
    %v2169 = vrot.slane %v2164, %v2168
    %v2170 = vlaneseq
    %v2171 = vshrl.u32 %v2170, 7
    %v2172 = vsub.s32 1, %v2171
    %v2173 = vrot.slane %v2164, %v2172
    %v2176 = vrcp.pop %v2169
    %v2177 = vmul.f32 %v2141, %v2176
    %v2178 = vrcp.pop %v2173
    %v2179 = vmul.f32 %v2143, %v2178
    %2182 = vset.pattern.permute.xlu0 0
    %2183 = vperm.xlu0 %2182, %v2177
    %v2184 = vpop.permute.xlu0 %2183
    %2185 = vset.pattern.permute.xlu0 0
    %2186 = vperm.xlu0 %2185, %v2179
    %v2187 = vpop.permute.xlu0 %2186
    %v2188 = vlaneseq
    %v2189 = vshrl.u32 %v2188, 7
    %v2190 = vsub.s32 %v2112, %v2189
    %v2191 = vrot.slane %v2184, %v2190
    %v2192 = vadd.s32 %v2112, 4294967288
    %v2193 = vlaneseq
    %v2194 = vshrl.u32 %v2193, 7
    %v2195 = vsub.s32 %v2192, %v2194
    %v2196 = vrot.slane %v2187, %v2195
    %vm2197 = vcmask 130112
    %v2198 = vsel %vm2197, %v2196, %v2191
    %vm2200 = vcmask 122880
    %2201 = vst.msk [vmem:[#allocation18] sm:$0x1] %vm2200, %v2198
    %v2204 = vmul.f32 %v2087, %v2184
    %v2205 = vmul.f32 %v2088, %v2187
    %v2206 = vsel %vm2098, %v2204, 0.0
    %v2207 = vrot.slane %v2206, 4
    %v2208 = vadd.f32 %v2206, %v2207
    %v2209 = vrot.slane %v2208, 2
    %v2210 = vadd.f32 %v2208, %v2209
    %v2211 = vrot.slane %v2210, 1
    %v2212 = vadd.f32 %v2210, %v2211
    %v2213 = vsel %vm2098, %v2205, 0.0
    %v2214 = vrot.slane %v2213, 4
    %v2215 = vadd.f32 %v2213, %v2214
    %v2216 = vrot.slane %v2215, 2
    %v2217 = vadd.f32 %v2215, %v2216
    %v2218 = vrot.slane %v2217, 1
    %v2219 = vadd.f32 %v2217, %v2218
    %v2220 = vpack.c.bf16 %v2212, %v2212
    %v2221 = vpack.c.bf16 %v2219, %v2219
    %v2222 = vld [vmem:[%s9] sm:$0xf]
    %v2223 = vld [vmem:[%s9 + $0x4] sm:$0xf]
    %v2224 = vld [vmem:[%s9 + $0x8] sm:$0xf]
    %v2225 = vld [vmem:[%s9 + $0xc] sm:$0xf]
    %v2226 = vld [vmem:[%s9 + $0x10] sm:$0xf]
    %v2227 = vld [vmem:[%s9 + $0x14] sm:$0xf]
    %v2228 = vld [vmem:[%s9 + $0x18] sm:$0xf]
    %v2229 = vld [vmem:[%s9 + $0x1c] sm:$0xf]
    %v2230 = vld [vmem:[%s10] sm:$0x1]
    %v2232 = vlaneseq
    %v2233 = vshrl.u32 %v2232, 7
    %v2234 = vsub.s32 0, %v2233
    %v2235 = vrot.slane %v2230, %v2234
    %v2239 = vunpack.c.l.b16 %v2220
    %v2240 = vunpack.c.l.b16 %v2221
    %v2241 = vsel %vm390, %v2240, %v2239
    %v2242 = vpack.c.b16 %v2241, %v2241
    %v2251 = vunpack.c.l.b16 %v2222
    %v2252 = vunpack.c.l.b16 %v2223
    %v2253 = vunpack.c.l.b16 %v2224
    %v2254 = vunpack.c.l.b16 %v2225
    %v2255 = vunpack.c.l.b16 %v2226
    %v2256 = vunpack.c.l.b16 %v2227
    %v2257 = vunpack.c.l.b16 %v2228
    %v2258 = vunpack.c.l.b16 %v2229
    %v2259 = vpack.c.b16 %v2252, %v2251
    %v2260 = vpack.c.b16 %v2254, %v2253
    %v2261 = vpack.c.b16 %v2256, %v2255
    %v2262 = vpack.c.b16 %v2258, %v2257
    %v2268 = vsel %vm2098, %v2242, 0
    %2270 = vmatprep.subr.bf16.mxu0 0
    %2271 = vmatpush1.bf16.msra.mxu0 %v2259
    %2272 = vmatprep.subr.bf16.mxu0 0
    %2273 = vmatpush1.bf16.msra.mxu0 %v2260
    %2274 = vmatprep.subr.bf16.mxu0 0
    %2275 = vmatpush1.bf16.msra.mxu0 %v2261
    %2276 = vmatprep.subr.bf16.mxu0 0
    %2277 = vmatpush1.bf16.msra.mxu0 %v2262
    %2278 = vmatprep.subr.bf16.mxu0 0
    %2279 = vmatpush1.bf16.msra.mxu0 0
    %2280 = vmatprep.subr.bf16.mxu0 0
    %2281 = vmatpush1.bf16.msra.mxu0 0
    %2282 = vmatprep.subr.bf16.mxu0 0
    %2283 = vmatpush1.bf16.msra.mxu0 0
    %2284 = vmatprep.subr.bf16.mxu0 0
    %2285 = vmatpush1.bf16.msra.mxu0 0
    %2286 = vmatprep.subr.bf16.mxu0 0
    %2287 = vmatpush1.bf16.msra.mxu0 0
    %2288 = vmatprep.subr.bf16.mxu0 0
    %2289 = vmatpush1.bf16.msra.mxu0 0
    %2290 = vmatprep.subr.bf16.mxu0 0
    %2291 = vmatpush1.bf16.msra.mxu0 0
    %2292 = vmatprep.subr.bf16.mxu0 0
    %2293 = vmatpush1.bf16.msra.mxu0 0
    %2294 = vmatprep.subr.bf16.mxu0 0
    %2295 = vmatpush1.bf16.msra.mxu0 0
    %2296 = vmatprep.subr.bf16.mxu0 0
    %2297 = vmatpush1.bf16.msra.mxu0 0
    %2298 = vmatprep.subr.bf16.mxu0 0
    %2299 = vmatpush1.bf16.msra.mxu0 0
    %2300 = vmatprep.subr.bf16.mxu0 0
    %2301 = vmatpush1.bf16.msra.mxu0 0
    %2302 = vmatprep.mubr.bf16.mxu0 0
    %2303 = vmatmul.mubr.bf16.gmra.mrb[0].mxu0 %v2268
    %v2304 = vpop.f32.mrb[0].mxu0
    %v2305 = vadd.f32 %v2235, %v2304
    %v2306 = vpop.f32.mrb[0].mxu0
    %v2307 = vpop.f32.mrb[0].mxu0
    %v2308 = vpop.f32.mrb[0].mxu0
    %2309 = vdwg.mxu0
    %2310 = vst [vmem:[#allocation17] sm:$0x3] %v2305
    // Predicated region
    $region70: #{tpu_custom_call.1} parent=1 // pred_check
      _
    $region71: #{tpu_custom_call.1} parent=1 // pred_check_branch
      %2312 = sbr.rel (0) target = $region73
    $region72: #{tpu_custom_call.1} parent=1 // pred_region
      %s2314 = ssub.s32 32, 32
      %2315 = vsyncadd [#allocation8], %s2314
      %s2317 = sshll.u32 [#allocation17], 4
      %s2318 = int_to_ptr.vmem [resolvable:$true] %s2317
      %2320 = dma.vmem_to_hbm [thread:$0]  %s2318, 32, %s11, [#allocation8]
    $region73: #{tpu_custom_call.1} parent=1 // pred_fallthru
      _
    // Predicated region
    $region74: #{tpu_custom_call.1} parent=1 // pred_check
      _
    $region75: #{tpu_custom_call.1} parent=1 // pred_check_branch
      %2322 = sbr.rel (0) target = $region77
    $region76: #{tpu_custom_call.1} parent=1 // pred_region
      %s2324 = ssub.s32 16, 16
      %2325 = vsyncadd [#allocation19], %s2324
      %s2327 = sshll.u32 [#allocation18], 4
      %s2328 = int_to_ptr.vmem [resolvable:$true] %s2327
      %2330 = dma.vmem_to_hbm [thread:$0]  %s2328, 16, %s12, [#allocation19]
    $region77: #{tpu_custom_call.1} parent=1 // pred_fallthru
      _
    // Predicated region
    $region78: #{tpu_custom_call.1} parent=1 // pred_check
      _
    $region79: #{tpu_custom_call.1} parent=1 // pred_check_branch
      %2332 = sbr.rel (0) target = $region81
    $region80: #{tpu_custom_call.1} parent=1 // pred_region
      %2333 = dma.done [#allocation8], 32
    $region81: #{tpu_custom_call.1} parent=1 // pred_fallthru
      _
    // Predicated region
    $region82: #{tpu_custom_call.1} parent=1 // pred_check
      _
    $region83: #{tpu_custom_call.1} parent=1 // pred_check_branch
      %2335 = sbr.rel (0) target = $region85
    $region84: #{tpu_custom_call.1} parent=1 // pred_region
      %2336 = dma.done [#allocation19], 16
    $region85: #{tpu_custom_call.1} parent=1 // pred_fallthru
      _
    %2337 = vsyncpa [#allocation7], 1
    %2338 = vsyncpa [#allocation10], 1
    %2339 = vsyncpa [#allocation13], 1
    %2340 = vsyncpa [#allocation16], 1
    %2341 = vsyncpa [#allocation8], 1
    %2342 = vsyncpa [#allocation19], 1

</llo_original>
